<compile_context>
chip_gen: v6e
topology: v6e:2x2x1
jax: 0.10.0
libtpu: 0.0.40
codegen_flags: <defaults>
</compile_context>

<pallas_src>
import math
import functools

import jax
import jax.numpy as jnp
from jax.experimental import pallas as pl
from jax.experimental.pallas import tpu as pltpu


# ----------------------------- kernel ---------------------------------------

def _layernorm(x, gamma, beta, eps=1e-5):
    mu = jnp.mean(x, axis=-1, keepdims=True)
    var = jnp.mean((x - mu) ** 2, axis=-1, keepdims=True)
    return (x - mu) * jax.lax.rsqrt(var + eps) * gamma + beta


def transformer_kernel(x_ref, wq_ref, wk_ref, wv_ref, bq_ref, bk_ref, bv_ref,
                       wo_ref, bo_ref, g1_ref, be1_ref,
                       w1_ref, b1_ref, w2_ref, b2_ref, g2_ref, be2_ref,
                       fcw_ref, fcb_ref, out_ref, x_scr):
    """Grid = (batch, layer).  One batch element's (S, E) activations are held
    in the x_scr VMEM scratch across the (sequential, 'arbitrary') layer axis.
    Weight refs are per-layer blocks (leading layer dim squeezed away)."""
    layer = pl.program_id(1)
    num_layers = pl.num_programs(1)
    seq, embed = x_ref.shape
    num_heads = wq_ref.shape[0]
    head_dim = wq_ref.shape[2]
    scale = 1.0 / math.sqrt(head_dim)

    # ---- load the embedded inputs into the persistent activation scratch ----
    @pl.when(layer == 0)
    def _():
        x_scr[...] = x_ref[...]

    x = x_scr[...]                                    # (S, E) f32
    x16 = x.astype(jnp.bfloat16)                      # bf16 MXU operand

    # ---- multi-head self-attention: weight-stationary per-head 2D matmuls ---
    # (no activation slicing / concat / transpose; out-projection folded per
    #  head and accumulated in f32)
    attn = jnp.zeros((seq, embed), jnp.float32)
    for h in range(num_heads):
        q = jnp.dot(x16, wq_ref[h], preferred_element_type=jnp.float32) + bq_ref[h]
        k = jnp.dot(x16, wk_ref[h], preferred_element_type=jnp.float32) + bk_ref[h]
        v = jnp.dot(x16, wv_ref[h], preferred_element_type=jnp.float32) + bv_ref[h]

        # scores = q @ k^T  (NT dot_general), softmax in f32
        s = jax.lax.dot_general(
            q.astype(jnp.bfloat16), k.astype(jnp.bfloat16),
            dimension_numbers=(((1,), (1,)), ((), ())),
            preferred_element_type=jnp.float32) * scale
        s = s - jnp.max(s, axis=-1, keepdims=True)
        p = jnp.exp(s)
        p = p * pl.reciprocal(jnp.sum(p, axis=-1, keepdims=True), approx=True)

        o = jnp.dot(p.astype(jnp.bfloat16), v.astype(jnp.bfloat16),
                    preferred_element_type=jnp.float32)        # (S, Dh)
        attn = attn + jnp.dot(o.astype(jnp.bfloat16), wo_ref[h],
                              preferred_element_type=jnp.float32)
    attn = attn + bo_ref[...]

    # ---- residual + LayerNorm 1 (post-norm), f32 ----
    x = _layernorm(x + attn, g1_ref[...], be1_ref[...])

    # ---- feed-forward (Linear -> ReLU -> Linear), bf16 matmuls / f32 accum ---
    x16 = x.astype(jnp.bfloat16)
    h1 = jnp.maximum(
        jnp.dot(x16, w1_ref[...], preferred_element_type=jnp.float32)
        + b1_ref[...], 0.0)
    ff = jnp.dot(h1.astype(jnp.bfloat16), w2_ref[...],
                 preferred_element_type=jnp.float32) + b2_ref[...]

    # ---- residual + LayerNorm 2 ----
    x = _layernorm(x + ff, g2_ref[...], be2_ref[...])
    x_scr[...] = x

    # ---- fused fc head on the LAST sequence position (lane-dense output) ----
    @pl.when(layer == num_layers - 1)
    def _():
        x_last = x_scr[pl.ds(seq - 1, 1), :].astype(jnp.bfloat16)   # (1, E)
        out_ref[...] = (jnp.dot(x_last, fcw_ref[...],
                                preferred_element_type=jnp.float32)
                        + fcb_ref[...]).astype(out_ref.dtype)


# ----------------------------- helpers ---------------------------------------

def positional_encoding(seq_len, embed_dim):
    position = jnp.arange(seq_len, dtype=jnp.float32)[:, None]
    div_term = jnp.exp(jnp.arange(0, embed_dim, 2, dtype=jnp.float32)
                       * (-math.log(10000.0) / embed_dim))
    pe = jnp.zeros((seq_len, embed_dim), jnp.float32)
    pe = pe.at[:, 0::2].set(jnp.sin(position * div_term))
    if embed_dim % 2 == 1:
        pe = pe.at[:, 1::2].set(jnp.cos(position * div_term[:-1]))
    else:
        pe = pe.at[:, 1::2].set(jnp.cos(position * div_term))
    return pe


def init_params(key, vocab_size, embed_dim, num_heads, hidden_dim,
                num_layers, output_dim):
    E, H, L, nH = embed_dim, hidden_dim, num_layers, num_heads
    Dh = E // nH
    k_emb, k_fc, *lkeys = jax.random.split(key, 2 + num_layers)
    lk = [jax.random.split(k, 6) for k in lkeys]

    def stack(gen):
        return jnp.stack([gen(i) for i in range(L)], axis=0)

    bf16 = jnp.bfloat16
    params = dict(
        embedding=(jax.random.normal(k_emb, (vocab_size, E)) * 0.02
                   ).astype(jnp.float32),
        # per-head projection weights, stored pre-transposed (x @ W) and bf16
        wq=stack(lambda i: (jax.random.normal(lk[i][0], (nH, E, Dh))
                            / math.sqrt(E)).astype(bf16)),
        wk=stack(lambda i: (jax.random.normal(lk[i][1], (nH, E, Dh))
                            / math.sqrt(E)).astype(bf16)),
        wv=stack(lambda i: (jax.random.normal(lk[i][2], (nH, E, Dh))
                            / math.sqrt(E)).astype(bf16)),
        bq=jnp.zeros((L, nH, 1, Dh), jnp.float32),
        bk=jnp.zeros((L, nH, 1, Dh), jnp.float32),
        bv=jnp.zeros((L, nH, 1, Dh), jnp.float32),
        wo=stack(lambda i: (jax.random.normal(lk[i][3], (nH, Dh, E))
                            / math.sqrt(E)).astype(bf16)),
        bo=jnp.zeros((L, 1, E), jnp.float32),
        g1=jnp.ones((L, 1, E), jnp.float32),
        be1=jnp.zeros((L, 1, E), jnp.float32),
        w1=stack(lambda i: (jax.random.normal(lk[i][4], (E, H))
                            / math.sqrt(E)).astype(bf16)),
        b1=jnp.zeros((L, 1, H), jnp.float32),
        w2=stack(lambda i: (jax.random.normal(lk[i][5], (H, E))
                            / math.sqrt(H)).astype(bf16)),
        b2=jnp.zeros((L, 1, E), jnp.float32),
        g2=jnp.ones((L, 1, E), jnp.float32),
        be2=jnp.zeros((L, 1, E), jnp.float32),
        fc_w=(jax.random.normal(k_fc, (E, output_dim))
              / math.sqrt(E)).astype(jnp.float32),
        fc_b=jnp.zeros((1, output_dim), jnp.float32),
    )
    return params


def _pad_bytes(shape, dtype):
    """Conservative padded (sublane, lane)-tile footprint of one VMEM block."""
    dims = [int(d) for d in shape]
    dims[-1] = ((dims[-1] + 127) // 128) * 128
    if len(dims) >= 2:
        dims[-2] = ((dims[-2] + 7) // 8) * 8
    n = 1
    for d in dims:
        n *= d
    return n * jnp.dtype(dtype).itemsize


# ----------------------------- wrapper ---------------------------------------

@jax.jit
def model_forward(params, src):
    """src: (S, B) int32 token ids (seq-first, like the PyTorch module)."""
    S, B = src.shape
    E = params["embedding"].shape[1]
    L, nH, _, Dh = params["wq"].shape
    H = params["w1"].shape[2]
    O = params["fc_w"].shape[1]
    O_pad = ((O + 127) // 128) * 128              # lane-dense output head

    # Glue (plain JAX): embedding gather + positional encoding + transpose.
    emb = params["embedding"][src] * math.sqrt(E)                 # (S, B, E)
    emb = emb + positional_encoding(S, E)[:, None, :]
    x = jnp.transpose(emb, (1, 0, 2)).astype(jnp.float32)         # (B, S, E)

    # Lane-pad the fc head host-side of the kernel (sliced back below).
    fc_w = jnp.zeros((E, O_pad), jnp.bfloat16).at[:, :O].set(
        params["fc_w"].astype(jnp.bfloat16))
    fc_b = jnp.zeros((1, O_pad), jnp.float32).at[:, :O].set(params["fc_b"])

    def wmap4(b, l): return (l, 0, 0, 0)
    def wmap3(b, l): return (l, 0, 0)

    operands = [
        (x,              (None, S, E),       lambda b, l: (b, 0, 0)),
        (params["wq"],   (None, nH, E, Dh),  wmap4),
        (params["wk"],   (None, nH, E, Dh),  wmap4),
        (params["wv"],   (None, nH, E, Dh),  wmap4),
        (params["bq"],   (None, nH, 1, Dh),  wmap4),
        (params["bk"],   (None, nH, 1, Dh),  wmap4),
        (params["bv"],   (None, nH, 1, Dh),  wmap4),
        (params["wo"],   (None, nH, Dh, E),  wmap4),
        (params["bo"],   (None, 1, E),       wmap3),
        (params["g1"],   (None, 1, E),       wmap3),
        (params["be1"],  (None, 1, E),       wmap3),
        (params["w1"],   (None, E, H),       wmap3),
        (params["b1"],   (None, 1, H),       wmap3),
        (params["w2"],   (None, H, E),       wmap3),
        (params["b2"],   (None, 1, E),       wmap3),
        (params["g2"],   (None, 1, E),       wmap3),
        (params["be2"],  (None, 1, E),       wmap3),
        (fc_w,           (E, O_pad),         lambda b, l: (0, 0)),
        (fc_b,           (1, O_pad),         lambda b, l: (0, 0)),
    ]
    in_specs = [pl.BlockSpec(bs, im) for _, bs, im in operands]
    args = [a for a, _, _ in operands]

    # VMEM budget: per-step blocks (x4 margin for double-buffering / bf16
    # sublane packing) + output + scratch + headroom.
    per_step = sum(_pad_bytes([d for d in bs if d is not None], a.dtype)
                   for a, bs, _ in operands)
    per_step += _pad_bytes([1, O_pad], jnp.float32)     # output block
    per_step += _pad_bytes([S, E], jnp.float32)         # activation scratch
    vmem_limit = int(min(max(4 * per_step + (2 << 20), 8 << 20), 64 << 20))

    out = pl.pallas_call(
        transformer_kernel,
        out_shape=jax.ShapeDtypeStruct((B, 1, O_pad), jnp.float32),
        grid=(B, L),
        in_specs=in_specs,
        out_specs=pl.BlockSpec((None, 1, O_pad), lambda b, l: (b, 0, 0)),
        scratch_shapes=[pltpu.VMEM((S, E), jnp.float32)],
        compiler_params=pltpu.CompilerParams(
            dimension_semantics=("parallel", "arbitrary"),
            vmem_limit_bytes=vmem_limit),
    )(*args)

    return out[:, 0, :O]                                 # (B, output_dim)


# ----------------------------- main ------------------------------------------

if __name__ == "__main__":
    vocab_size, embed_dim, num_heads = 50, 32, 4
    hidden_dim, num_layers, output_dim = 64, 2, 10
    seq_len, batch = 8, 2

    key = jax.random.PRNGKey(0)
    pkey, skey = jax.random.split(key)
    params = init_params(pkey, vocab_size, embed_dim, num_heads,
                         hidden_dim, num_layers, output_dim)
    src = jax.random.randint(skey, (seq_len, batch), 0, vocab_size,
                             dtype=jnp.int32)

    out = model_forward(params, src)
    out = jax.block_until_ready(out)
    assert out.shape == (batch, output_dim), out.shape
    assert bool(jnp.all(jnp.isfinite(out)))
    print("KERNEL_OK")
</pallas_src>

<mosaic_0001>
module attributes {stable_mosaic.version = 11 : i64} {
  func.func @transformer_kernel(%arg0: i32, %arg1: i32, %arg2: memref<1x8x32xf32, #tpu.memory_space<vmem>>, %arg3: memref<1x4x32x8xbf16, #tpu.memory_space<vmem>>, %arg4: memref<1x4x32x8xbf16, #tpu.memory_space<vmem>>, %arg5: memref<1x4x32x8xbf16, #tpu.memory_space<vmem>>, %arg6: memref<1x4x1x8xf32, #tpu.memory_space<vmem>>, %arg7: memref<1x4x1x8xf32, #tpu.memory_space<vmem>>, %arg8: memref<1x4x1x8xf32, #tpu.memory_space<vmem>>, %arg9: memref<1x4x8x32xbf16, #tpu.memory_space<vmem>>, %arg10: memref<1x1x32xf32, #tpu.memory_space<vmem>>, %arg11: memref<1x1x32xf32, #tpu.memory_space<vmem>>, %arg12: memref<1x1x32xf32, #tpu.memory_space<vmem>>, %arg13: memref<1x32x64xbf16, #tpu.memory_space<vmem>>, %arg14: memref<1x1x64xf32, #tpu.memory_space<vmem>>, %arg15: memref<1x64x32xbf16, #tpu.memory_space<vmem>>, %arg16: memref<1x1x32xf32, #tpu.memory_space<vmem>>, %arg17: memref<1x1x32xf32, #tpu.memory_space<vmem>>, %arg18: memref<1x1x32xf32, #tpu.memory_space<vmem>>, %arg19: memref<32x128xbf16, #tpu.memory_space<vmem>>, %arg20: memref<1x128xf32, #tpu.memory_space<vmem>>, %arg21: memref<1x1x128xf32, #tpu.memory_space<vmem>>, %arg22: memref<8x32xf32, #tpu.memory_space<vmem>>) attributes {dimension_semantics = [#tpu.dimension_semantics<parallel>, #tpu.dimension_semantics<arbitrary>], iteration_bounds = array<i64: 2, 2>, scalar_prefetch = 0 : i64, scratch_operands = 1 : i64, tpu.core_type = #tpu.core_type<tc>, window_params = [{transform_indices = @transform_0, window_bounds = array<i64: 1, 8, 32>}, {transform_indices = @transform_1, window_bounds = array<i64: 1, 4, 32, 8>}, {transform_indices = @transform_2, window_bounds = array<i64: 1, 4, 32, 8>}, {transform_indices = @transform_3, window_bounds = array<i64: 1, 4, 32, 8>}, {transform_indices = @transform_4, window_bounds = array<i64: 1, 4, 1, 8>}, {transform_indices = @transform_5, window_bounds = array<i64: 1, 4, 1, 8>}, {transform_indices = @transform_6, window_bounds = array<i64: 1, 4, 1, 8>}, {transform_indices = @transform_7, window_bounds = array<i64: 1, 4, 8, 32>}, {transform_indices = @transform_8, window_bounds = array<i64: 1, 1, 32>}, {transform_indices = @transform_9, window_bounds = array<i64: 1, 1, 32>}, {transform_indices = @transform_10, window_bounds = array<i64: 1, 1, 32>}, {transform_indices = @transform_11, window_bounds = array<i64: 1, 32, 64>}, {transform_indices = @transform_12, window_bounds = array<i64: 1, 1, 64>}, {transform_indices = @transform_13, window_bounds = array<i64: 1, 64, 32>}, {transform_indices = @transform_14, window_bounds = array<i64: 1, 1, 32>}, {transform_indices = @transform_15, window_bounds = array<i64: 1, 1, 32>}, {transform_indices = @transform_16, window_bounds = array<i64: 1, 1, 32>}, {pipeline_mode = #tpu.pipeline_mode<synchronous>, transform_indices = @transform_17, window_bounds = array<i64: 32, 128>}, {pipeline_mode = #tpu.pipeline_mode<synchronous>, transform_indices = @transform_18, window_bounds = array<i64: 1, 128>}, {transform_indices = @transform_19, window_bounds = array<i64: 1, 1, 128>}]} {
    %c0_i32 = arith.constant 0 : i32
    %0 = arith.cmpi eq, %arg1, %c0_i32 : i32
    %1 = arith.extui %0 : i1 to i32
    %c0_i32_0 = arith.constant 0 : i32
    %2 = arith.cmpi ne, %1, %c0_i32_0 : i32
    scf.if %2 {
      %c0_190 = arith.constant 0 : index
      %c0_191 = arith.constant 0 : index
      %c0_192 = arith.constant 0 : index
      %262 = vector.load %arg2[%c0_190, %c0_191, %c0_192] : memref<1x8x32xf32, #tpu.memory_space<vmem>>, vector<1x8x32xf32>
      %263 = vector.shape_cast %262 : vector<1x8x32xf32> to vector<8x32xf32>
      %c0_193 = arith.constant 0 : index
      %c0_194 = arith.constant 0 : index
      %264 = vector.load %arg22[%c0_193, %c0_194] : memref<8x32xf32, #tpu.memory_space<vmem>>, vector<8x32xf32>
      tpu.vector_store %arg22[%c0_193, %c0_194], %263 {strides = array<i32>} : memref<8x32xf32, #tpu.memory_space<vmem>>, vector<8x32xf32>,
    } else {
    }
    %c0 = arith.constant 0 : index
    %c0_1 = arith.constant 0 : index
    %3 = vector.load %arg22[%c0, %c0_1] : memref<8x32xf32, #tpu.memory_space<vmem>>, vector<8x32xf32>
    %4 = arith.truncf %3 : vector<8x32xf32> to vector<8x32xbf16>
    %cst = arith.constant 0.000000e+00 : f32
    %5 = vector.broadcast %cst : f32 to vector<8x32xf32>
    %c0_2 = arith.constant 0 : index
    %c0_3 = arith.constant 0 : index
    %c0_4 = arith.constant 0 : index
    %c0_5 = arith.constant 0 : index
    %6 = vector.load %arg3[%c0_2, %c0_3, %c0_4, %c0_5] : memref<1x4x32x8xbf16, #tpu.memory_space<vmem>>, vector<1x1x32x8xbf16>
    %7 = vector.shape_cast %6 : vector<1x1x32x8xbf16> to vector<32x8xbf16>
    %cst_6 = arith.constant dense<0.000000e+00> : vector<8x8xf32>
    %8 = tpu.matmul %4, %7, %cst_6 {dimension_numbers = #tpu.dot_dimension_numbers<[1], [0], [0], [1], [0, 0, 1, 1], [], []>} : vector<8x32xbf16>, vector<32x8xbf16>, vector<8x8xf32> -> vector<8x8xf32>
    %c0_7 = arith.constant 0 : index
    %c0_8 = arith.constant 0 : index
    %c0_9 = arith.constant 0 : index
    %c0_10 = arith.constant 0 : index
    %9 = vector.load %arg6[%c0_7, %c0_8, %c0_9, %c0_10] : memref<1x4x1x8xf32, #tpu.memory_space<vmem>>, vector<1x1x1x8xf32>
    %10 = vector.shape_cast %9 : vector<1x1x1x8xf32> to vector<1x8xf32>
    %11 = vector.broadcast %10 : vector<1x8xf32> to vector<8x8xf32>
    %12 = arith.addf %8, %11 : vector<8x8xf32>
    %c0_11 = arith.constant 0 : index
    %c0_12 = arith.constant 0 : index
    %c0_13 = arith.constant 0 : index
    %c0_14 = arith.constant 0 : index
    %13 = vector.load %arg4[%c0_11, %c0_12, %c0_13, %c0_14] : memref<1x4x32x8xbf16, #tpu.memory_space<vmem>>, vector<1x1x32x8xbf16>
    %14 = vector.shape_cast %13 : vector<1x1x32x8xbf16> to vector<32x8xbf16>
    %cst_15 = arith.constant dense<0.000000e+00> : vector<8x8xf32>
    %15 = tpu.matmul %4, %14, %cst_15 {dimension_numbers = #tpu.dot_dimension_numbers<[1], [0], [0], [1], [0, 0, 1, 1], [], []>} : vector<8x32xbf16>, vector<32x8xbf16>, vector<8x8xf32> -> vector<8x8xf32>
    %c0_16 = arith.constant 0 : index
    %c0_17 = arith.constant 0 : index
    %c0_18 = arith.constant 0 : index
    %c0_19 = arith.constant 0 : index
    %16 = vector.load %arg7[%c0_16, %c0_17, %c0_18, %c0_19] : memref<1x4x1x8xf32, #tpu.memory_space<vmem>>, vector<1x1x1x8xf32>
    %17 = vector.shape_cast %16 : vector<1x1x1x8xf32> to vector<1x8xf32>
    %18 = vector.broadcast %17 : vector<1x8xf32> to vector<8x8xf32>
    %19 = arith.addf %15, %18 : vector<8x8xf32>
    %c0_20 = arith.constant 0 : index
    %c0_21 = arith.constant 0 : index
    %c0_22 = arith.constant 0 : index
    %c0_23 = arith.constant 0 : index
    %20 = vector.load %arg5[%c0_20, %c0_21, %c0_22, %c0_23] : memref<1x4x32x8xbf16, #tpu.memory_space<vmem>>, vector<1x1x32x8xbf16>
    %21 = vector.shape_cast %20 : vector<1x1x32x8xbf16> to vector<32x8xbf16>
    %cst_24 = arith.constant dense<0.000000e+00> : vector<8x8xf32>
    %22 = tpu.matmul %4, %21, %cst_24 {dimension_numbers = #tpu.dot_dimension_numbers<[1], [0], [0], [1], [0, 0, 1, 1], [], []>} : vector<8x32xbf16>, vector<32x8xbf16>, vector<8x8xf32> -> vector<8x8xf32>
    %c0_25 = arith.constant 0 : index
    %c0_26 = arith.constant 0 : index
    %c0_27 = arith.constant 0 : index
    %c0_28 = arith.constant 0 : index
    %23 = vector.load %arg8[%c0_25, %c0_26, %c0_27, %c0_28] : memref<1x4x1x8xf32, #tpu.memory_space<vmem>>, vector<1x1x1x8xf32>
    %24 = vector.shape_cast %23 : vector<1x1x1x8xf32> to vector<1x8xf32>
    %25 = vector.broadcast %24 : vector<1x8xf32> to vector<8x8xf32>
    %26 = arith.addf %22, %25 : vector<8x8xf32>
    %27 = arith.truncf %12 : vector<8x8xf32> to vector<8x8xbf16>
    %28 = arith.truncf %19 : vector<8x8xf32> to vector<8x8xbf16>
    %cst_29 = arith.constant dense<0.000000e+00> : vector<8x8xf32>
    %29 = tpu.matmul %27, %28, %cst_29 {dimension_numbers = #tpu.dot_dimension_numbers<[1], [1], [0], [0], [0, 0, 1, 0], [], []>} : vector<8x8xbf16>, vector<8x8xbf16>, vector<8x8xf32> -> vector<8x8xf32>
    %cst_30 = arith.constant 0.353553385 : f32
    %30 = vector.broadcast %cst_30 : f32 to vector<8x8xf32>
    %31 = arith.mulf %29, %30 : vector<8x8xf32>
    %cst_31 = arith.constant dense<0xFF800000> : vector<8xf32>
    %32 = vector.multi_reduction <maximumf>, %31, %cst_31 [1] : vector<8x8xf32> to vector<8xf32>
    %33 = vector.shape_cast %32 : vector<8xf32> to vector<8x1xf32>
    %34 = vector.broadcast %33 : vector<8x1xf32> to vector<8x8xf32>
    %35 = arith.subf %31, %34 : vector<8x8xf32>
    %36 = math.exp %35 : vector<8x8xf32>
    %cst_32 = arith.constant dense<0.000000e+00> : vector<8xf32>
    %37 = vector.multi_reduction <add>, %36, %cst_32 [1] : vector<8x8xf32> to vector<8xf32>
    %38 = vector.shape_cast %37 : vector<8xf32> to vector<8x1xf32>
    %39 = tpu.reciprocal %38 {approx = true} : vector<8x1xf32> -> vector<8x1xf32>
    %40 = vector.broadcast %39 : vector<8x1xf32> to vector<8x8xf32>
    %41 = arith.mulf %36, %40 : vector<8x8xf32>
    %42 = arith.truncf %41 : vector<8x8xf32> to vector<8x8xbf16>
    %43 = arith.truncf %26 : vector<8x8xf32> to vector<8x8xbf16>
    %cst_33 = arith.constant dense<0.000000e+00> : vector<8x8xf32>
    %44 = tpu.matmul %42, %43, %cst_33 {dimension_numbers = #tpu.dot_dimension_numbers<[1], [0], [0], [1], [0, 0, 1, 1], [], []>} : vector<8x8xbf16>, vector<8x8xbf16>, vector<8x8xf32> -> vector<8x8xf32>
    %45 = arith.truncf %44 : vector<8x8xf32> to vector<8x8xbf16>
    %c0_34 = arith.constant 0 : index
    %c0_35 = arith.constant 0 : index
    %c0_36 = arith.constant 0 : index
    %c0_37 = arith.constant 0 : index
    %46 = vector.load %arg9[%c0_34, %c0_35, %c0_36, %c0_37] : memref<1x4x8x32xbf16, #tpu.memory_space<vmem>>, vector<1x1x8x32xbf16>
    %47 = vector.shape_cast %46 : vector<1x1x8x32xbf16> to vector<8x32xbf16>
    %cst_38 = arith.constant dense<0.000000e+00> : vector<8x32xf32>
    %48 = tpu.matmul %45, %47, %cst_38 {dimension_numbers = #tpu.dot_dimension_numbers<[1], [0], [0], [1], [0, 0, 1, 1], [], []>} : vector<8x8xbf16>, vector<8x32xbf16>, vector<8x32xf32> -> vector<8x32xf32>
    %49 = arith.addf %5, %48 : vector<8x32xf32>
    %c0_39 = arith.constant 0 : index
    %c1 = arith.constant 1 : index
    %c0_40 = arith.constant 0 : index
    %c0_41 = arith.constant 0 : index
    %50 = vector.load %arg3[%c0_39, %c1, %c0_40, %c0_41] : memref<1x4x32x8xbf16, #tpu.memory_space<vmem>>, vector<1x1x32x8xbf16>
    %51 = vector.shape_cast %50 : vector<1x1x32x8xbf16> to vector<32x8xbf16>
    %cst_42 = arith.constant dense<0.000000e+00> : vector<8x8xf32>
    %52 = tpu.matmul %4, %51, %cst_42 {dimension_numbers = #tpu.dot_dimension_numbers<[1], [0], [0], [1], [0, 0, 1, 1], [], []>} : vector<8x32xbf16>, vector<32x8xbf16>, vector<8x8xf32> -> vector<8x8xf32>
    %c0_43 = arith.constant 0 : index
    %c1_44 = arith.constant 1 : index
    %c0_45 = arith.constant 0 : index
    %c0_46 = arith.constant 0 : index
    %53 = vector.load %arg6[%c0_43, %c1_44, %c0_45, %c0_46] : memref<1x4x1x8xf32, #tpu.memory_space<vmem>>, vector<1x1x1x8xf32>
    %54 = vector.shape_cast %53 : vector<1x1x1x8xf32> to vector<1x8xf32>
    %55 = vector.broadcast %54 : vector<1x8xf32> to vector<8x8xf32>
    %56 = arith.addf %52, %55 : vector<8x8xf32>
    %c0_47 = arith.constant 0 : index
    %c1_48 = arith.constant 1 : index
    %c0_49 = arith.constant 0 : index
    %c0_50 = arith.constant 0 : index
    %57 = vector.load %arg4[%c0_47, %c1_48, %c0_49, %c0_50] : memref<1x4x32x8xbf16, #tpu.memory_space<vmem>>, vector<1x1x32x8xbf16>
    %58 = vector.shape_cast %57 : vector<1x1x32x8xbf16> to vector<32x8xbf16>
    %cst_51 = arith.constant dense<0.000000e+00> : vector<8x8xf32>
    %59 = tpu.matmul %4, %58, %cst_51 {dimension_numbers = #tpu.dot_dimension_numbers<[1], [0], [0], [1], [0, 0, 1, 1], [], []>} : vector<8x32xbf16>, vector<32x8xbf16>, vector<8x8xf32> -> vector<8x8xf32>
    %c0_52 = arith.constant 0 : index
    %c1_53 = arith.constant 1 : index
    %c0_54 = arith.constant 0 : index
    %c0_55 = arith.constant 0 : index
    %60 = vector.load %arg7[%c0_52, %c1_53, %c0_54, %c0_55] : memref<1x4x1x8xf32, #tpu.memory_space<vmem>>, vector<1x1x1x8xf32>
    %61 = vector.shape_cast %60 : vector<1x1x1x8xf32> to vector<1x8xf32>
    %62 = vector.broadcast %61 : vector<1x8xf32> to vector<8x8xf32>
    %63 = arith.addf %59, %62 : vector<8x8xf32>
    %c0_56 = arith.constant 0 : index
    %c1_57 = arith.constant 1 : index
    %c0_58 = arith.constant 0 : index
    %c0_59 = arith.constant 0 : index
    %64 = vector.load %arg5[%c0_56, %c1_57, %c0_58, %c0_59] : memref<1x4x32x8xbf16, #tpu.memory_space<vmem>>, vector<1x1x32x8xbf16>
    %65 = vector.shape_cast %64 : vector<1x1x32x8xbf16> to vector<32x8xbf16>
    %cst_60 = arith.constant dense<0.000000e+00> : vector<8x8xf32>
    %66 = tpu.matmul %4, %65, %cst_60 {dimension_numbers = #tpu.dot_dimension_numbers<[1], [0], [0], [1], [0, 0, 1, 1], [], []>} : vector<8x32xbf16>, vector<32x8xbf16>, vector<8x8xf32> -> vector<8x8xf32>
    %c0_61 = arith.constant 0 : index
    %c1_62 = arith.constant 1 : index
    %c0_63 = arith.constant 0 : index
    %c0_64 = arith.constant 0 : index
    %67 = vector.load %arg8[%c0_61, %c1_62, %c0_63, %c0_64] : memref<1x4x1x8xf32, #tpu.memory_space<vmem>>, vector<1x1x1x8xf32>
    %68 = vector.shape_cast %67 : vector<1x1x1x8xf32> to vector<1x8xf32>
    %69 = vector.broadcast %68 : vector<1x8xf32> to vector<8x8xf32>
    %70 = arith.addf %66, %69 : vector<8x8xf32>
    %71 = arith.truncf %56 : vector<8x8xf32> to vector<8x8xbf16>
    %72 = arith.truncf %63 : vector<8x8xf32> to vector<8x8xbf16>
    %cst_65 = arith.constant dense<0.000000e+00> : vector<8x8xf32>
    %73 = tpu.matmul %71, %72, %cst_65 {dimension_numbers = #tpu.dot_dimension_numbers<[1], [1], [0], [0], [0, 0, 1, 0], [], []>} : vector<8x8xbf16>, vector<8x8xbf16>, vector<8x8xf32> -> vector<8x8xf32>
    %cst_66 = arith.constant 0.353553385 : f32
    %74 = vector.broadcast %cst_66 : f32 to vector<8x8xf32>
    %75 = arith.mulf %73, %74 : vector<8x8xf32>
    %cst_67 = arith.constant dense<0xFF800000> : vector<8xf32>
    %76 = vector.multi_reduction <maximumf>, %75, %cst_67 [1] : vector<8x8xf32> to vector<8xf32>
    %77 = vector.shape_cast %76 : vector<8xf32> to vector<8x1xf32>
    %78 = vector.broadcast %77 : vector<8x1xf32> to vector<8x8xf32>
    %79 = arith.subf %75, %78 : vector<8x8xf32>
    %80 = math.exp %79 : vector<8x8xf32>
    %cst_68 = arith.constant dense<0.000000e+00> : vector<8xf32>
    %81 = vector.multi_reduction <add>, %80, %cst_68 [1] : vector<8x8xf32> to vector<8xf32>
    %82 = vector.shape_cast %81 : vector<8xf32> to vector<8x1xf32>
    %83 = tpu.reciprocal %82 {approx = true} : vector<8x1xf32> -> vector<8x1xf32>
    %84 = vector.broadcast %83 : vector<8x1xf32> to vector<8x8xf32>
    %85 = arith.mulf %80, %84 : vector<8x8xf32>
    %86 = arith.truncf %85 : vector<8x8xf32> to vector<8x8xbf16>
    %87 = arith.truncf %70 : vector<8x8xf32> to vector<8x8xbf16>
    %cst_69 = arith.constant dense<0.000000e+00> : vector<8x8xf32>
    %88 = tpu.matmul %86, %87, %cst_69 {dimension_numbers = #tpu.dot_dimension_numbers<[1], [0], [0], [1], [0, 0, 1, 1], [], []>} : vector<8x8xbf16>, vector<8x8xbf16>, vector<8x8xf32> -> vector<8x8xf32>
    %89 = arith.truncf %88 : vector<8x8xf32> to vector<8x8xbf16>
    %c0_70 = arith.constant 0 : index
    %c1_71 = arith.constant 1 : index
    %c0_72 = arith.constant 0 : index
    %c0_73 = arith.constant 0 : index
    %90 = vector.load %arg9[%c0_70, %c1_71, %c0_72, %c0_73] : memref<1x4x8x32xbf16, #tpu.memory_space<vmem>>, vector<1x1x8x32xbf16>
    %91 = vector.shape_cast %90 : vector<1x1x8x32xbf16> to vector<8x32xbf16>
    %cst_74 = arith.constant dense<0.000000e+00> : vector<8x32xf32>
    %92 = tpu.matmul %89, %91, %cst_74 {dimension_numbers = #tpu.dot_dimension_numbers<[1], [0], [0], [1], [0, 0, 1, 1], [], []>} : vector<8x8xbf16>, vector<8x32xbf16>, vector<8x32xf32> -> vector<8x32xf32>
    %93 = arith.addf %49, %92 : vector<8x32xf32>
    %c0_75 = arith.constant 0 : index
    %c2 = arith.constant 2 : index
    %c0_76 = arith.constant 0 : index
    %c0_77 = arith.constant 0 : index
    %94 = vector.load %arg3[%c0_75, %c2, %c0_76, %c0_77] : memref<1x4x32x8xbf16, #tpu.memory_space<vmem>>, vector<1x1x32x8xbf16>
    %95 = vector.shape_cast %94 : vector<1x1x32x8xbf16> to vector<32x8xbf16>
    %cst_78 = arith.constant dense<0.000000e+00> : vector<8x8xf32>
    %96 = tpu.matmul %4, %95, %cst_78 {dimension_numbers = #tpu.dot_dimension_numbers<[1], [0], [0], [1], [0, 0, 1, 1], [], []>} : vector<8x32xbf16>, vector<32x8xbf16>, vector<8x8xf32> -> vector<8x8xf32>
    %c0_79 = arith.constant 0 : index
    %c2_80 = arith.constant 2 : index
    %c0_81 = arith.constant 0 : index
    %c0_82 = arith.constant 0 : index
    %97 = vector.load %arg6[%c0_79, %c2_80, %c0_81, %c0_82] : memref<1x4x1x8xf32, #tpu.memory_space<vmem>>, vector<1x1x1x8xf32>
    %98 = vector.shape_cast %97 : vector<1x1x1x8xf32> to vector<1x8xf32>
    %99 = vector.broadcast %98 : vector<1x8xf32> to vector<8x8xf32>
    %100 = arith.addf %96, %99 : vector<8x8xf32>
    %c0_83 = arith.constant 0 : index
    %c2_84 = arith.constant 2 : index
    %c0_85 = arith.constant 0 : index
    %c0_86 = arith.constant 0 : index
    %101 = vector.load %arg4[%c0_83, %c2_84, %c0_85, %c0_86] : memref<1x4x32x8xbf16, #tpu.memory_space<vmem>>, vector<1x1x32x8xbf16>
    %102 = vector.shape_cast %101 : vector<1x1x32x8xbf16> to vector<32x8xbf16>
    %cst_87 = arith.constant dense<0.000000e+00> : vector<8x8xf32>
    %103 = tpu.matmul %4, %102, %cst_87 {dimension_numbers = #tpu.dot_dimension_numbers<[1], [0], [0], [1], [0, 0, 1, 1], [], []>} : vector<8x32xbf16>, vector<32x8xbf16>, vector<8x8xf32> -> vector<8x8xf32>
    %c0_88 = arith.constant 0 : index
    %c2_89 = arith.constant 2 : index
    %c0_90 = arith.constant 0 : index
    %c0_91 = arith.constant 0 : index
    %104 = vector.load %arg7[%c0_88, %c2_89, %c0_90, %c0_91] : memref<1x4x1x8xf32, #tpu.memory_space<vmem>>, vector<1x1x1x8xf32>
    %105 = vector.shape_cast %104 : vector<1x1x1x8xf32> to vector<1x8xf32>
    %106 = vector.broadcast %105 : vector<1x8xf32> to vector<8x8xf32>
    %107 = arith.addf %103, %106 : vector<8x8xf32>
    %c0_92 = arith.constant 0 : index
    %c2_93 = arith.constant 2 : index
    %c0_94 = arith.constant 0 : index
    %c0_95 = arith.constant 0 : index
    %108 = vector.load %arg5[%c0_92, %c2_93, %c0_94, %c0_95] : memref<1x4x32x8xbf16, #tpu.memory_space<vmem>>, vector<1x1x32x8xbf16>
    %109 = vector.shape_cast %108 : vector<1x1x32x8xbf16> to vector<32x8xbf16>
    %cst_96 = arith.constant dense<0.000000e+00> : vector<8x8xf32>
    %110 = tpu.matmul %4, %109, %cst_96 {dimension_numbers = #tpu.dot_dimension_numbers<[1], [0], [0], [1], [0, 0, 1, 1], [], []>} : vector<8x32xbf16>, vector<32x8xbf16>, vector<8x8xf32> -> vector<8x8xf32>
    %c0_97 = arith.constant 0 : index
    %c2_98 = arith.constant 2 : index
    %c0_99 = arith.constant 0 : index
    %c0_100 = arith.constant 0 : index
    %111 = vector.load %arg8[%c0_97, %c2_98, %c0_99, %c0_100] : memref<1x4x1x8xf32, #tpu.memory_space<vmem>>, vector<1x1x1x8xf32>
    %112 = vector.shape_cast %111 : vector<1x1x1x8xf32> to vector<1x8xf32>
    %113 = vector.broadcast %112 : vector<1x8xf32> to vector<8x8xf32>
    %114 = arith.addf %110, %113 : vector<8x8xf32>
    %115 = arith.truncf %100 : vector<8x8xf32> to vector<8x8xbf16>
    %116 = arith.truncf %107 : vector<8x8xf32> to vector<8x8xbf16>
    %cst_101 = arith.constant dense<0.000000e+00> : vector<8x8xf32>
    %117 = tpu.matmul %115, %116, %cst_101 {dimension_numbers = #tpu.dot_dimension_numbers<[1], [1], [0], [0], [0, 0, 1, 0], [], []>} : vector<8x8xbf16>, vector<8x8xbf16>, vector<8x8xf32> -> vector<8x8xf32>
    %cst_102 = arith.constant 0.353553385 : f32
    %118 = vector.broadcast %cst_102 : f32 to vector<8x8xf32>
    %119 = arith.mulf %117, %118 : vector<8x8xf32>
    %cst_103 = arith.constant dense<0xFF800000> : vector<8xf32>
    %120 = vector.multi_reduction <maximumf>, %119, %cst_103 [1] : vector<8x8xf32> to vector<8xf32>
    %121 = vector.shape_cast %120 : vector<8xf32> to vector<8x1xf32>
    %122 = vector.broadcast %121 : vector<8x1xf32> to vector<8x8xf32>
    %123 = arith.subf %119, %122 : vector<8x8xf32>
    %124 = math.exp %123 : vector<8x8xf32>
    %cst_104 = arith.constant dense<0.000000e+00> : vector<8xf32>
    %125 = vector.multi_reduction <add>, %124, %cst_104 [1] : vector<8x8xf32> to vector<8xf32>
    %126 = vector.shape_cast %125 : vector<8xf32> to vector<8x1xf32>
    %127 = tpu.reciprocal %126 {approx = true} : vector<8x1xf32> -> vector<8x1xf32>
    %128 = vector.broadcast %127 : vector<8x1xf32> to vector<8x8xf32>
    %129 = arith.mulf %124, %128 : vector<8x8xf32>
    %130 = arith.truncf %129 : vector<8x8xf32> to vector<8x8xbf16>
    %131 = arith.truncf %114 : vector<8x8xf32> to vector<8x8xbf16>
    %cst_105 = arith.constant dense<0.000000e+00> : vector<8x8xf32>
    %132 = tpu.matmul %130, %131, %cst_105 {dimension_numbers = #tpu.dot_dimension_numbers<[1], [0], [0], [1], [0, 0, 1, 1], [], []>} : vector<8x8xbf16>, vector<8x8xbf16>, vector<8x8xf32> -> vector<8x8xf32>
    %133 = arith.truncf %132 : vector<8x8xf32> to vector<8x8xbf16>
    %c0_106 = arith.constant 0 : index
    %c2_107 = arith.constant 2 : index
    %c0_108 = arith.constant 0 : index
    %c0_109 = arith.constant 0 : index
    %134 = vector.load %arg9[%c0_106, %c2_107, %c0_108, %c0_109] : memref<1x4x8x32xbf16, #tpu.memory_space<vmem>>, vector<1x1x8x32xbf16>
    %135 = vector.shape_cast %134 : vector<1x1x8x32xbf16> to vector<8x32xbf16>
    %cst_110 = arith.constant dense<0.000000e+00> : vector<8x32xf32>
    %136 = tpu.matmul %133, %135, %cst_110 {dimension_numbers = #tpu.dot_dimension_numbers<[1], [0], [0], [1], [0, 0, 1, 1], [], []>} : vector<8x8xbf16>, vector<8x32xbf16>, vector<8x32xf32> -> vector<8x32xf32>
    %137 = arith.addf %93, %136 : vector<8x32xf32>
    %c0_111 = arith.constant 0 : index
    %c3 = arith.constant 3 : index
    %c0_112 = arith.constant 0 : index
    %c0_113 = arith.constant 0 : index
    %138 = vector.load %arg3[%c0_111, %c3, %c0_112, %c0_113] : memref<1x4x32x8xbf16, #tpu.memory_space<vmem>>, vector<1x1x32x8xbf16>
    %139 = vector.shape_cast %138 : vector<1x1x32x8xbf16> to vector<32x8xbf16>
    %cst_114 = arith.constant dense<0.000000e+00> : vector<8x8xf32>
    %140 = tpu.matmul %4, %139, %cst_114 {dimension_numbers = #tpu.dot_dimension_numbers<[1], [0], [0], [1], [0, 0, 1, 1], [], []>} : vector<8x32xbf16>, vector<32x8xbf16>, vector<8x8xf32> -> vector<8x8xf32>
    %c0_115 = arith.constant 0 : index
    %c3_116 = arith.constant 3 : index
    %c0_117 = arith.constant 0 : index
    %c0_118 = arith.constant 0 : index
    %141 = vector.load %arg6[%c0_115, %c3_116, %c0_117, %c0_118] : memref<1x4x1x8xf32, #tpu.memory_space<vmem>>, vector<1x1x1x8xf32>
    %142 = vector.shape_cast %141 : vector<1x1x1x8xf32> to vector<1x8xf32>
    %143 = vector.broadcast %142 : vector<1x8xf32> to vector<8x8xf32>
    %144 = arith.addf %140, %143 : vector<8x8xf32>
    %c0_119 = arith.constant 0 : index
    %c3_120 = arith.constant 3 : index
    %c0_121 = arith.constant 0 : index
    %c0_122 = arith.constant 0 : index
    %145 = vector.load %arg4[%c0_119, %c3_120, %c0_121, %c0_122] : memref<1x4x32x8xbf16, #tpu.memory_space<vmem>>, vector<1x1x32x8xbf16>
    %146 = vector.shape_cast %145 : vector<1x1x32x8xbf16> to vector<32x8xbf16>
    %cst_123 = arith.constant dense<0.000000e+00> : vector<8x8xf32>
    %147 = tpu.matmul %4, %146, %cst_123 {dimension_numbers = #tpu.dot_dimension_numbers<[1], [0], [0], [1], [0, 0, 1, 1], [], []>} : vector<8x32xbf16>, vector<32x8xbf16>, vector<8x8xf32> -> vector<8x8xf32>
    %c0_124 = arith.constant 0 : index
    %c3_125 = arith.constant 3 : index
    %c0_126 = arith.constant 0 : index
    %c0_127 = arith.constant 0 : index
    %148 = vector.load %arg7[%c0_124, %c3_125, %c0_126, %c0_127] : memref<1x4x1x8xf32, #tpu.memory_space<vmem>>, vector<1x1x1x8xf32>
    %149 = vector.shape_cast %148 : vector<1x1x1x8xf32> to vector<1x8xf32>
    %150 = vector.broadcast %149 : vector<1x8xf32> to vector<8x8xf32>
    %151 = arith.addf %147, %150 : vector<8x8xf32>
    %c0_128 = arith.constant 0 : index
    %c3_129 = arith.constant 3 : index
    %c0_130 = arith.constant 0 : index
    %c0_131 = arith.constant 0 : index
    %152 = vector.load %arg5[%c0_128, %c3_129, %c0_130, %c0_131] : memref<1x4x32x8xbf16, #tpu.memory_space<vmem>>, vector<1x1x32x8xbf16>
    %153 = vector.shape_cast %152 : vector<1x1x32x8xbf16> to vector<32x8xbf16>
    %cst_132 = arith.constant dense<0.000000e+00> : vector<8x8xf32>
    %154 = tpu.matmul %4, %153, %cst_132 {dimension_numbers = #tpu.dot_dimension_numbers<[1], [0], [0], [1], [0, 0, 1, 1], [], []>} : vector<8x32xbf16>, vector<32x8xbf16>, vector<8x8xf32> -> vector<8x8xf32>
    %c0_133 = arith.constant 0 : index
    %c3_134 = arith.constant 3 : index
    %c0_135 = arith.constant 0 : index
    %c0_136 = arith.constant 0 : index
    %155 = vector.load %arg8[%c0_133, %c3_134, %c0_135, %c0_136] : memref<1x4x1x8xf32, #tpu.memory_space<vmem>>, vector<1x1x1x8xf32>
    %156 = vector.shape_cast %155 : vector<1x1x1x8xf32> to vector<1x8xf32>
    %157 = vector.broadcast %156 : vector<1x8xf32> to vector<8x8xf32>
    %158 = arith.addf %154, %157 : vector<8x8xf32>
    %159 = arith.truncf %144 : vector<8x8xf32> to vector<8x8xbf16>
    %160 = arith.truncf %151 : vector<8x8xf32> to vector<8x8xbf16>
    %cst_137 = arith.constant dense<0.000000e+00> : vector<8x8xf32>
    %161 = tpu.matmul %159, %160, %cst_137 {dimension_numbers = #tpu.dot_dimension_numbers<[1], [1], [0], [0], [0, 0, 1, 0], [], []>} : vector<8x8xbf16>, vector<8x8xbf16>, vector<8x8xf32> -> vector<8x8xf32>
    %cst_138 = arith.constant 0.353553385 : f32
    %162 = vector.broadcast %cst_138 : f32 to vector<8x8xf32>
    %163 = arith.mulf %161, %162 : vector<8x8xf32>
    %cst_139 = arith.constant dense<0xFF800000> : vector<8xf32>
    %164 = vector.multi_reduction <maximumf>, %163, %cst_139 [1] : vector<8x8xf32> to vector<8xf32>
    %165 = vector.shape_cast %164 : vector<8xf32> to vector<8x1xf32>
    %166 = vector.broadcast %165 : vector<8x1xf32> to vector<8x8xf32>
    %167 = arith.subf %163, %166 : vector<8x8xf32>
    %168 = math.exp %167 : vector<8x8xf32>
    %cst_140 = arith.constant dense<0.000000e+00> : vector<8xf32>
    %169 = vector.multi_reduction <add>, %168, %cst_140 [1] : vector<8x8xf32> to vector<8xf32>
    %170 = vector.shape_cast %169 : vector<8xf32> to vector<8x1xf32>
    %171 = tpu.reciprocal %170 {approx = true} : vector<8x1xf32> -> vector<8x1xf32>
    %172 = vector.broadcast %171 : vector<8x1xf32> to vector<8x8xf32>
    %173 = arith.mulf %168, %172 : vector<8x8xf32>
    %174 = arith.truncf %173 : vector<8x8xf32> to vector<8x8xbf16>
    %175 = arith.truncf %158 : vector<8x8xf32> to vector<8x8xbf16>
    %cst_141 = arith.constant dense<0.000000e+00> : vector<8x8xf32>
    %176 = tpu.matmul %174, %175, %cst_141 {dimension_numbers = #tpu.dot_dimension_numbers<[1], [0], [0], [1], [0, 0, 1, 1], [], []>} : vector<8x8xbf16>, vector<8x8xbf16>, vector<8x8xf32> -> vector<8x8xf32>
    %177 = arith.truncf %176 : vector<8x8xf32> to vector<8x8xbf16>
    %c0_142 = arith.constant 0 : index
    %c3_143 = arith.constant 3 : index
    %c0_144 = arith.constant 0 : index
    %c0_145 = arith.constant 0 : index
    %178 = vector.load %arg9[%c0_142, %c3_143, %c0_144, %c0_145] : memref<1x4x8x32xbf16, #tpu.memory_space<vmem>>, vector<1x1x8x32xbf16>
    %179 = vector.shape_cast %178 : vector<1x1x8x32xbf16> to vector<8x32xbf16>
    %cst_146 = arith.constant dense<0.000000e+00> : vector<8x32xf32>
    %180 = tpu.matmul %177, %179, %cst_146 {dimension_numbers = #tpu.dot_dimension_numbers<[1], [0], [0], [1], [0, 0, 1, 1], [], []>} : vector<8x8xbf16>, vector<8x32xbf16>, vector<8x32xf32> -> vector<8x32xf32>
    %181 = arith.addf %137, %180 : vector<8x32xf32>
    %c0_147 = arith.constant 0 : index
    %c0_148 = arith.constant 0 : index
    %c0_149 = arith.constant 0 : index
    %182 = vector.load %arg10[%c0_147, %c0_148, %c0_149] : memref<1x1x32xf32, #tpu.memory_space<vmem>>, vector<1x1x32xf32>
    %183 = vector.shape_cast %182 : vector<1x1x32xf32> to vector<1x32xf32>
    %184 = vector.broadcast %183 : vector<1x32xf32> to vector<8x32xf32>
    %185 = arith.addf %181, %184 : vector<8x32xf32>
    %186 = arith.addf %3, %185 : vector<8x32xf32>
    %c0_150 = arith.constant 0 : index
    %c0_151 = arith.constant 0 : index
    %c0_152 = arith.constant 0 : index
    %187 = vector.load %arg11[%c0_150, %c0_151, %c0_152] : memref<1x1x32xf32, #tpu.memory_space<vmem>>, vector<1x1x32xf32>
    %188 = vector.shape_cast %187 : vector<1x1x32xf32> to vector<1x32xf32>
    %c0_153 = arith.constant 0 : index
    %c0_154 = arith.constant 0 : index
    %c0_155 = arith.constant 0 : index
    %189 = vector.load %arg12[%c0_153, %c0_154, %c0_155] : memref<1x1x32xf32, #tpu.memory_space<vmem>>, vector<1x1x32xf32>
    %190 = vector.shape_cast %189 : vector<1x1x32xf32> to vector<1x32xf32>
    %cst_156 = arith.constant dense<0.000000e+00> : vector<8xf32>
    %191 = vector.multi_reduction <add>, %186, %cst_156 [1] : vector<8x32xf32> to vector<8xf32>
    %192 = vector.shape_cast %191 : vector<8xf32> to vector<8x1xf32>
    %cst_157 = arith.constant 3.200000e+01 : f32
    %193 = vector.broadcast %cst_157 : f32 to vector<8x1xf32>
    %194 = arith.divf %192, %193 : vector<8x1xf32>
    %195 = vector.broadcast %194 : vector<8x1xf32> to vector<8x32xf32>
    %196 = arith.subf %186, %195 : vector<8x32xf32>
    %197 = arith.mulf %196, %196 : vector<8x32xf32>
    %cst_158 = arith.constant dense<0.000000e+00> : vector<8xf32>
    %198 = vector.multi_reduction <add>, %197, %cst_158 [1] : vector<8x32xf32> to vector<8xf32>
    %199 = vector.shape_cast %198 : vector<8xf32> to vector<8x1xf32>
    %cst_159 = arith.constant 3.200000e+01 : f32
    %200 = vector.broadcast %cst_159 : f32 to vector<8x1xf32>
    %201 = arith.divf %199, %200 : vector<8x1xf32>
    %202 = vector.broadcast %194 : vector<8x1xf32> to vector<8x32xf32>
    %203 = arith.subf %186, %202 : vector<8x32xf32>
    %cst_160 = arith.constant 9.99999974E-6 : f32
    %204 = vector.broadcast %cst_160 : f32 to vector<8x1xf32>
    %205 = arith.addf %201, %204 : vector<8x1xf32>
    %206 = math.rsqrt %205 : vector<8x1xf32>
    %207 = vector.broadcast %206 : vector<8x1xf32> to vector<8x32xf32>
    %208 = arith.mulf %203, %207 : vector<8x32xf32>
    %209 = vector.broadcast %188 : vector<1x32xf32> to vector<8x32xf32>
    %210 = arith.mulf %208, %209 : vector<8x32xf32>
    %211 = vector.broadcast %190 : vector<1x32xf32> to vector<8x32xf32>
    %212 = arith.addf %210, %211 : vector<8x32xf32>
    %213 = arith.truncf %212 : vector<8x32xf32> to vector<8x32xbf16>
    %c0_161 = arith.constant 0 : index
    %c0_162 = arith.constant 0 : index
    %c0_163 = arith.constant 0 : index
    %214 = vector.load %arg13[%c0_161, %c0_162, %c0_163] : memref<1x32x64xbf16, #tpu.memory_space<vmem>>, vector<1x32x64xbf16>
    %215 = vector.shape_cast %214 : vector<1x32x64xbf16> to vector<32x64xbf16>
    %cst_164 = arith.constant dense<0.000000e+00> : vector<8x64xf32>
    %216 = tpu.matmul %213, %215, %cst_164 {dimension_numbers = #tpu.dot_dimension_numbers<[1], [0], [0], [1], [0, 0, 1, 1], [], []>} : vector<8x32xbf16>, vector<32x64xbf16>, vector<8x64xf32> -> vector<8x64xf32>
    %c0_165 = arith.constant 0 : index
    %c0_166 = arith.constant 0 : index
    %c0_167 = arith.constant 0 : index
    %217 = vector.load %arg14[%c0_165, %c0_166, %c0_167] : memref<1x1x64xf32, #tpu.memory_space<vmem>>, vector<1x1x64xf32>
    %218 = vector.shape_cast %217 : vector<1x1x64xf32> to vector<1x64xf32>
    %219 = vector.broadcast %218 : vector<1x64xf32> to vector<8x64xf32>
    %220 = arith.addf %216, %219 : vector<8x64xf32>
    %cst_168 = arith.constant 0.000000e+00 : f32
    %221 = vector.broadcast %cst_168 : f32 to vector<8x64xf32>
    %222 = arith.maximumf %220, %221 : vector<8x64xf32>
    %223 = arith.truncf %222 : vector<8x64xf32> to vector<8x64xbf16>
    %c0_169 = arith.constant 0 : index
    %c0_170 = arith.constant 0 : index
    %c0_171 = arith.constant 0 : index
    %224 = vector.load %arg15[%c0_169, %c0_170, %c0_171] : memref<1x64x32xbf16, #tpu.memory_space<vmem>>, vector<1x64x32xbf16>
    %225 = vector.shape_cast %224 : vector<1x64x32xbf16> to vector<64x32xbf16>
    %cst_172 = arith.constant dense<0.000000e+00> : vector<8x32xf32>
    %226 = tpu.matmul %223, %225, %cst_172 {dimension_numbers = #tpu.dot_dimension_numbers<[1], [0], [0], [1], [0, 0, 1, 1], [], []>} : vector<8x64xbf16>, vector<64x32xbf16>, vector<8x32xf32> -> vector<8x32xf32>
    %c0_173 = arith.constant 0 : index
    %c0_174 = arith.constant 0 : index
    %c0_175 = arith.constant 0 : index
    %227 = vector.load %arg16[%c0_173, %c0_174, %c0_175] : memref<1x1x32xf32, #tpu.memory_space<vmem>>, vector<1x1x32xf32>
    %228 = vector.shape_cast %227 : vector<1x1x32xf32> to vector<1x32xf32>
    %229 = vector.broadcast %228 : vector<1x32xf32> to vector<8x32xf32>
    %230 = arith.addf %226, %229 : vector<8x32xf32>
    %231 = arith.addf %212, %230 : vector<8x32xf32>
    %c0_176 = arith.constant 0 : index
    %c0_177 = arith.constant 0 : index
    %c0_178 = arith.constant 0 : index
    %232 = vector.load %arg17[%c0_176, %c0_177, %c0_178] : memref<1x1x32xf32, #tpu.memory_space<vmem>>, vector<1x1x32xf32>
    %233 = vector.shape_cast %232 : vector<1x1x32xf32> to vector<1x32xf32>
    %c0_179 = arith.constant 0 : index
    %c0_180 = arith.constant 0 : index
    %c0_181 = arith.constant 0 : index
    %234 = vector.load %arg18[%c0_179, %c0_180, %c0_181] : memref<1x1x32xf32, #tpu.memory_space<vmem>>, vector<1x1x32xf32>
    %235 = vector.shape_cast %234 : vector<1x1x32xf32> to vector<1x32xf32>
    %cst_182 = arith.constant dense<0.000000e+00> : vector<8xf32>
    %236 = vector.multi_reduction <add>, %231, %cst_182 [1] : vector<8x32xf32> to vector<8xf32>
    %237 = vector.shape_cast %236 : vector<8xf32> to vector<8x1xf32>
    %cst_183 = arith.constant 3.200000e+01 : f32
    %238 = vector.broadcast %cst_183 : f32 to vector<8x1xf32>
    %239 = arith.divf %237, %238 : vector<8x1xf32>
    %240 = vector.broadcast %239 : vector<8x1xf32> to vector<8x32xf32>
    %241 = arith.subf %231, %240 : vector<8x32xf32>
    %242 = arith.mulf %241, %241 : vector<8x32xf32>
    %cst_184 = arith.constant dense<0.000000e+00> : vector<8xf32>
    %243 = vector.multi_reduction <add>, %242, %cst_184 [1] : vector<8x32xf32> to vector<8xf32>
    %244 = vector.shape_cast %243 : vector<8xf32> to vector<8x1xf32>
    %cst_185 = arith.constant 3.200000e+01 : f32
    %245 = vector.broadcast %cst_185 : f32 to vector<8x1xf32>
    %246 = arith.divf %244, %245 : vector<8x1xf32>
    %247 = vector.broadcast %239 : vector<8x1xf32> to vector<8x32xf32>
    %248 = arith.subf %231, %247 : vector<8x32xf32>
    %cst_186 = arith.constant 9.99999974E-6 : f32
    %249 = vector.broadcast %cst_186 : f32 to vector<8x1xf32>
    %250 = arith.addf %246, %249 : vector<8x1xf32>
    %251 = math.rsqrt %250 : vector<8x1xf32>
    %252 = vector.broadcast %251 : vector<8x1xf32> to vector<8x32xf32>
    %253 = arith.mulf %248, %252 : vector<8x32xf32>
    %254 = vector.broadcast %233 : vector<1x32xf32> to vector<8x32xf32>
    %255 = arith.mulf %253, %254 : vector<8x32xf32>
    %256 = vector.broadcast %235 : vector<1x32xf32> to vector<8x32xf32>
    %257 = arith.addf %255, %256 : vector<8x32xf32>
    %c0_187 = arith.constant 0 : index
    %c0_188 = arith.constant 0 : index
    %258 = vector.load %arg22[%c0_187, %c0_188] : memref<8x32xf32, #tpu.memory_space<vmem>>, vector<8x32xf32>
    tpu.vector_store %arg22[%c0_187, %c0_188], %257 {strides = array<i32>} : memref<8x32xf32, #tpu.memory_space<vmem>>, vector<8x32xf32>,
    %c1_i32 = arith.constant 1 : i32
    %259 = arith.cmpi eq, %arg1, %c1_i32 : i32
    %260 = arith.extui %259 : i1 to i32
    %c0_i32_189 = arith.constant 0 : i32
    %261 = arith.cmpi ne, %260, %c0_i32_189 : i32
    scf.if %261 {
      %c7 = arith.constant 7 : index
      %c0_190 = arith.constant 0 : index
      %262 = vector.load %arg22[%c7, %c0_190] : memref<8x32xf32, #tpu.memory_space<vmem>>, vector<1x32xf32>
      %263 = arith.truncf %262 : vector<1x32xf32> to vector<1x32xbf16>
      %c0_191 = arith.constant 0 : index
      %c0_192 = arith.constant 0 : index
      %264 = vector.load %arg19[%c0_191, %c0_192] : memref<32x128xbf16, #tpu.memory_space<vmem>>, vector<32x128xbf16>
      %cst_193 = arith.constant dense<0.000000e+00> : vector<1x128xf32>
      %265 = tpu.matmul %263, %264, %cst_193 {dimension_numbers = #tpu.dot_dimension_numbers<[1], [0], [0], [1], [0, 0, 1, 1], [], []>} : vector<1x32xbf16>, vector<32x128xbf16>, vector<1x128xf32> -> vector<1x128xf32>
      %c0_194 = arith.constant 0 : index
      %c0_195 = arith.constant 0 : index
      %266 = vector.load %arg20[%c0_194, %c0_195] : memref<1x128xf32, #tpu.memory_space<vmem>>, vector<1x128xf32>
      %267 = arith.addf %265, %266 : vector<1x128xf32>
      %c0_196 = arith.constant 0 : index
      %c0_197 = arith.constant 0 : index
      %c0_198 = arith.constant 0 : index
      %268 = vector.load %arg21[%c0_196, %c0_197, %c0_198] : memref<1x1x128xf32, #tpu.memory_space<vmem>>, vector<1x1x128xf32>
      %269 = vector.shape_cast %268 : vector<1x1x128xf32> to vector<1x128xf32>
      %270 = vector.shape_cast %267 : vector<1x128xf32> to vector<1x1x128xf32>
      tpu.vector_store %arg21[%c0_196, %c0_197, %c0_198], %270 {strides = array<i32>} : memref<1x1x128xf32, #tpu.memory_space<vmem>>, vector<1x1x128xf32>,
    } else {
    }
    return
  }
  func.func @transform_0(%arg0: i32, %arg1: i32) -> (i32, i32, i32) {
    %c0_i32 = arith.constant 0 : i32
    %c0_i32_0 = arith.constant 0 : i32
    %c0_i32_1 = arith.constant 0 : i32
    return %arg0, %c0_i32, %c0_i32_0 : i32, i32, i32
  }
  func.func @transform_1(%arg0: i32, %arg1: i32) -> (i32, i32, i32, i32) {
    %c0_i32 = arith.constant 0 : i32
    %c0_i32_0 = arith.constant 0 : i32
    %c0_i32_1 = arith.constant 0 : i32
    %c0_i32_2 = arith.constant 0 : i32
    return %arg1, %c0_i32, %c0_i32_0, %c0_i32_1 : i32, i32, i32, i32
  }
  func.func @transform_2(%arg0: i32, %arg1: i32) -> (i32, i32, i32, i32) {
    %c0_i32 = arith.constant 0 : i32
    %c0_i32_0 = arith.constant 0 : i32
    %c0_i32_1 = arith.constant 0 : i32
    %c0_i32_2 = arith.constant 0 : i32
    return %arg1, %c0_i32, %c0_i32_0, %c0_i32_1 : i32, i32, i32, i32
  }
  func.func @transform_3(%arg0: i32, %arg1: i32) -> (i32, i32, i32, i32) {
    %c0_i32 = arith.constant 0 : i32
    %c0_i32_0 = arith.constant 0 : i32
    %c0_i32_1 = arith.constant 0 : i32
    %c0_i32_2 = arith.constant 0 : i32
    return %arg1, %c0_i32, %c0_i32_0, %c0_i32_1 : i32, i32, i32, i32
  }
  func.func @transform_4(%arg0: i32, %arg1: i32) -> (i32, i32, i32, i32) {
    %c0_i32 = arith.constant 0 : i32
    %c0_i32_0 = arith.constant 0 : i32
    %c0_i32_1 = arith.constant 0 : i32
    %c0_i32_2 = arith.constant 0 : i32
    return %arg1, %c0_i32, %c0_i32_0, %c0_i32_1 : i32, i32, i32, i32
  }
  func.func @transform_5(%arg0: i32, %arg1: i32) -> (i32, i32, i32, i32) {
    %c0_i32 = arith.constant 0 : i32
    %c0_i32_0 = arith.constant 0 : i32
    %c0_i32_1 = arith.constant 0 : i32
    %c0_i32_2 = arith.constant 0 : i32
    return %arg1, %c0_i32, %c0_i32_0, %c0_i32_1 : i32, i32, i32, i32
  }
  func.func @transform_6(%arg0: i32, %arg1: i32) -> (i32, i32, i32, i32) {
    %c0_i32 = arith.constant 0 : i32
    %c0_i32_0 = arith.constant 0 : i32
    %c0_i32_1 = arith.constant 0 : i32
    %c0_i32_2 = arith.constant 0 : i32
    return %arg1, %c0_i32, %c0_i32_0, %c0_i32_1 : i32, i32, i32, i32
  }
  func.func @transform_7(%arg0: i32, %arg1: i32) -> (i32, i32, i32, i32) {
    %c0_i32 = arith.constant 0 : i32
    %c0_i32_0 = arith.constant 0 : i32
    %c0_i32_1 = arith.constant 0 : i32
    %c0_i32_2 = arith.constant 0 : i32
    return %arg1, %c0_i32, %c0_i32_0, %c0_i32_1 : i32, i32, i32, i32
  }
  func.func @transform_8(%arg0: i32, %arg1: i32) -> (i32, i32, i32) {
    %c0_i32 = arith.constant 0 : i32
    %c0_i32_0 = arith.constant 0 : i32
    %c0_i32_1 = arith.constant 0 : i32
    return %arg1, %c0_i32, %c0_i32_0 : i32, i32, i32
  }
  func.func @transform_9(%arg0: i32, %arg1: i32) -> (i32, i32, i32) {
    %c0_i32 = arith.constant 0 : i32
    %c0_i32_0 = arith.constant 0 : i32
    %c0_i32_1 = arith.constant 0 : i32
    return %arg1, %c0_i32, %c0_i32_0 : i32, i32, i32
  }
  func.func @transform_10(%arg0: i32, %arg1: i32) -> (i32, i32, i32) {
    %c0_i32 = arith.constant 0 : i32
    %c0_i32_0 = arith.constant 0 : i32
    %c0_i32_1 = arith.constant 0 : i32
    return %arg1, %c0_i32, %c0_i32_0 : i32, i32, i32
  }
  func.func @transform_11(%arg0: i32, %arg1: i32) -> (i32, i32, i32) {
    %c0_i32 = arith.constant 0 : i32
    %c0_i32_0 = arith.constant 0 : i32
    %c0_i32_1 = arith.constant 0 : i32
    return %arg1, %c0_i32, %c0_i32_0 : i32, i32, i32
  }
  func.func @transform_12(%arg0: i32, %arg1: i32) -> (i32, i32, i32) {
    %c0_i32 = arith.constant 0 : i32
    %c0_i32_0 = arith.constant 0 : i32
    %c0_i32_1 = arith.constant 0 : i32
    return %arg1, %c0_i32, %c0_i32_0 : i32, i32, i32
  }
  func.func @transform_13(%arg0: i32, %arg1: i32) -> (i32, i32, i32) {
    %c0_i32 = arith.constant 0 : i32
    %c0_i32_0 = arith.constant 0 : i32
    %c0_i32_1 = arith.constant 0 : i32
    return %arg1, %c0_i32, %c0_i32_0 : i32, i32, i32
  }
  func.func @transform_14(%arg0: i32, %arg1: i32) -> (i32, i32, i32) {
    %c0_i32 = arith.constant 0 : i32
    %c0_i32_0 = arith.constant 0 : i32
    %c0_i32_1 = arith.constant 0 : i32
    return %arg1, %c0_i32, %c0_i32_0 : i32, i32, i32
  }
  func.func @transform_15(%arg0: i32, %arg1: i32) -> (i32, i32, i32) {
    %c0_i32 = arith.constant 0 : i32
    %c0_i32_0 = arith.constant 0 : i32
    %c0_i32_1 = arith.constant 0 : i32
    return %arg1, %c0_i32, %c0_i32_0 : i32, i32, i32
  }
  func.func @transform_16(%arg0: i32, %arg1: i32) -> (i32, i32, i32) {
    %c0_i32 = arith.constant 0 : i32
    %c0_i32_0 = arith.constant 0 : i32
    %c0_i32_1 = arith.constant 0 : i32
    return %arg1, %c0_i32, %c0_i32_0 : i32, i32, i32
  }
  func.func @transform_17(%arg0: i32, %arg1: i32) -> (i32, i32) {
    %c0_i32 = arith.constant 0 : i32
    %c0_i32_0 = arith.constant 0 : i32
    %c0_i32_1 = arith.constant 0 : i32
    return %c0_i32, %c0_i32_0 : i32, i32
  }
  func.func @transform_18(%arg0: i32, %arg1: i32) -> (i32, i32) {
    %c0_i32 = arith.constant 0 : i32
    %c0_i32_0 = arith.constant 0 : i32
    %c0_i32_1 = arith.constant 0 : i32
    return %c0_i32, %c0_i32_0 : i32, i32
  }
  func.func @transform_19(%arg0: i32, %arg1: i32) -> (i32, i32, i32) {
    %c0_i32 = arith.constant 0 : i32
    %c0_i32_0 = arith.constant 0 : i32
    %c0_i32_1 = arith.constant 0 : i32
    return %arg0, %c0_i32, %c0_i32_0 : i32, i32, i32
  }
}

</mosaic_0001>

<llo_original>
// kernel: model_forward.1
$region0: #{model_forward.1}
  #allocation0 [shape = 'u32[]', space=smem, size = 0x4, offset = 0x4, fixed_abs, tag = 'smem constant byte address 0x4 - core index']
  #allocation1 [shape = 'u32[144,128]{1,0:T(1,128)}', space=vmem, size = 0x12000, scoped, tag = 'internal scratch']
  #allocation2 [shape = 'f32[8,32]{1,0:T(8,128)}', space=vmem, size = 0x1000, scoped, tag = 'scratch operand']
  %s0 = inlined_call_operand.vmem [shape: f32[2,8,32], index: 0, kind: input, shape index: {}]
  %s1 = inlined_call_operand.vmem [shape: bf16[2,4,32,8], index: 1, kind: input, shape index: {}]
  %s2 = inlined_call_operand.vmem [shape: bf16[2,4,32,8], index: 2, kind: input, shape index: {}]
  %s3 = inlined_call_operand.vmem [shape: bf16[2,4,32,8], index: 3, kind: input, shape index: {}]
  %s4 = inlined_call_operand.vmem [shape: f32[2,4,1,8], index: 4, kind: input, shape index: {}]
  %s5 = inlined_call_operand.vmem [shape: f32[2,4,1,8], index: 5, kind: input, shape index: {}]
  %s6 = inlined_call_operand.vmem [shape: f32[2,4,1,8], index: 6, kind: input, shape index: {}]
  %s7 = inlined_call_operand.vmem [shape: bf16[2,4,8,32], index: 7, kind: input, shape index: {}]
  %s8 = inlined_call_operand.vmem [shape: f32[2,1,32], index: 8, kind: input, shape index: {}]
  %s9 = inlined_call_operand.vmem [shape: f32[2,1,32], index: 9, kind: input, shape index: {}]
  %s10 = inlined_call_operand.vmem [shape: f32[2,1,32], index: 10, kind: input, shape index: {}]
  %s11 = inlined_call_operand.vmem [shape: bf16[2,32,64], index: 11, kind: input, shape index: {}]
  %s12 = inlined_call_operand.vmem [shape: f32[2,1,64], index: 12, kind: input, shape index: {}]
  %s13 = inlined_call_operand.vmem [shape: bf16[2,64,32], index: 13, kind: input, shape index: {}]
  %s14 = inlined_call_operand.vmem [shape: f32[2,1,32], index: 14, kind: input, shape index: {}]
  %s15 = inlined_call_operand.vmem [shape: f32[2,1,32], index: 15, kind: input, shape index: {}]
  %s16 = inlined_call_operand.vmem [shape: f32[2,1,32], index: 16, kind: input, shape index: {}]
  %s17 = inlined_call_operand.vmem [shape: bf16[32,128], index: 17, kind: input, shape index: {}]
  %s18 = inlined_call_operand.vmem [shape: f32[1,128], index: 18, kind: input, shape index: {}]
  %s19 = inlined_call_operand.hbm [shape: f32[2,1,128], index: 19, kind: output, shape index: {}]
  %s20 = sld [smem:[#allocation0]]
  $region117: #{model_forward.1} parent=0
    _
  %s22 = ssub.s32 1, %s20
  %s23 = scalar_select 0, %s22, %s20
  $region1: #{model_forward.1} parent=0
    #allocation3 [shape = 'u8[1024]{0}', space=vmem, size = 0x400, scoped, tag = 'output window, operand 0']
    #allocation4 [shape = 's32[2]{0}', space=sflag, size = 0x8, scoped, tag = 'scoped memory for model_forward.1']
    %24 = vsyncpa [#allocation4], 0
    %s25 = scalar_lea.sflag [#allocation4], 1
    %26 = vsyncpa %s25, 0
    loop: start=0, step=1, limit=6
    $region2: #{model_forward.1} parent=1 // loop_pre_header
      _
    $region3: #{model_forward.1} parent=1 // loop_header
      %s28 = sphi 0, %s32
      %p29 = scmp.ge.s32.totalorder %s28, 6
      %s35 = sphi 0, %s47
      %s36 = sphi 0, %s43
      %s37 = sphi 0, %s35
      %s38 = sphi 0, %s36
      %s39 = sphi 0, %s37
      %s40 = sphi 0, %s38
      %s50 = sphi 0, %s52
      %s53 = sphi 0, %s50
      %s54 = sphi 0, %s53
      %s70 = sphi 0, %s54
      %s76 = sphi 0, %s78
      %s79 = sphi 0, %s76
      %s80 = sphi 0, %s79
      %s96 = sphi 0, %s80
      %s102 = sphi 0, %s104
      %s105 = sphi 0, %s102
      %s106 = sphi 0, %s105
      %s122 = sphi 0, %s106
      %s128 = sphi 0, %s130
      %s131 = sphi 0, %s128
      %s132 = sphi 0, %s131
      %s148 = sphi 0, %s132
      %s154 = sphi 0, %s156
      %s157 = sphi 0, %s154
      %s158 = sphi 0, %s157
      %s174 = sphi 0, %s158
      %s180 = sphi 0, %s182
      %s183 = sphi 0, %s180
      %s184 = sphi 0, %s183
      %s200 = sphi 0, %s184
      %s206 = sphi 0, %s208
      %s209 = sphi 0, %s206
      %s210 = sphi 0, %s209
      %s226 = sphi 0, %s210
      %s232 = sphi 0, %s234
      %s235 = sphi 0, %s232
      %s236 = sphi 0, %s235
      %s252 = sphi 0, %s236
      %s258 = sphi 0, %s260
      %s261 = sphi 0, %s258
      %s262 = sphi 0, %s261
      %s278 = sphi 0, %s262
      %s284 = sphi 0, %s286
      %s287 = sphi 0, %s284
      %s288 = sphi 0, %s287
      %s304 = sphi 0, %s288
      %s310 = sphi 0, %s312
      %s313 = sphi 0, %s310
      %s314 = sphi 0, %s313
      %s330 = sphi 0, %s314
      %s336 = sphi 0, %s338
      %s339 = sphi 0, %s336
      %s340 = sphi 0, %s339
      %s356 = sphi 0, %s340
      %s362 = sphi 0, %s364
      %s365 = sphi 0, %s362
      %s366 = sphi 0, %s365
      %s382 = sphi 0, %s366
      %s388 = sphi 0, %s390
      %s391 = sphi 0, %s388
      %s392 = sphi 0, %s391
      %s408 = sphi 0, %s392
      %s414 = sphi 0, %s416
      %s417 = sphi 0, %s414
      %s418 = sphi 0, %s417
      %s434 = sphi 0, %s418
      %s440 = sphi 0, %s442
      %s443 = sphi 0, %s440
      %s444 = sphi 0, %s443
      %s460 = sphi 0, %s444
      %s466 = sphi 0, %s468
      %s469 = sphi 0, %s466
      %s470 = sphi 0, %s469
      %s486 = sphi 0, %s470
      %s490 = sphi 0, %s490
      %s492 = sphi 0, %s490
      %s493 = sphi 0, %s492
      %s507 = sphi 0, %s493
      %s511 = sphi 0, %s511
      %s513 = sphi 0, %s511
      %s514 = sphi 0, %s513
      %s528 = sphi 0, %s514
      %s534 = sphi 0, %s536
      %s537 = sphi 0, %s534
      %s538 = sphi 0, %s537
      %s554 = sphi 0, %s538
    $region4: #{model_forward.1} parent=1 // loop_header_branch
      %31 = sbr.rel (%p29) target = $region8
    $region5: #{model_forward.1} parent=1 // loop_body
      %s33 = ssub.s32 %s28, 1
      %s34 = ssub.s32 %s28, 2
      %s41 = sadd.s32 1, %s36
      %p42 = scmp.ge.s32.totalorder %s41, 2
      %s43 = scalar_select %p42, 0, %s41
      %s44 = sadd.s32 1, %s35
      %s45 = scalar_select %p42, %s44, %s35
      %p46 = scmp.ge.s32.totalorder %s45, 2
      %s47 = scalar_select %p46, 0, %s45
      %s48 = ssub.s32 %s35, %s47
      %p49 = scmp.eq.s32.totalorder %s48, 0
      %s51 = sadd.s32 %s50, 1
      %s52 = scalar_select %p49, %s50, %s51
      %p55 = pneg %p49
      %p56 = scmp.eq.s32.totalorder %s28, 3
      %p57 = por %p55, %p56
      %p58 = scmp.ne.s32.totalorder %s50, %s53
      %p59 = scmp.eq.s32.totalorder %s28, 0
      %p60 = por %p58, %p59
      %p61 = scmp.ne.s32.totalorder %s50, %s53
      %p62 = scmp.eq.s32.totalorder %s33, 3
      %p63 = por %p61, %p62
      %p64 = scmp.ne.s32.totalorder %s53, %s54
      %p65 = scmp.eq.s32.totalorder %s33, 0
      %p66 = por %p64, %p65
      %p67 = scmp.ne.s32.totalorder %s53, %s54
      %p68 = scmp.eq.s32.totalorder %s34, 3
      %p69 = por %p67, %p68
      %p71 = scmp.ne.s32.totalorder %s54, %s70
      %p72 = scmp.eq.s32.totalorder %s34, 0
      %p73 = por %p71, %p72
      %s74 = ssub.s32 %s36, %s43
      %p75 = scmp.eq.s32.totalorder %s74, 0
      %s77 = sadd.s32 %s76, 1
      %s78 = scalar_select %p75, %s76, %s77
      %p81 = pneg %p75
      %p82 = scmp.eq.s32.totalorder %s28, 3
      %p83 = por %p81, %p82
      %p84 = scmp.ne.s32.totalorder %s76, %s79
      %p85 = scmp.eq.s32.totalorder %s28, 0
      %p86 = por %p84, %p85
      %p87 = scmp.ne.s32.totalorder %s76, %s79
      %p88 = scmp.eq.s32.totalorder %s33, 3
      %p89 = por %p87, %p88
      %p90 = scmp.ne.s32.totalorder %s79, %s80
      %p91 = scmp.eq.s32.totalorder %s33, 0
      %p92 = por %p90, %p91
      %p93 = scmp.ne.s32.totalorder %s79, %s80
      %p94 = scmp.eq.s32.totalorder %s34, 3
      %p95 = por %p93, %p94
      %p97 = scmp.ne.s32.totalorder %s80, %s96
      %p98 = scmp.eq.s32.totalorder %s34, 0
      %p99 = por %p97, %p98
      %s100 = ssub.s32 %s36, %s43
      %p101 = scmp.eq.s32.totalorder %s100, 0
      %s103 = sadd.s32 %s102, 1
      %s104 = scalar_select %p101, %s102, %s103
      %p107 = pneg %p101
      %p108 = scmp.eq.s32.totalorder %s28, 3
      %p109 = por %p107, %p108
      %p110 = scmp.ne.s32.totalorder %s102, %s105
      %p111 = scmp.eq.s32.totalorder %s28, 0
      %p112 = por %p110, %p111
      %p113 = scmp.ne.s32.totalorder %s102, %s105
      %p114 = scmp.eq.s32.totalorder %s33, 3
      %p115 = por %p113, %p114
      %p116 = scmp.ne.s32.totalorder %s105, %s106
      %p117 = scmp.eq.s32.totalorder %s33, 0
      %p118 = por %p116, %p117
      %p119 = scmp.ne.s32.totalorder %s105, %s106
      %p120 = scmp.eq.s32.totalorder %s34, 3
      %p121 = por %p119, %p120
      %p123 = scmp.ne.s32.totalorder %s106, %s122
      %p124 = scmp.eq.s32.totalorder %s34, 0
      %p125 = por %p123, %p124
      %s126 = ssub.s32 %s36, %s43
      %p127 = scmp.eq.s32.totalorder %s126, 0
      %s129 = sadd.s32 %s128, 1
      %s130 = scalar_select %p127, %s128, %s129
      %p133 = pneg %p127
      %p134 = scmp.eq.s32.totalorder %s28, 3
      %p135 = por %p133, %p134
      %p136 = scmp.ne.s32.totalorder %s128, %s131
      %p137 = scmp.eq.s32.totalorder %s28, 0
      %p138 = por %p136, %p137
      %p139 = scmp.ne.s32.totalorder %s128, %s131
      %p140 = scmp.eq.s32.totalorder %s33, 3
      %p141 = por %p139, %p140
      %p142 = scmp.ne.s32.totalorder %s131, %s132
      %p143 = scmp.eq.s32.totalorder %s33, 0
      %p144 = por %p142, %p143
      %p145 = scmp.ne.s32.totalorder %s131, %s132
      %p146 = scmp.eq.s32.totalorder %s34, 3
      %p147 = por %p145, %p146
      %p149 = scmp.ne.s32.totalorder %s132, %s148
      %p150 = scmp.eq.s32.totalorder %s34, 0
      %p151 = por %p149, %p150
      %s152 = ssub.s32 %s36, %s43
      %p153 = scmp.eq.s32.totalorder %s152, 0
      %s155 = sadd.s32 %s154, 1
      %s156 = scalar_select %p153, %s154, %s155
      %p159 = pneg %p153
      %p160 = scmp.eq.s32.totalorder %s28, 3
      %p161 = por %p159, %p160
      %p162 = scmp.ne.s32.totalorder %s154, %s157
      %p163 = scmp.eq.s32.totalorder %s28, 0
      %p164 = por %p162, %p163
      %p165 = scmp.ne.s32.totalorder %s154, %s157
      %p166 = scmp.eq.s32.totalorder %s33, 3
      %p167 = por %p165, %p166
      %p168 = scmp.ne.s32.totalorder %s157, %s158
      %p169 = scmp.eq.s32.totalorder %s33, 0
      %p170 = por %p168, %p169
      %p171 = scmp.ne.s32.totalorder %s157, %s158
      %p172 = scmp.eq.s32.totalorder %s34, 3
      %p173 = por %p171, %p172
      %p175 = scmp.ne.s32.totalorder %s158, %s174
      %p176 = scmp.eq.s32.totalorder %s34, 0
      %p177 = por %p175, %p176
      %s178 = ssub.s32 %s36, %s43
      %p179 = scmp.eq.s32.totalorder %s178, 0
      %s181 = sadd.s32 %s180, 1
      %s182 = scalar_select %p179, %s180, %s181
      %p185 = pneg %p179
      %p186 = scmp.eq.s32.totalorder %s28, 3
      %p187 = por %p185, %p186
      %p188 = scmp.ne.s32.totalorder %s180, %s183
      %p189 = scmp.eq.s32.totalorder %s28, 0
      %p190 = por %p188, %p189
      %p191 = scmp.ne.s32.totalorder %s180, %s183
      %p192 = scmp.eq.s32.totalorder %s33, 3
      %p193 = por %p191, %p192
      %p194 = scmp.ne.s32.totalorder %s183, %s184
      %p195 = scmp.eq.s32.totalorder %s33, 0
      %p196 = por %p194, %p195
      %p197 = scmp.ne.s32.totalorder %s183, %s184
      %p198 = scmp.eq.s32.totalorder %s34, 3
      %p199 = por %p197, %p198
      %p201 = scmp.ne.s32.totalorder %s184, %s200
      %p202 = scmp.eq.s32.totalorder %s34, 0
      %p203 = por %p201, %p202
      %s204 = ssub.s32 %s36, %s43
      %p205 = scmp.eq.s32.totalorder %s204, 0
      %s207 = sadd.s32 %s206, 1
      %s208 = scalar_select %p205, %s206, %s207
      %p211 = pneg %p205
      %p212 = scmp.eq.s32.totalorder %s28, 3
      %p213 = por %p211, %p212
      %p214 = scmp.ne.s32.totalorder %s206, %s209
      %p215 = scmp.eq.s32.totalorder %s28, 0
      %p216 = por %p214, %p215
      %p217 = scmp.ne.s32.totalorder %s206, %s209
      %p218 = scmp.eq.s32.totalorder %s33, 3
      %p219 = por %p217, %p218
      %p220 = scmp.ne.s32.totalorder %s209, %s210
      %p221 = scmp.eq.s32.totalorder %s33, 0
      %p222 = por %p220, %p221
      %p223 = scmp.ne.s32.totalorder %s209, %s210
      %p224 = scmp.eq.s32.totalorder %s34, 3
      %p225 = por %p223, %p224
      %p227 = scmp.ne.s32.totalorder %s210, %s226
      %p228 = scmp.eq.s32.totalorder %s34, 0
      %p229 = por %p227, %p228
      %s230 = ssub.s32 %s36, %s43
      %p231 = scmp.eq.s32.totalorder %s230, 0
      %s233 = sadd.s32 %s232, 1
      %s234 = scalar_select %p231, %s232, %s233
      %p237 = pneg %p231
      %p238 = scmp.eq.s32.totalorder %s28, 3
      %p239 = por %p237, %p238
      %p240 = scmp.ne.s32.totalorder %s232, %s235
      %p241 = scmp.eq.s32.totalorder %s28, 0
      %p242 = por %p240, %p241
      %p243 = scmp.ne.s32.totalorder %s232, %s235
      %p244 = scmp.eq.s32.totalorder %s33, 3
      %p245 = por %p243, %p244
      %p246 = scmp.ne.s32.totalorder %s235, %s236
      %p247 = scmp.eq.s32.totalorder %s33, 0
      %p248 = por %p246, %p247
      %p249 = scmp.ne.s32.totalorder %s235, %s236
      %p250 = scmp.eq.s32.totalorder %s34, 3
      %p251 = por %p249, %p250
      %p253 = scmp.ne.s32.totalorder %s236, %s252
      %p254 = scmp.eq.s32.totalorder %s34, 0
      %p255 = por %p253, %p254
      %s256 = ssub.s32 %s36, %s43
      %p257 = scmp.eq.s32.totalorder %s256, 0
      %s259 = sadd.s32 %s258, 1
      %s260 = scalar_select %p257, %s258, %s259
      %p263 = pneg %p257
      %p264 = scmp.eq.s32.totalorder %s28, 3
      %p265 = por %p263, %p264
      %p266 = scmp.ne.s32.totalorder %s258, %s261
      %p267 = scmp.eq.s32.totalorder %s28, 0
      %p268 = por %p266, %p267
      %p269 = scmp.ne.s32.totalorder %s258, %s261
      %p270 = scmp.eq.s32.totalorder %s33, 3
      %p271 = por %p269, %p270
      %p272 = scmp.ne.s32.totalorder %s261, %s262
      %p273 = scmp.eq.s32.totalorder %s33, 0
      %p274 = por %p272, %p273
      %p275 = scmp.ne.s32.totalorder %s261, %s262
      %p276 = scmp.eq.s32.totalorder %s34, 3
      %p277 = por %p275, %p276
      %p279 = scmp.ne.s32.totalorder %s262, %s278
      %p280 = scmp.eq.s32.totalorder %s34, 0
      %p281 = por %p279, %p280
      %s282 = ssub.s32 %s36, %s43
      %p283 = scmp.eq.s32.totalorder %s282, 0
      %s285 = sadd.s32 %s284, 1
      %s286 = scalar_select %p283, %s284, %s285
      %p289 = pneg %p283
      %p290 = scmp.eq.s32.totalorder %s28, 3
      %p291 = por %p289, %p290
      %p292 = scmp.ne.s32.totalorder %s284, %s287
      %p293 = scmp.eq.s32.totalorder %s28, 0
      %p294 = por %p292, %p293
      %p295 = scmp.ne.s32.totalorder %s284, %s287
      %p296 = scmp.eq.s32.totalorder %s33, 3
      %p297 = por %p295, %p296
      %p298 = scmp.ne.s32.totalorder %s287, %s288
      %p299 = scmp.eq.s32.totalorder %s33, 0
      %p300 = por %p298, %p299
      %p301 = scmp.ne.s32.totalorder %s287, %s288
      %p302 = scmp.eq.s32.totalorder %s34, 3
      %p303 = por %p301, %p302
      %p305 = scmp.ne.s32.totalorder %s288, %s304
      %p306 = scmp.eq.s32.totalorder %s34, 0
      %p307 = por %p305, %p306
      %s308 = ssub.s32 %s36, %s43
      %p309 = scmp.eq.s32.totalorder %s308, 0
      %s311 = sadd.s32 %s310, 1
      %s312 = scalar_select %p309, %s310, %s311
      %p315 = pneg %p309
      %p316 = scmp.eq.s32.totalorder %s28, 3
      %p317 = por %p315, %p316
      %p318 = scmp.ne.s32.totalorder %s310, %s313
      %p319 = scmp.eq.s32.totalorder %s28, 0
      %p320 = por %p318, %p319
      %p321 = scmp.ne.s32.totalorder %s310, %s313
      %p322 = scmp.eq.s32.totalorder %s33, 3
      %p323 = por %p321, %p322
      %p324 = scmp.ne.s32.totalorder %s313, %s314
      %p325 = scmp.eq.s32.totalorder %s33, 0
      %p326 = por %p324, %p325
      %p327 = scmp.ne.s32.totalorder %s313, %s314
      %p328 = scmp.eq.s32.totalorder %s34, 3
      %p329 = por %p327, %p328
      %p331 = scmp.ne.s32.totalorder %s314, %s330
      %p332 = scmp.eq.s32.totalorder %s34, 0
      %p333 = por %p331, %p332
      %s334 = ssub.s32 %s36, %s43
      %p335 = scmp.eq.s32.totalorder %s334, 0
      %s337 = sadd.s32 %s336, 1
      %s338 = scalar_select %p335, %s336, %s337
      %p341 = pneg %p335
      %p342 = scmp.eq.s32.totalorder %s28, 3
      %p343 = por %p341, %p342
      %p344 = scmp.ne.s32.totalorder %s336, %s339
      %p345 = scmp.eq.s32.totalorder %s28, 0
      %p346 = por %p344, %p345
      %p347 = scmp.ne.s32.totalorder %s336, %s339
      %p348 = scmp.eq.s32.totalorder %s33, 3
      %p349 = por %p347, %p348
      %p350 = scmp.ne.s32.totalorder %s339, %s340
      %p351 = scmp.eq.s32.totalorder %s33, 0
      %p352 = por %p350, %p351
      %p353 = scmp.ne.s32.totalorder %s339, %s340
      %p354 = scmp.eq.s32.totalorder %s34, 3
      %p355 = por %p353, %p354
      %p357 = scmp.ne.s32.totalorder %s340, %s356
      %p358 = scmp.eq.s32.totalorder %s34, 0
      %p359 = por %p357, %p358
      %s360 = ssub.s32 %s36, %s43
      %p361 = scmp.eq.s32.totalorder %s360, 0
      %s363 = sadd.s32 %s362, 1
      %s364 = scalar_select %p361, %s362, %s363
      %p367 = pneg %p361
      %p368 = scmp.eq.s32.totalorder %s28, 3
      %p369 = por %p367, %p368
      %p370 = scmp.ne.s32.totalorder %s362, %s365
      %p371 = scmp.eq.s32.totalorder %s28, 0
      %p372 = por %p370, %p371
      %p373 = scmp.ne.s32.totalorder %s362, %s365
      %p374 = scmp.eq.s32.totalorder %s33, 3
      %p375 = por %p373, %p374
      %p376 = scmp.ne.s32.totalorder %s365, %s366
      %p377 = scmp.eq.s32.totalorder %s33, 0
      %p378 = por %p376, %p377
      %p379 = scmp.ne.s32.totalorder %s365, %s366
      %p380 = scmp.eq.s32.totalorder %s34, 3
      %p381 = por %p379, %p380
      %p383 = scmp.ne.s32.totalorder %s366, %s382
      %p384 = scmp.eq.s32.totalorder %s34, 0
      %p385 = por %p383, %p384
      %s386 = ssub.s32 %s36, %s43
      %p387 = scmp.eq.s32.totalorder %s386, 0
      %s389 = sadd.s32 %s388, 1
      %s390 = scalar_select %p387, %s388, %s389
      %p393 = pneg %p387
      %p394 = scmp.eq.s32.totalorder %s28, 3
      %p395 = por %p393, %p394
      %p396 = scmp.ne.s32.totalorder %s388, %s391
      %p397 = scmp.eq.s32.totalorder %s28, 0
      %p398 = por %p396, %p397
      %p399 = scmp.ne.s32.totalorder %s388, %s391
      %p400 = scmp.eq.s32.totalorder %s33, 3
      %p401 = por %p399, %p400
      %p402 = scmp.ne.s32.totalorder %s391, %s392
      %p403 = scmp.eq.s32.totalorder %s33, 0
      %p404 = por %p402, %p403
      %p405 = scmp.ne.s32.totalorder %s391, %s392
      %p406 = scmp.eq.s32.totalorder %s34, 3
      %p407 = por %p405, %p406
      %p409 = scmp.ne.s32.totalorder %s392, %s408
      %p410 = scmp.eq.s32.totalorder %s34, 0
      %p411 = por %p409, %p410
      %s412 = ssub.s32 %s36, %s43
      %p413 = scmp.eq.s32.totalorder %s412, 0
      %s415 = sadd.s32 %s414, 1
      %s416 = scalar_select %p413, %s414, %s415
      %p419 = pneg %p413
      %p420 = scmp.eq.s32.totalorder %s28, 3
      %p421 = por %p419, %p420
      %p422 = scmp.ne.s32.totalorder %s414, %s417
      %p423 = scmp.eq.s32.totalorder %s28, 0
      %p424 = por %p422, %p423
      %p425 = scmp.ne.s32.totalorder %s414, %s417
      %p426 = scmp.eq.s32.totalorder %s33, 3
      %p427 = por %p425, %p426
      %p428 = scmp.ne.s32.totalorder %s417, %s418
      %p429 = scmp.eq.s32.totalorder %s33, 0
      %p430 = por %p428, %p429
      %p431 = scmp.ne.s32.totalorder %s417, %s418
      %p432 = scmp.eq.s32.totalorder %s34, 3
      %p433 = por %p431, %p432
      %p435 = scmp.ne.s32.totalorder %s418, %s434
      %p436 = scmp.eq.s32.totalorder %s34, 0
      %p437 = por %p435, %p436
      %s438 = ssub.s32 %s36, %s43
      %p439 = scmp.eq.s32.totalorder %s438, 0
      %s441 = sadd.s32 %s440, 1
      %s442 = scalar_select %p439, %s440, %s441
      %p445 = pneg %p439
      %p446 = scmp.eq.s32.totalorder %s28, 3
      %p447 = por %p445, %p446
      %p448 = scmp.ne.s32.totalorder %s440, %s443
      %p449 = scmp.eq.s32.totalorder %s28, 0
      %p450 = por %p448, %p449
      %p451 = scmp.ne.s32.totalorder %s440, %s443
      %p452 = scmp.eq.s32.totalorder %s33, 3
      %p453 = por %p451, %p452
      %p454 = scmp.ne.s32.totalorder %s443, %s444
      %p455 = scmp.eq.s32.totalorder %s33, 0
      %p456 = por %p454, %p455
      %p457 = scmp.ne.s32.totalorder %s443, %s444
      %p458 = scmp.eq.s32.totalorder %s34, 3
      %p459 = por %p457, %p458
      %p461 = scmp.ne.s32.totalorder %s444, %s460
      %p462 = scmp.eq.s32.totalorder %s34, 0
      %p463 = por %p461, %p462
      %s464 = ssub.s32 %s36, %s43
      %p465 = scmp.eq.s32.totalorder %s464, 0
      %s467 = sadd.s32 %s466, 1
      %s468 = scalar_select %p465, %s466, %s467
      %p471 = pneg %p465
      %p472 = scmp.eq.s32.totalorder %s28, 3
      %p473 = por %p471, %p472
      %p474 = scmp.ne.s32.totalorder %s466, %s469
      %p475 = scmp.eq.s32.totalorder %s28, 0
      %p476 = por %p474, %p475
      %p477 = scmp.ne.s32.totalorder %s466, %s469
      %p478 = scmp.eq.s32.totalorder %s33, 3
      %p479 = por %p477, %p478
      %p480 = scmp.ne.s32.totalorder %s469, %s470
      %p481 = scmp.eq.s32.totalorder %s33, 0
      %p482 = por %p480, %p481
      %p483 = scmp.ne.s32.totalorder %s469, %s470
      %p484 = scmp.eq.s32.totalorder %s34, 3
      %p485 = por %p483, %p484
      %p487 = scmp.ne.s32.totalorder %s470, %s486
      %p488 = scmp.eq.s32.totalorder %s34, 0
      %p489 = por %p487, %p488
      %s491 = sadd.s32 %s490, 1
      %p494 = scmp.eq.s32.totalorder %s28, 3
      %p495 = scmp.ne.s32.totalorder %s490, %s492
      %p496 = scmp.eq.s32.totalorder %s28, 0
      %p497 = por %p495, %p496
      %p498 = scmp.ne.s32.totalorder %s490, %s492
      %p499 = scmp.eq.s32.totalorder %s33, 3
      %p500 = por %p498, %p499
      %p501 = scmp.ne.s32.totalorder %s492, %s493
      %p502 = scmp.eq.s32.totalorder %s33, 0
      %p503 = por %p501, %p502
      %p504 = scmp.ne.s32.totalorder %s492, %s493
      %p505 = scmp.eq.s32.totalorder %s34, 3
      %p506 = por %p504, %p505
      %p508 = scmp.ne.s32.totalorder %s493, %s507
      %p509 = scmp.eq.s32.totalorder %s34, 0
      %p510 = por %p508, %p509
      %s512 = sadd.s32 %s511, 1
      %p515 = scmp.eq.s32.totalorder %s28, 3
      %p516 = scmp.ne.s32.totalorder %s511, %s513
      %p517 = scmp.eq.s32.totalorder %s28, 0
      %p518 = por %p516, %p517
      %p519 = scmp.ne.s32.totalorder %s511, %s513
      %p520 = scmp.eq.s32.totalorder %s33, 3
      %p521 = por %p519, %p520
      %p522 = scmp.ne.s32.totalorder %s513, %s514
      %p523 = scmp.eq.s32.totalorder %s33, 0
      %p524 = por %p522, %p523
      %p525 = scmp.ne.s32.totalorder %s513, %s514
      %p526 = scmp.eq.s32.totalorder %s34, 3
      %p527 = por %p525, %p526
      %p529 = scmp.ne.s32.totalorder %s514, %s528
      %p530 = scmp.eq.s32.totalorder %s34, 0
      %p531 = por %p529, %p530
      %s532 = ssub.s32 %s35, %s47
      %p533 = scmp.eq.s32.totalorder %s532, 0
      %s535 = sadd.s32 %s534, 1
      %s536 = scalar_select %p533, %s534, %s535
      %p539 = pneg %p533
      %p540 = scmp.eq.s32.totalorder %s28, 3
      %p541 = por %p539, %p540
      %p542 = scmp.ne.s32.totalorder %s534, %s537
      %p543 = scmp.eq.s32.totalorder %s28, 0
      %p544 = por %p542, %p543
      %p545 = scmp.ne.s32.totalorder %s534, %s537
      %p546 = scmp.eq.s32.totalorder %s33, 3
      %p547 = por %p545, %p546
      %p548 = scmp.ne.s32.totalorder %s537, %s538
      %p549 = scmp.eq.s32.totalorder %s33, 0
      %p550 = por %p548, %p549
      %p551 = scmp.ne.s32.totalorder %s537, %s538
      %p552 = scmp.eq.s32.totalorder %s34, 3
      %p553 = por %p551, %p552
      %p555 = scmp.ne.s32.totalorder %s538, %s554
      %p556 = scmp.eq.s32.totalorder %s34, 0
      %p557 = por %p555, %p556
      %p558 = scmp.le.s32.totalorder 1, %s28
      %p559 = scmp.lt.s32.totalorder %s28, 5
      %p560 = pnand %p558, %p559
      %p561 = pneg %p560
      // Predicated region
      $region9: #{model_forward.1} parent=5 // pred_check
        _
      $region10: #{model_forward.1} parent=5 // pred_check_branch
        %563 = sbr.rel (%p560) target = $region12
      $region11: #{model_forward.1} parent=5 // pred_region
        %s564 = ssub.s32 %s28, 1
        // Predicated region
        $region13: #{model_forward.1} parent=11 // pred_check
          %p565 = pneg %p503
        $region14: #{model_forward.1} parent=11 // pred_check_branch
          %567 = sbr.rel (%p565) target = $region16
        $region15: #{model_forward.1} parent=11 // pred_region
          _
        $region16: #{model_forward.1} parent=11 // pred_fallthru
          _
        // Predicated region
        $region17: #{model_forward.1} parent=11 // pred_check
          %p568 = pneg %p524
        $region18: #{model_forward.1} parent=11 // pred_check_branch
          %570 = sbr.rel (%p568) target = $region20
        $region19: #{model_forward.1} parent=11 // pred_region
          _
        $region20: #{model_forward.1} parent=11 // pred_fallthru
          _
      $region12: #{model_forward.1} parent=5 // pred_fallthru
        _
      %p571 = scmp.lt.s32.totalorder %s28, 4
      // Predicated region
      $region21: #{model_forward.1} parent=5 // pred_check
        %p572 = pneg %p571
      $region22: #{model_forward.1} parent=5 // pred_check_branch
        %574 = sbr.rel (%p572) target = $region24
      $region23: #{model_forward.1} parent=5 // pred_region
        // Predicated region
        $region25: #{model_forward.1} parent=23 // pred_check
          %p575 = pneg %p60
        $region26: #{model_forward.1} parent=23 // pred_check_branch
          %577 = sbr.rel (%p575) target = $region28
        $region27: #{model_forward.1} parent=23 // pred_region
          %p578 = scmp.lt.s32.totalorder %s35, 1
          %s579 = scalar_select %p578, %s35, 1
          %s580 = smul.addr %s579, 8
          %s581 = scalar_lea.vmem %s0, %s580
        $region28: #{model_forward.1} parent=23 // pred_fallthru
          _
        // Predicated region
        $region29: #{model_forward.1} parent=23 // pred_check
          %p582 = pneg %p86
        $region30: #{model_forward.1} parent=23 // pred_check_branch
          %584 = sbr.rel (%p582) target = $region32
        $region31: #{model_forward.1} parent=23 // pred_region
          %p585 = scmp.lt.s32.totalorder %s36, 1
          %s586 = scalar_select %p585, %s36, 1
          %s587 = smul.addr %s586, 16
          %s588 = smul.addr %s587, 4
          %s589 = scalar_lea.vmem %s1, %s588
        $region32: #{model_forward.1} parent=23 // pred_fallthru
          _
        // Predicated region
        $region33: #{model_forward.1} parent=23 // pred_check
          %p590 = pneg %p112
        $region34: #{model_forward.1} parent=23 // pred_check_branch
          %592 = sbr.rel (%p590) target = $region36
        $region35: #{model_forward.1} parent=23 // pred_region
          %p593 = scmp.lt.s32.totalorder %s36, 1
          %s594 = scalar_select %p593, %s36, 1
          %s595 = smul.addr %s594, 16
          %s596 = smul.addr %s595, 4
          %s597 = scalar_lea.vmem %s2, %s596
        $region36: #{model_forward.1} parent=23 // pred_fallthru
          _
        // Predicated region
        $region37: #{model_forward.1} parent=23 // pred_check
          %p598 = pneg %p138
        $region38: #{model_forward.1} parent=23 // pred_check_branch
          %600 = sbr.rel (%p598) target = $region40
        $region39: #{model_forward.1} parent=23 // pred_region
          %p601 = scmp.lt.s32.totalorder %s36, 1
          %s602 = scalar_select %p601, %s36, 1
          %s603 = smul.addr %s602, 16
          %s604 = smul.addr %s603, 4
          %s605 = scalar_lea.vmem %s3, %s604
        $region40: #{model_forward.1} parent=23 // pred_fallthru
          _
        // Predicated region
        $region41: #{model_forward.1} parent=23 // pred_check
          %p606 = pneg %p164
        $region42: #{model_forward.1} parent=23 // pred_check_branch
          %608 = sbr.rel (%p606) target = $region44
        $region43: #{model_forward.1} parent=23 // pred_region
          %p609 = scmp.lt.s32.totalorder %s36, 1
          %s610 = scalar_select %p609, %s36, 1
          %s611 = smul.addr %s610, 4
          %s612 = scalar_lea.vmem %s4, %s611
        $region44: #{model_forward.1} parent=23 // pred_fallthru
          _
        // Predicated region
        $region45: #{model_forward.1} parent=23 // pred_check
          %p613 = pneg %p190
        $region46: #{model_forward.1} parent=23 // pred_check_branch
          %615 = sbr.rel (%p613) target = $region48
        $region47: #{model_forward.1} parent=23 // pred_region
          %p616 = scmp.lt.s32.totalorder %s36, 1
          %s617 = scalar_select %p616, %s36, 1
          %s618 = smul.addr %s617, 4
          %s619 = scalar_lea.vmem %s5, %s618
        $region48: #{model_forward.1} parent=23 // pred_fallthru
          _
        // Predicated region
        $region49: #{model_forward.1} parent=23 // pred_check
          %p620 = pneg %p216
        $region50: #{model_forward.1} parent=23 // pred_check_branch
          %622 = sbr.rel (%p620) target = $region52
        $region51: #{model_forward.1} parent=23 // pred_region
          %p623 = scmp.lt.s32.totalorder %s36, 1
          %s624 = scalar_select %p623, %s36, 1
          %s625 = smul.addr %s624, 4
          %s626 = scalar_lea.vmem %s6, %s625
        $region52: #{model_forward.1} parent=23 // pred_fallthru
          _
        // Predicated region
        $region53: #{model_forward.1} parent=23 // pred_check
          %p627 = pneg %p242
        $region54: #{model_forward.1} parent=23 // pred_check_branch
          %629 = sbr.rel (%p627) target = $region56
        $region55: #{model_forward.1} parent=23 // pred_region
          %p630 = scmp.lt.s32.totalorder %s36, 1
          %s631 = scalar_select %p630, %s36, 1
          %s632 = smul.addr %s631, 4
          %s633 = smul.addr %s632, 4
          %s634 = scalar_lea.vmem %s7, %s633
        $region56: #{model_forward.1} parent=23 // pred_fallthru
          _
        // Predicated region
        $region57: #{model_forward.1} parent=23 // pred_check
          %p635 = pneg %p268
        $region58: #{model_forward.1} parent=23 // pred_check_branch
          %637 = sbr.rel (%p635) target = $region60
        $region59: #{model_forward.1} parent=23 // pred_region
          %p638 = scmp.lt.s32.totalorder %s36, 1
          %s639 = scalar_select %p638, %s36, 1
          %s640 = scalar_lea.vmem %s8, %s639
        $region60: #{model_forward.1} parent=23 // pred_fallthru
          _
        // Predicated region
        $region61: #{model_forward.1} parent=23 // pred_check
          %p641 = pneg %p294
        $region62: #{model_forward.1} parent=23 // pred_check_branch
          %643 = sbr.rel (%p641) target = $region64
        $region63: #{model_forward.1} parent=23 // pred_region
          %p644 = scmp.lt.s32.totalorder %s36, 1
          %s645 = scalar_select %p644, %s36, 1
          %s646 = scalar_lea.vmem %s9, %s645
        $region64: #{model_forward.1} parent=23 // pred_fallthru
          _
        // Predicated region
        $region65: #{model_forward.1} parent=23 // pred_check
          %p647 = pneg %p320
        $region66: #{model_forward.1} parent=23 // pred_check_branch
          %649 = sbr.rel (%p647) target = $region68
        $region67: #{model_forward.1} parent=23 // pred_region
          %p650 = scmp.lt.s32.totalorder %s36, 1
          %s651 = scalar_select %p650, %s36, 1
          %s652 = scalar_lea.vmem %s10, %s651
        $region68: #{model_forward.1} parent=23 // pred_fallthru
          _
        // Predicated region
        $region69: #{model_forward.1} parent=23 // pred_check
          %p653 = pneg %p346
        $region70: #{model_forward.1} parent=23 // pred_check_branch
          %655 = sbr.rel (%p653) target = $region72
        $region71: #{model_forward.1} parent=23 // pred_region
          %p656 = scmp.lt.s32.totalorder %s36, 1
          %s657 = scalar_select %p656, %s36, 1
          %s658 = smul.addr %s657, 4
          %s659 = smul.addr %s658, 4
          %s660 = scalar_lea.vmem %s11, %s659
        $region72: #{model_forward.1} parent=23 // pred_fallthru
          _
        // Predicated region
        $region73: #{model_forward.1} parent=23 // pred_check
          %p661 = pneg %p372
        $region74: #{model_forward.1} parent=23 // pred_check_branch
          %663 = sbr.rel (%p661) target = $region76
        $region75: #{model_forward.1} parent=23 // pred_region
          %p664 = scmp.lt.s32.totalorder %s36, 1
          %s665 = scalar_select %p664, %s36, 1
          %s666 = scalar_lea.vmem %s12, %s665
        $region76: #{model_forward.1} parent=23 // pred_fallthru
          _
        // Predicated region
        $region77: #{model_forward.1} parent=23 // pred_check
          %p667 = pneg %p398
        $region78: #{model_forward.1} parent=23 // pred_check_branch
          %669 = sbr.rel (%p667) target = $region80
        $region79: #{model_forward.1} parent=23 // pred_region
          %p670 = scmp.lt.s32.totalorder %s36, 1
          %s671 = scalar_select %p670, %s36, 1
          %s672 = smul.addr %s671, 8
          %s673 = smul.addr %s672, 4
          %s674 = scalar_lea.vmem %s13, %s673
        $region80: #{model_forward.1} parent=23 // pred_fallthru
          _
        // Predicated region
        $region81: #{model_forward.1} parent=23 // pred_check
          %p675 = pneg %p424
        $region82: #{model_forward.1} parent=23 // pred_check_branch
          %677 = sbr.rel (%p675) target = $region84
        $region83: #{model_forward.1} parent=23 // pred_region
          %p678 = scmp.lt.s32.totalorder %s36, 1
          %s679 = scalar_select %p678, %s36, 1
          %s680 = scalar_lea.vmem %s14, %s679
        $region84: #{model_forward.1} parent=23 // pred_fallthru
          _
        // Predicated region
        $region85: #{model_forward.1} parent=23 // pred_check
          %p681 = pneg %p450
        $region86: #{model_forward.1} parent=23 // pred_check_branch
          %683 = sbr.rel (%p681) target = $region88
        $region87: #{model_forward.1} parent=23 // pred_region
          %p684 = scmp.lt.s32.totalorder %s36, 1
          %s685 = scalar_select %p684, %s36, 1
          %s686 = scalar_lea.vmem %s15, %s685
        $region88: #{model_forward.1} parent=23 // pred_fallthru
          _
        // Predicated region
        $region89: #{model_forward.1} parent=23 // pred_check
          %p687 = pneg %p476
        $region90: #{model_forward.1} parent=23 // pred_check_branch
          %689 = sbr.rel (%p687) target = $region92
        $region91: #{model_forward.1} parent=23 // pred_region
          %p690 = scmp.lt.s32.totalorder %s36, 1
          %s691 = scalar_select %p690, %s36, 1
          %s692 = scalar_lea.vmem %s16, %s691
        $region92: #{model_forward.1} parent=23 // pred_fallthru
          _
      $region24: #{model_forward.1} parent=5 // pred_fallthru
        _
      %p693 = scmp.le.s32.totalorder 1, %s28
      %p694 = scmp.lt.s32.totalorder %s28, 5
      %p695 = pnand %p693, %p694
      %p696 = pneg %p695
      // Predicated region
      $region93: #{model_forward.1} parent=5 // pred_check
        _
      $region94: #{model_forward.1} parent=5 // pred_check_branch
        %698 = sbr.rel (%p695) target = $region96
      $region95: #{model_forward.1} parent=5 // pred_region
        %s699 = ssub.s32 %s28, 1
        %p700 = scmp.lt.s32.totalorder %s37, 1
        %s701 = scalar_select %p700, %s37, 1
        %s702 = smul.addr %s701, 8
        %s703 = scalar_lea.vmem %s0, %s702
        %p704 = pneg %p66
        %p705 = pneg %p63
        %p706 = scmp.lt.s32.totalorder %s38, 1
        %s707 = scalar_select %p706, %s38, 1
        %s708 = smul.addr %s707, 16
        %s709 = smul.addr %s708, 4
        %s710 = scalar_lea.vmem %s1, %s709
        %p711 = pneg %p92
        %p712 = pneg %p89
        %p713 = scmp.lt.s32.totalorder %s38, 1
        %s714 = scalar_select %p713, %s38, 1
        %s715 = smul.addr %s714, 16
        %s716 = smul.addr %s715, 4
        %s717 = scalar_lea.vmem %s2, %s716
        %p718 = pneg %p118
        %p719 = pneg %p115
        %p720 = scmp.lt.s32.totalorder %s38, 1
        %s721 = scalar_select %p720, %s38, 1
        %s722 = smul.addr %s721, 16
        %s723 = smul.addr %s722, 4
        %s724 = scalar_lea.vmem %s3, %s723
        %p725 = pneg %p144
        %p726 = pneg %p141
        %p727 = scmp.lt.s32.totalorder %s38, 1
        %s728 = scalar_select %p727, %s38, 1
        %s729 = smul.addr %s728, 4
        %s730 = scalar_lea.vmem %s4, %s729
        %p731 = pneg %p170
        %p732 = pneg %p167
        %p733 = scmp.lt.s32.totalorder %s38, 1
        %s734 = scalar_select %p733, %s38, 1
        %s735 = smul.addr %s734, 4
        %s736 = scalar_lea.vmem %s5, %s735
        %p737 = pneg %p196
        %p738 = pneg %p193
        %p739 = scmp.lt.s32.totalorder %s38, 1
        %s740 = scalar_select %p739, %s38, 1
        %s741 = smul.addr %s740, 4
        %s742 = scalar_lea.vmem %s6, %s741
        %p743 = pneg %p222
        %p744 = pneg %p219
        %p745 = scmp.lt.s32.totalorder %s38, 1
        %s746 = scalar_select %p745, %s38, 1
        %s747 = smul.addr %s746, 4
        %s748 = smul.addr %s747, 4
        %s749 = scalar_lea.vmem %s7, %s748
        %p750 = pneg %p248
        %p751 = pneg %p245
        %p752 = scmp.lt.s32.totalorder %s38, 1
        %s753 = scalar_select %p752, %s38, 1
        %s754 = scalar_lea.vmem %s8, %s753
        %p755 = pneg %p274
        %p756 = pneg %p271
        %p757 = scmp.lt.s32.totalorder %s38, 1
        %s758 = scalar_select %p757, %s38, 1
        %s759 = scalar_lea.vmem %s9, %s758
        %p760 = pneg %p300
        %p761 = pneg %p297
        %p762 = scmp.lt.s32.totalorder %s38, 1
        %s763 = scalar_select %p762, %s38, 1
        %s764 = scalar_lea.vmem %s10, %s763
        %p765 = pneg %p326
        %p766 = pneg %p323
        %p767 = scmp.lt.s32.totalorder %s38, 1
        %s768 = scalar_select %p767, %s38, 1
        %s769 = smul.addr %s768, 4
        %s770 = smul.addr %s769, 4
        %s771 = scalar_lea.vmem %s11, %s770
        %p772 = pneg %p352
        %p773 = pneg %p349
        %p774 = scmp.lt.s32.totalorder %s38, 1
        %s775 = scalar_select %p774, %s38, 1
        %s776 = scalar_lea.vmem %s12, %s775
        %p777 = pneg %p378
        %p778 = pneg %p375
        %p779 = scmp.lt.s32.totalorder %s38, 1
        %s780 = scalar_select %p779, %s38, 1
        %s781 = smul.addr %s780, 8
        %s782 = smul.addr %s781, 4
        %s783 = scalar_lea.vmem %s13, %s782
        %p784 = pneg %p404
        %p785 = pneg %p401
        %p786 = scmp.lt.s32.totalorder %s38, 1
        %s787 = scalar_select %p786, %s38, 1
        %s788 = scalar_lea.vmem %s14, %s787
        %p789 = pneg %p430
        %p790 = pneg %p427
        %p791 = scmp.lt.s32.totalorder %s38, 1
        %s792 = scalar_select %p791, %s38, 1
        %s793 = scalar_lea.vmem %s15, %s792
        %p794 = pneg %p456
        %p795 = pneg %p453
        %p796 = scmp.lt.s32.totalorder %s38, 1
        %s797 = scalar_select %p796, %s38, 1
        %s798 = scalar_lea.vmem %s16, %s797
        %p799 = pneg %p482
        %p800 = pneg %p479
        %p801 = pneg %p503
        %p802 = pneg %p500
        %p803 = pneg %p524
        %p804 = pneg %p521
        %p805 = pneg %p550
        %p806 = pneg %p547
        %s807 = sand.u32 %s537, 1
        %s808 = scalar_lea.sflag [#allocation4], %s807
        %s809 = sand.u32 %s537, 1
        %s810 = scalar_lea.vmem [#allocation3], %s809
        %p811 = scmp.lt.s32.totalorder %s37, 1
        %s812 = scalar_select %p811, %s37, 1
        %s813 = smul.addr %s812, 8
        %s814 = scalar_lea.vmem %s0, %s813
        %p815 = scmp.lt.s32.totalorder %s38, 1
        %s816 = scalar_select %p815, %s38, 1
        %s817 = smul.addr %s816, 16
        %s818 = smul.addr %s817, 4
        %s819 = scalar_lea.vmem %s1, %s818
        %p820 = scmp.lt.s32.totalorder %s38, 1
        %s821 = scalar_select %p820, %s38, 1
        %s822 = smul.addr %s821, 16
        %s823 = smul.addr %s822, 4
        %s824 = scalar_lea.vmem %s2, %s823
        %p825 = scmp.lt.s32.totalorder %s38, 1
        %s826 = scalar_select %p825, %s38, 1
        %s827 = smul.addr %s826, 16
        %s828 = smul.addr %s827, 4
        %s829 = scalar_lea.vmem %s3, %s828
        %p830 = scmp.lt.s32.totalorder %s38, 1
        %s831 = scalar_select %p830, %s38, 1
        %s832 = smul.addr %s831, 4
        %s833 = scalar_lea.vmem %s4, %s832
        %p834 = scmp.lt.s32.totalorder %s38, 1
        %s835 = scalar_select %p834, %s38, 1
        %s836 = smul.addr %s835, 4
        %s837 = scalar_lea.vmem %s5, %s836
        %p838 = scmp.lt.s32.totalorder %s38, 1
        %s839 = scalar_select %p838, %s38, 1
        %s840 = smul.addr %s839, 4
        %s841 = scalar_lea.vmem %s6, %s840
        %p842 = scmp.lt.s32.totalorder %s38, 1
        %s843 = scalar_select %p842, %s38, 1
        %s844 = smul.addr %s843, 4
        %s845 = smul.addr %s844, 4
        %s846 = scalar_lea.vmem %s7, %s845
        %p847 = scmp.lt.s32.totalorder %s38, 1
        %s848 = scalar_select %p847, %s38, 1
        %s849 = scalar_lea.vmem %s8, %s848
        %p850 = scmp.lt.s32.totalorder %s38, 1
        %s851 = scalar_select %p850, %s38, 1
        %s852 = scalar_lea.vmem %s9, %s851
        %p853 = scmp.lt.s32.totalorder %s38, 1
        %s854 = scalar_select %p853, %s38, 1
        %s855 = scalar_lea.vmem %s10, %s854
        %p856 = scmp.lt.s32.totalorder %s38, 1
        %s857 = scalar_select %p856, %s38, 1
        %s858 = smul.addr %s857, 4
        %s859 = smul.addr %s858, 4
        %s860 = scalar_lea.vmem %s11, %s859
        %p861 = scmp.lt.s32.totalorder %s38, 1
        %s862 = scalar_select %p861, %s38, 1
        %s863 = scalar_lea.vmem %s12, %s862
        %p864 = scmp.lt.s32.totalorder %s38, 1
        %s865 = scalar_select %p864, %s38, 1
        %s866 = smul.addr %s865, 8
        %s867 = smul.addr %s866, 4
        %s868 = scalar_lea.vmem %s13, %s867
        %p869 = scmp.lt.s32.totalorder %s38, 1
        %s870 = scalar_select %p869, %s38, 1
        %s871 = scalar_lea.vmem %s14, %s870
        %p872 = scmp.lt.s32.totalorder %s38, 1
        %s873 = scalar_select %p872, %s38, 1
        %s874 = scalar_lea.vmem %s15, %s873
        %p875 = scmp.lt.s32.totalorder %s38, 1
        %s876 = scalar_select %p875, %s38, 1
        %s877 = scalar_lea.vmem %s16, %s876
        %p879 = scmp.eq.s32.totalorder %s38, 0
        // Predicated region
        $region97: #{model_forward.1} parent=95 // pred_check
          %p880 = pneg %p879
        $region98: #{model_forward.1} parent=95 // pred_check_branch
          %882 = sbr.rel (%p880) target = $region100
        $region99: #{model_forward.1} parent=95 // pred_region
          %v883 = vld [vmem:[%s814] sm:$0xff]
          %vm884 = vcmask 261120
          %885 = vst.msk [vmem:[#allocation2] sm:$0xff] %vm884, %v883
        $region100: #{model_forward.1} parent=95 // pred_fallthru
          _
        %v886 = vld [vmem:[#allocation2] sm:$0xff]
        %v887 = vpack.c.bf16 %v886, %v886
        %v888 = vld [vmem:[%s819] sm:$0xf]
        %v889 = vld [vmem:[%s819 + $0x4] sm:$0xf]
        %v890 = vld [vmem:[%s819 + $0x8] sm:$0xf]
        %v891 = vld [vmem:[%s819 + $0xc] sm:$0xf]
        %v892 = vld [vmem:[%s833] sm:$0x1]
        %v894 = vlaneseq
        %v895 = vshrl.u32 %v894, 7
        %v896 = vsub.s32 0, %v895
        %v897 = vrot.slane %v892, %v896
        %v903 = vunpack.c.l.b16 %v888
        %v904 = vunpack.c.l.b16 %v889
        %v905 = vunpack.c.l.b16 %v890
        %v906 = vunpack.c.l.b16 %v891
        %v907 = vpack.c.b16 %v904, %v903
        %v908 = vpack.c.b16 %v906, %v905
        %vm911 = vcmask 261120
        %v913 = vsel %vm911, %v887, 0
        %915 = vmatprep.subr.bf16.mxu0 0
        %916 = vmatpush1.bf16.msra.mxu0 0
        %917 = vmatprep.subr.bf16.mxu0 0
        %918 = vmatpush1.bf16.msra.mxu0 0
        %919 = vmatprep.subr.bf16.mxu0 0
        %920 = vmatpush1.bf16.msra.mxu0 0
        %921 = vmatprep.subr.bf16.mxu0 0
        %922 = vmatpush1.bf16.msra.mxu0 0
        %923 = vmatprep.subr.bf16.mxu0 0
        %924 = vmatpush1.bf16.msra.mxu0 0
        %925 = vmatprep.subr.bf16.mxu0 0
        %926 = vmatpush1.bf16.msra.mxu0 0
        %927 = vmatprep.subr.bf16.mxu0 0
        %928 = vmatpush1.bf16.msra.mxu0 %v908
        %929 = vmatprep.subr.bf16.mxu0 0
        %930 = vmatpush1.bf16.msra.mxu0 %v907
        %931 = vmatprep.subr.bf16.mxu0 0
        %932 = vmatpush2.bf16.msra.mxu0 0
        %933 = vmatprep.subr.bf16.mxu0 0
        %934 = vmatpush2.bf16.msra.mxu0 0
        %935 = vmatprep.subr.bf16.mxu0 0
        %936 = vmatpush2.bf16.msra.mxu0 0
        %937 = vmatprep.subr.bf16.mxu0 0
        %938 = vmatpush2.bf16.msra.mxu0 0
        %939 = vmatprep.subr.bf16.mxu0 0
        %940 = vmatpush2.bf16.msra.mxu0 0
        %941 = vmatprep.subr.bf16.mxu0 0
        %942 = vmatpush2.bf16.msra.mxu0 0
        %943 = vmatprep.subr.bf16.mxu0 0
        %944 = vmatpush2.bf16.msra.mxu0 0
        %945 = vmatprep.subr.bf16.mxu0 0
        %946 = vmatpush2.bf16.msra.mxu0 0
        %947 = vmatprep.mubr.bf16.mxu0 0
        %948 = vmatmul.mubr.bf16.gmra.mxu0 %v913
        %v949 = vpop.f32.mrf.mxu0
        %v950 = vadd.f32 %v897, %v949
        %v951 = vpop.f32.mrf.mxu0
        %v952 = vpop.f32.mrf.mxu0
        %v953 = vpop.f32.mrf.mxu0
        %954 = vdwg.mxu0
        %v955 = vld [vmem:[%s824] sm:$0xf]
        %v956 = vld [vmem:[%s824 + $0x4] sm:$0xf]
        %v957 = vld [vmem:[%s824 + $0x8] sm:$0xf]
        %v958 = vld [vmem:[%s824 + $0xc] sm:$0xf]
        %v959 = vld [vmem:[%s837] sm:$0x1]
        %v961 = vlaneseq
        %v962 = vshrl.u32 %v961, 7
        %v963 = vsub.s32 0, %v962
        %v964 = vrot.slane %v959, %v963
        %v970 = vunpack.c.l.b16 %v955
        %v971 = vunpack.c.l.b16 %v956
        %v972 = vunpack.c.l.b16 %v957
        %v973 = vunpack.c.l.b16 %v958
        %v974 = vpack.c.b16 %v971, %v970
        %v975 = vpack.c.b16 %v973, %v972
        %978 = vmatprep.subr.bf16.mxu0 0
        %979 = vmatpush1.bf16.msra.mxu0 0
        %980 = vmatprep.subr.bf16.mxu0 0
        %981 = vmatpush1.bf16.msra.mxu0 0
        %982 = vmatprep.subr.bf16.mxu0 0
        %983 = vmatpush1.bf16.msra.mxu0 0
        %984 = vmatprep.subr.bf16.mxu0 0
        %985 = vmatpush1.bf16.msra.mxu0 0
        %986 = vmatprep.subr.bf16.mxu0 0
        %987 = vmatpush1.bf16.msra.mxu0 0
        %988 = vmatprep.subr.bf16.mxu0 0
        %989 = vmatpush1.bf16.msra.mxu0 0
        %990 = vmatprep.subr.bf16.mxu0 0
        %991 = vmatpush1.bf16.msra.mxu0 %v975
        %992 = vmatprep.subr.bf16.mxu0 0
        %993 = vmatpush1.bf16.msra.mxu0 %v974
        %994 = vmatprep.subr.bf16.mxu0 0
        %995 = vmatpush2.bf16.msra.mxu0 0
        %996 = vmatprep.subr.bf16.mxu0 0
        %997 = vmatpush2.bf16.msra.mxu0 0
        %998 = vmatprep.subr.bf16.mxu0 0
        %999 = vmatpush2.bf16.msra.mxu0 0
        %1000 = vmatprep.subr.bf16.mxu0 0
        %1001 = vmatpush2.bf16.msra.mxu0 0
        %1002 = vmatprep.subr.bf16.mxu0 0
        %1003 = vmatpush2.bf16.msra.mxu0 0
        %1004 = vmatprep.subr.bf16.mxu0 0
        %1005 = vmatpush2.bf16.msra.mxu0 0
        %1006 = vmatprep.subr.bf16.mxu0 0
        %1007 = vmatpush2.bf16.msra.mxu0 0
        %1008 = vmatprep.subr.bf16.mxu0 0
        %1009 = vmatpush2.bf16.msra.mxu0 0
        %1010 = vmatprep.mubr.bf16.mxu0 0
        %1011 = vmatmul.mubr.bf16.gmra.mxu0 %v913
        %v1012 = vpop.f32.mrf.mxu0
        %v1013 = vadd.f32 %v964, %v1012
        %v1014 = vpop.f32.mrf.mxu0
        %v1015 = vpop.f32.mrf.mxu0
        %v1016 = vpop.f32.mrf.mxu0
        %1017 = vdwg.mxu0
        %v1018 = vld [vmem:[%s829] sm:$0xf]
        %v1019 = vld [vmem:[%s829 + $0x4] sm:$0xf]
        %v1020 = vld [vmem:[%s829 + $0x8] sm:$0xf]
        %v1021 = vld [vmem:[%s829 + $0xc] sm:$0xf]
        %v1022 = vld [vmem:[%s841] sm:$0x1]
        %v1024 = vlaneseq
        %v1025 = vshrl.u32 %v1024, 7
        %v1026 = vsub.s32 0, %v1025
        %v1027 = vrot.slane %v1022, %v1026
        %v1033 = vunpack.c.l.b16 %v1018
        %v1034 = vunpack.c.l.b16 %v1019
        %v1035 = vunpack.c.l.b16 %v1020
        %v1036 = vunpack.c.l.b16 %v1021
        %v1037 = vpack.c.b16 %v1034, %v1033
        %v1038 = vpack.c.b16 %v1036, %v1035
        %1041 = vmatprep.subr.bf16.mxu0 0
        %1042 = vmatpush1.bf16.msra.mxu0 0
        %1043 = vmatprep.subr.bf16.mxu0 0
        %1044 = vmatpush1.bf16.msra.mxu0 0
        %1045 = vmatprep.subr.bf16.mxu0 0
        %1046 = vmatpush1.bf16.msra.mxu0 0
        %1047 = vmatprep.subr.bf16.mxu0 0
        %1048 = vmatpush1.bf16.msra.mxu0 0
        %1049 = vmatprep.subr.bf16.mxu0 0
        %1050 = vmatpush1.bf16.msra.mxu0 0
        %1051 = vmatprep.subr.bf16.mxu0 0
        %1052 = vmatpush1.bf16.msra.mxu0 0
        %1053 = vmatprep.subr.bf16.mxu0 0
        %1054 = vmatpush1.bf16.msra.mxu0 %v1038
        %1055 = vmatprep.subr.bf16.mxu0 0
        %1056 = vmatpush1.bf16.msra.mxu0 %v1037
        %1057 = vmatprep.subr.bf16.mxu0 0
        %1058 = vmatpush2.bf16.msra.mxu0 0
        %1059 = vmatprep.subr.bf16.mxu0 0
        %1060 = vmatpush2.bf16.msra.mxu0 0
        %1061 = vmatprep.subr.bf16.mxu0 0
        %1062 = vmatpush2.bf16.msra.mxu0 0
        %1063 = vmatprep.subr.bf16.mxu0 0
        %1064 = vmatpush2.bf16.msra.mxu0 0
        %1065 = vmatprep.subr.bf16.mxu0 0
        %1066 = vmatpush2.bf16.msra.mxu0 0
        %1067 = vmatprep.subr.bf16.mxu0 0
        %1068 = vmatpush2.bf16.msra.mxu0 0
        %1069 = vmatprep.subr.bf16.mxu0 0
        %1070 = vmatpush2.bf16.msra.mxu0 0
        %1071 = vmatprep.subr.bf16.mxu0 0
        %1072 = vmatpush2.bf16.msra.mxu0 0
        %1073 = vmatprep.mubr.bf16.mxu0 0
        %1074 = vmatmul.mubr.bf16.gmra.mxu0 %v913
        %v1075 = vpop.f32.mrf.mxu0
        %v1076 = vadd.f32 %v1027, %v1075
        %v1077 = vpop.f32.mrf.mxu0
        %v1078 = vpop.f32.mrf.mxu0
        %v1079 = vpop.f32.mrf.mxu0
        %1080 = vdwg.mxu0
        %v1081 = vpack.c.bf16 %v950, %v950
        %v1082 = vpack.c.bf16 %v1013, %v1013
        %vm1083 = vcmask 64512
        %v1085 = vsel %vm1083, %v1081, 0
        %v1088 = vsel %vm1083, %v1082, 0
        %1090 = vmatprep.subr.bf16.mxu0 0
        %1091 = vmatpush1.bf16.xpose.msra.mxu0 0
        %1092 = vmatprep.subr.bf16.mxu0 0
        %1093 = vmatpush1.bf16.xpose.msra.mxu0 0
        %1094 = vmatprep.subr.bf16.mxu0 0
        %1095 = vmatpush1.bf16.xpose.msra.mxu0 0
        %1096 = vmatprep.subr.bf16.mxu0 0
        %1097 = vmatpush1.bf16.xpose.msra.mxu0 0
        %1098 = vmatprep.subr.bf16.mxu0 0
        %1099 = vmatpush1.bf16.xpose.msra.mxu0 0
        %1100 = vmatprep.subr.bf16.mxu0 0
        %1101 = vmatpush1.bf16.xpose.msra.mxu0 0
        %1102 = vmatprep.subr.bf16.mxu0 0
        %1103 = vmatpush1.bf16.xpose.msra.mxu0 0
        %1104 = vmatprep.subr.bf16.mxu0 0
        %1105 = vmatpush1.bf16.xpose.msra.mxu0 %v1088
        %1106 = vmatprep.subr.bf16.mxu0 0
        %1107 = vmatpush2.bf16.xpose.msra.mxu0 0
        %1108 = vmatprep.subr.bf16.mxu0 0
        %1109 = vmatpush2.bf16.xpose.msra.mxu0 0
        %1110 = vmatprep.subr.bf16.mxu0 0
        %1111 = vmatpush2.bf16.xpose.msra.mxu0 0
        %1112 = vmatprep.subr.bf16.mxu0 0
        %1113 = vmatpush2.bf16.xpose.msra.mxu0 0
        %1114 = vmatprep.subr.bf16.mxu0 0
        %1115 = vmatpush2.bf16.xpose.msra.mxu0 0
        %1116 = vmatprep.subr.bf16.mxu0 0
        %1117 = vmatpush2.bf16.xpose.msra.mxu0 0
        %1118 = vmatprep.subr.bf16.mxu0 0
        %1119 = vmatpush2.bf16.xpose.msra.mxu0 0
        %1120 = vmatprep.subr.bf16.mxu0 0
        %1121 = vmatpush2.bf16.xpose.msra.mxu0 0
        %1122 = vmatprep.mubr.bf16.mxu0 0
        %1123 = vmatmul.mubr.bf16.gmra.mxu0 %v1085
        %v1124 = vpop.f32.mrf.mxu0
        %v1125 = vadd.f32 0.0, %v1124
        %v1126 = vpop.f32.mrf.mxu0
        %v1127 = vpop.f32.mrf.mxu0
        %v1128 = vpop.f32.mrf.mxu0
        %1129 = vdwg.mxu0
        %v1130 = vmul.f32 %v1125, 0.35355338
        %v1131 = vsel %vm1083, %v1130, -inf
        %1132 = vmax.xlane.f32.xlu0 %v1131
        %v1133 = vpop.xlane.xlu0 %1132
        %v1134 = vsub.f32 %v1130, %v1133
        %v1135 = vmul.f32 %v1134, 1.442695
        %v1136 = vpow.pop %v1135
        %v1137 = vsel %vm1083, %v1136, 0.0
        %1138 = vadd.xlane.f32.xlu0 %v1137
        %v1139 = vpop.xlane.xlu0 %1138
        %v1140 = vrcp.pop %v1139
        %v1141 = vmul.f32 %v1136, %v1140
        %v1142 = vpack.c.bf16 %v1141, %v1141
        %v1143 = vpack.c.bf16 %v1076, %v1076
        %v1145 = vsel %vm1083, %v1142, 0
        %vm1147 = vcmask 1043456
        %v1149 = vsel %vm1147, %v1143, 0
        %1151 = vmatprep.subr.bf16.mxu0 0
        %1152 = vmatpush1.bf16.msra.mxu0 0
        %1153 = vmatprep.subr.bf16.mxu0 0
        %1154 = vmatpush1.bf16.msra.mxu0 0
        %1155 = vmatprep.subr.bf16.mxu0 0
        %1156 = vmatpush1.bf16.msra.mxu0 0
        %1157 = vmatprep.subr.bf16.mxu0 0
        %1158 = vmatpush1.bf16.msra.mxu0 0
        %1159 = vmatprep.subr.bf16.mxu0 0
        %1160 = vmatpush1.bf16.msra.mxu0 0
        %1161 = vmatprep.subr.bf16.mxu0 0
        %1162 = vmatpush1.bf16.msra.mxu0 0
        %1163 = vmatprep.subr.bf16.mxu0 0
        %1164 = vmatpush1.bf16.msra.mxu0 0
        %1165 = vmatprep.subr.bf16.mxu0 0
        %1166 = vmatpush1.bf16.msra.mxu0 %v1149
        %1167 = vmatprep.subr.bf16.mxu0 0
        %1168 = vmatpush2.bf16.msra.mxu0 0
        %1169 = vmatprep.subr.bf16.mxu0 0
        %1170 = vmatpush2.bf16.msra.mxu0 0
        %1171 = vmatprep.subr.bf16.mxu0 0
        %1172 = vmatpush2.bf16.msra.mxu0 0
        %1173 = vmatprep.subr.bf16.mxu0 0
        %1174 = vmatpush2.bf16.msra.mxu0 0
        %1175 = vmatprep.subr.bf16.mxu0 0
        %1176 = vmatpush2.bf16.msra.mxu0 0
        %1177 = vmatprep.subr.bf16.mxu0 0
        %1178 = vmatpush2.bf16.msra.mxu0 0
        %1179 = vmatprep.subr.bf16.mxu0 0
        %1180 = vmatpush2.bf16.msra.mxu0 0
        %1181 = vmatprep.subr.bf16.mxu0 0
        %1182 = vmatpush2.bf16.msra.mxu0 0
        %1183 = vmatprep.mubr.bf16.mxu0 0
        %1184 = vmatmul.mubr.bf16.gmra.mxu0 %v1145
        %v1185 = vpop.f32.mrf.mxu0
        %v1186 = vadd.f32 0.0, %v1185
        %v1187 = vpop.f32.mrf.mxu0
        %v1188 = vpop.f32.mrf.mxu0
        %v1189 = vpop.f32.mrf.mxu0
        %1190 = vdwg.mxu0
        %v1191 = vpack.c.bf16 %v1186, %v1186
        %v1192 = vld [vmem:[%s846] sm:$0xf]
        %s1193 = scalar_lea.vmem %s819, 16
        %v1194 = vld [vmem:[%s1193] sm:$0xf]
        %v1195 = vld [vmem:[%s1193 + $0x4] sm:$0xf]
        %v1196 = vld [vmem:[%s1193 + $0x8] sm:$0xf]
        %v1197 = vld [vmem:[%s1193 + $0xc] sm:$0xf]
        %s1198 = scalar_lea.vmem %s833, 1
        %v1199 = vld [vmem:[%s1198] sm:$0x1]
        %v1201 = vlaneseq
        %v1202 = vshrl.u32 %v1201, 7
        %v1203 = vsub.s32 0, %v1202
        %v1204 = vrot.slane %v1199, %v1203
        %v1210 = vunpack.c.l.b16 %v1194
        %v1211 = vunpack.c.l.b16 %v1195
        %v1212 = vunpack.c.l.b16 %v1196
        %v1213 = vunpack.c.l.b16 %v1197
        %v1214 = vpack.c.b16 %v1211, %v1210
        %v1215 = vpack.c.b16 %v1213, %v1212
        %1218 = vmatprep.subr.bf16.mxu0 0
        %1219 = vmatpush1.bf16.msra.mxu0 0
        %1220 = vmatprep.subr.bf16.mxu0 0
        %1221 = vmatpush1.bf16.msra.mxu0 0
        %1222 = vmatprep.subr.bf16.mxu0 0
        %1223 = vmatpush1.bf16.msra.mxu0 0
        %1224 = vmatprep.subr.bf16.mxu0 0
        %1225 = vmatpush1.bf16.msra.mxu0 0
        %1226 = vmatprep.subr.bf16.mxu0 0
        %1227 = vmatpush1.bf16.msra.mxu0 0
        %1228 = vmatprep.subr.bf16.mxu0 0
        %1229 = vmatpush1.bf16.msra.mxu0 0
        %1230 = vmatprep.subr.bf16.mxu0 0
        %1231 = vmatpush1.bf16.msra.mxu0 %v1215
        %1232 = vmatprep.subr.bf16.mxu0 0
        %1233 = vmatpush1.bf16.msra.mxu0 %v1214
        %1234 = vmatprep.subr.bf16.mxu0 0
        %1235 = vmatpush2.bf16.msra.mxu0 0
        %1236 = vmatprep.subr.bf16.mxu0 0
        %1237 = vmatpush2.bf16.msra.mxu0 0
        %1238 = vmatprep.subr.bf16.mxu0 0
        %1239 = vmatpush2.bf16.msra.mxu0 0
        %1240 = vmatprep.subr.bf16.mxu0 0
        %1241 = vmatpush2.bf16.msra.mxu0 0
        %1242 = vmatprep.subr.bf16.mxu0 0
        %1243 = vmatpush2.bf16.msra.mxu0 0
        %1244 = vmatprep.subr.bf16.mxu0 0
        %1245 = vmatpush2.bf16.msra.mxu0 0
        %1246 = vmatprep.subr.bf16.mxu0 0
        %1247 = vmatpush2.bf16.msra.mxu0 0
        %1248 = vmatprep.subr.bf16.mxu0 0
        %1249 = vmatpush2.bf16.msra.mxu0 0
        %1250 = vmatprep.mubr.bf16.mxu0 0
        %1251 = vmatmul.mubr.bf16.gmra.mxu0 %v913
        %v1252 = vpop.f32.mrf.mxu0
        %v1253 = vadd.f32 %v1204, %v1252
        %v1254 = vpop.f32.mrf.mxu0
        %v1255 = vpop.f32.mrf.mxu0
        %v1256 = vpop.f32.mrf.mxu0
        %1257 = vdwg.mxu0
        %s1258 = scalar_lea.vmem %s824, 16
        %v1259 = vld [vmem:[%s1258] sm:$0xf]
        %v1260 = vld [vmem:[%s1258 + $0x4] sm:$0xf]
        %v1261 = vld [vmem:[%s1258 + $0x8] sm:$0xf]
        %v1262 = vld [vmem:[%s1258 + $0xc] sm:$0xf]
        %s1263 = scalar_lea.vmem %s837, 1
        %v1264 = vld [vmem:[%s1263] sm:$0x1]
        %v1266 = vlaneseq
        %v1267 = vshrl.u32 %v1266, 7
        %v1268 = vsub.s32 0, %v1267
        %v1269 = vrot.slane %v1264, %v1268
        %v1275 = vunpack.c.l.b16 %v1259
        %v1276 = vunpack.c.l.b16 %v1260
        %v1277 = vunpack.c.l.b16 %v1261
        %v1278 = vunpack.c.l.b16 %v1262
        %v1279 = vpack.c.b16 %v1276, %v1275
        %v1280 = vpack.c.b16 %v1278, %v1277
        %1283 = vmatprep.subr.bf16.mxu0 0
        %1284 = vmatpush1.bf16.msra.mxu0 0
        %1285 = vmatprep.subr.bf16.mxu0 0
        %1286 = vmatpush1.bf16.msra.mxu0 0
        %1287 = vmatprep.subr.bf16.mxu0 0
        %1288 = vmatpush1.bf16.msra.mxu0 0
        %1289 = vmatprep.subr.bf16.mxu0 0
        %1290 = vmatpush1.bf16.msra.mxu0 0
        %1291 = vmatprep.subr.bf16.mxu0 0
        %1292 = vmatpush1.bf16.msra.mxu0 0
        %1293 = vmatprep.subr.bf16.mxu0 0
        %1294 = vmatpush1.bf16.msra.mxu0 0
        %1295 = vmatprep.subr.bf16.mxu0 0
        %1296 = vmatpush1.bf16.msra.mxu0 %v1280
        %1297 = vmatprep.subr.bf16.mxu0 0
        %1298 = vmatpush1.bf16.msra.mxu0 %v1279
        %1299 = vmatprep.subr.bf16.mxu0 0
        %1300 = vmatpush2.bf16.msra.mxu0 0
        %1301 = vmatprep.subr.bf16.mxu0 0
        %1302 = vmatpush2.bf16.msra.mxu0 0
        %1303 = vmatprep.subr.bf16.mxu0 0
        %1304 = vmatpush2.bf16.msra.mxu0 0
        %1305 = vmatprep.subr.bf16.mxu0 0
        %1306 = vmatpush2.bf16.msra.mxu0 0
        %1307 = vmatprep.subr.bf16.mxu0 0
        %1308 = vmatpush2.bf16.msra.mxu0 0
        %1309 = vmatprep.subr.bf16.mxu0 0
        %1310 = vmatpush2.bf16.msra.mxu0 0
        %1311 = vmatprep.subr.bf16.mxu0 0
        %1312 = vmatpush2.bf16.msra.mxu0 0
        %1313 = vmatprep.subr.bf16.mxu0 0
        %1314 = vmatpush2.bf16.msra.mxu0 0
        %1315 = vmatprep.mubr.bf16.mxu0 0
        %1316 = vmatmul.mubr.bf16.gmra.mxu0 %v913
        %v1317 = vpop.f32.mrf.mxu0
        %v1318 = vadd.f32 %v1269, %v1317
        %v1319 = vpop.f32.mrf.mxu0
        %v1320 = vpop.f32.mrf.mxu0
        %v1321 = vpop.f32.mrf.mxu0
        %1322 = vdwg.mxu0
        %s1323 = scalar_lea.vmem %s829, 16
        %v1324 = vld [vmem:[%s1323] sm:$0xf]
        %v1325 = vld [vmem:[%s1323 + $0x4] sm:$0xf]
        %v1326 = vld [vmem:[%s1323 + $0x8] sm:$0xf]
        %v1327 = vld [vmem:[%s1323 + $0xc] sm:$0xf]
        %s1328 = scalar_lea.vmem %s841, 1
        %v1329 = vld [vmem:[%s1328] sm:$0x1]
        %v1331 = vlaneseq
        %v1332 = vshrl.u32 %v1331, 7
        %v1333 = vsub.s32 0, %v1332
        %v1334 = vrot.slane %v1329, %v1333
        %v1340 = vunpack.c.l.b16 %v1324
        %v1341 = vunpack.c.l.b16 %v1325
        %v1342 = vunpack.c.l.b16 %v1326
        %v1343 = vunpack.c.l.b16 %v1327
        %v1344 = vpack.c.b16 %v1341, %v1340
        %v1345 = vpack.c.b16 %v1343, %v1342
        %1348 = vmatprep.subr.bf16.mxu0 0
        %1349 = vmatpush1.bf16.msra.mxu0 0
        %1350 = vmatprep.subr.bf16.mxu0 0
        %1351 = vmatpush1.bf16.msra.mxu0 0
        %1352 = vmatprep.subr.bf16.mxu0 0
        %1353 = vmatpush1.bf16.msra.mxu0 0
        %1354 = vmatprep.subr.bf16.mxu0 0
        %1355 = vmatpush1.bf16.msra.mxu0 0
        %1356 = vmatprep.subr.bf16.mxu0 0
        %1357 = vmatpush1.bf16.msra.mxu0 0
        %1358 = vmatprep.subr.bf16.mxu0 0
        %1359 = vmatpush1.bf16.msra.mxu0 0
        %1360 = vmatprep.subr.bf16.mxu0 0
        %1361 = vmatpush1.bf16.msra.mxu0 %v1345
        %1362 = vmatprep.subr.bf16.mxu0 0
        %1363 = vmatpush1.bf16.msra.mxu0 %v1344
        %1364 = vmatprep.subr.bf16.mxu0 0
        %1365 = vmatpush2.bf16.msra.mxu0 0
        %1366 = vmatprep.subr.bf16.mxu0 0
        %1367 = vmatpush2.bf16.msra.mxu0 0
        %1368 = vmatprep.subr.bf16.mxu0 0
        %1369 = vmatpush2.bf16.msra.mxu0 0
        %1370 = vmatprep.subr.bf16.mxu0 0
        %1371 = vmatpush2.bf16.msra.mxu0 0
        %1372 = vmatprep.subr.bf16.mxu0 0
        %1373 = vmatpush2.bf16.msra.mxu0 0
        %1374 = vmatprep.subr.bf16.mxu0 0
        %1375 = vmatpush2.bf16.msra.mxu0 0
        %1376 = vmatprep.subr.bf16.mxu0 0
        %1377 = vmatpush2.bf16.msra.mxu0 0
        %1378 = vmatprep.subr.bf16.mxu0 0
        %1379 = vmatpush2.bf16.msra.mxu0 0
        %1380 = vmatprep.mubr.bf16.mxu0 0
        %1381 = vmatmul.mubr.bf16.gmra.mxu0 %v913
        %v1382 = vpop.f32.mrf.mxu0
        %v1383 = vadd.f32 %v1334, %v1382
        %v1384 = vpop.f32.mrf.mxu0
        %v1385 = vpop.f32.mrf.mxu0
        %v1386 = vpop.f32.mrf.mxu0
        %1387 = vdwg.mxu0
        %v1388 = vpack.c.bf16 %v1253, %v1253
        %v1389 = vpack.c.bf16 %v1318, %v1318
        %v1391 = vsel %vm1083, %v1388, 0
        %v1394 = vsel %vm1083, %v1389, 0
        %1396 = vmatprep.subr.bf16.mxu0 0
        %1397 = vmatpush1.bf16.xpose.msra.mxu0 0
        %1398 = vmatprep.subr.bf16.mxu0 0
        %1399 = vmatpush1.bf16.xpose.msra.mxu0 0
        %1400 = vmatprep.subr.bf16.mxu0 0
        %1401 = vmatpush1.bf16.xpose.msra.mxu0 0
        %1402 = vmatprep.subr.bf16.mxu0 0
        %1403 = vmatpush1.bf16.xpose.msra.mxu0 0
        %1404 = vmatprep.subr.bf16.mxu0 0
        %1405 = vmatpush1.bf16.xpose.msra.mxu0 0
        %1406 = vmatprep.subr.bf16.mxu0 0
        %1407 = vmatpush1.bf16.xpose.msra.mxu0 0
        %1408 = vmatprep.subr.bf16.mxu0 0
        %1409 = vmatpush1.bf16.xpose.msra.mxu0 0
        %1410 = vmatprep.subr.bf16.mxu0 0
        %1411 = vmatpush1.bf16.xpose.msra.mxu0 %v1394
        %1412 = vmatprep.subr.bf16.mxu0 0
        %1413 = vmatpush2.bf16.xpose.msra.mxu0 0
        %1414 = vmatprep.subr.bf16.mxu0 0
        %1415 = vmatpush2.bf16.xpose.msra.mxu0 0
        %1416 = vmatprep.subr.bf16.mxu0 0
        %1417 = vmatpush2.bf16.xpose.msra.mxu0 0
        %1418 = vmatprep.subr.bf16.mxu0 0
        %1419 = vmatpush2.bf16.xpose.msra.mxu0 0
        %1420 = vmatprep.subr.bf16.mxu0 0
        %1421 = vmatpush2.bf16.xpose.msra.mxu0 0
        %1422 = vmatprep.subr.bf16.mxu0 0
        %1423 = vmatpush2.bf16.xpose.msra.mxu0 0
        %1424 = vmatprep.subr.bf16.mxu0 0
        %1425 = vmatpush2.bf16.xpose.msra.mxu0 0
        %1426 = vmatprep.subr.bf16.mxu0 0
        %1427 = vmatpush2.bf16.xpose.msra.mxu0 0
        %1428 = vmatprep.mubr.bf16.mxu0 0
        %1429 = vmatmul.mubr.bf16.gmra.mxu0 %v1391
        %v1430 = vpop.f32.mrf.mxu0
        %v1431 = vadd.f32 0.0, %v1430
        %v1432 = vpop.f32.mrf.mxu0
        %v1433 = vpop.f32.mrf.mxu0
        %v1434 = vpop.f32.mrf.mxu0
        %1435 = vdwg.mxu0
        %v1436 = vmul.f32 %v1431, 0.35355338
        %v1437 = vsel %vm1083, %v1436, -inf
        %1438 = vmax.xlane.f32.xlu0 %v1437
        %v1439 = vpop.xlane.xlu0 %1438
        %v1440 = vsub.f32 %v1436, %v1439
        %v1441 = vmul.f32 %v1440, 1.442695
        %v1442 = vpow.pop %v1441
        %v1443 = vsel %vm1083, %v1442, 0.0
        %1444 = vadd.xlane.f32.xlu0 %v1443
        %v1445 = vpop.xlane.xlu0 %1444
        %v1446 = vrcp.pop %v1445
        %v1447 = vmul.f32 %v1442, %v1446
        %v1448 = vpack.c.bf16 %v1447, %v1447
        %v1449 = vpack.c.bf16 %v1383, %v1383
        %v1451 = vsel %vm1083, %v1448, 0
        %v1454 = vsel %vm1147, %v1449, 0
        %1456 = vmatprep.subr.bf16.mxu0 0
        %1457 = vmatpush1.bf16.msra.mxu0 0
        %1458 = vmatprep.subr.bf16.mxu0 0
        %1459 = vmatpush1.bf16.msra.mxu0 0
        %1460 = vmatprep.subr.bf16.mxu0 0
        %1461 = vmatpush1.bf16.msra.mxu0 0
        %1462 = vmatprep.subr.bf16.mxu0 0
        %1463 = vmatpush1.bf16.msra.mxu0 0
        %1464 = vmatprep.subr.bf16.mxu0 0
        %1465 = vmatpush1.bf16.msra.mxu0 0
        %1466 = vmatprep.subr.bf16.mxu0 0
        %1467 = vmatpush1.bf16.msra.mxu0 0
        %1468 = vmatprep.subr.bf16.mxu0 0
        %1469 = vmatpush1.bf16.msra.mxu0 0
        %1470 = vmatprep.subr.bf16.mxu0 0
        %1471 = vmatpush1.bf16.msra.mxu0 %v1454
        %1472 = vmatprep.subr.bf16.mxu0 0
        %1473 = vmatpush2.bf16.msra.mxu0 0
        %1474 = vmatprep.subr.bf16.mxu0 0
        %1475 = vmatpush2.bf16.msra.mxu0 0
        %1476 = vmatprep.subr.bf16.mxu0 0
        %1477 = vmatpush2.bf16.msra.mxu0 0
        %1478 = vmatprep.subr.bf16.mxu0 0
        %1479 = vmatpush2.bf16.msra.mxu0 0
        %1480 = vmatprep.subr.bf16.mxu0 0
        %1481 = vmatpush2.bf16.msra.mxu0 0
        %1482 = vmatprep.subr.bf16.mxu0 0
        %1483 = vmatpush2.bf16.msra.mxu0 0
        %1484 = vmatprep.subr.bf16.mxu0 0
        %1485 = vmatpush2.bf16.msra.mxu0 0
        %1486 = vmatprep.subr.bf16.mxu0 0
        %1487 = vmatpush2.bf16.msra.mxu0 0
        %1488 = vmatprep.mubr.bf16.mxu0 0
        %1489 = vmatmul.mubr.bf16.gmra.mxu0 %v1451
        %v1490 = vpop.f32.mrf.mxu0
        %v1491 = vadd.f32 0.0, %v1490
        %v1492 = vpop.f32.mrf.mxu0
        %v1493 = vpop.f32.mrf.mxu0
        %v1494 = vpop.f32.mrf.mxu0
        %1495 = vdwg.mxu0
        %v1496 = vpack.c.bf16 %v1491, %v1491
        %s1497 = scalar_lea.vmem %s846, 4
        %v1498 = vld [vmem:[%s1497] sm:$0xf]
        %v1500 = vsel %vm1083, %v1496, 0
        %v1503 = vsel %vm1147, %v1498, 0
        %1505 = vmatprep.subr.bf16.mxu0 0
        %1506 = vmatpush1.bf16.msra.mxu0 0
        %1507 = vmatprep.subr.bf16.mxu0 0
        %1508 = vmatpush1.bf16.msra.mxu0 0
        %1509 = vmatprep.subr.bf16.mxu0 0
        %1510 = vmatpush1.bf16.msra.mxu0 0
        %1511 = vmatprep.subr.bf16.mxu0 0
        %1512 = vmatpush1.bf16.msra.mxu0 0
        %1513 = vmatprep.subr.bf16.mxu0 0
        %1514 = vmatpush1.bf16.msra.mxu0 0
        %1515 = vmatprep.subr.bf16.mxu0 0
        %1516 = vmatpush1.bf16.msra.mxu0 0
        %1517 = vmatprep.subr.bf16.mxu0 0
        %1518 = vmatpush1.bf16.msra.mxu0 0
        %1519 = vmatprep.subr.bf16.mxu0 0
        %1520 = vmatpush1.bf16.msra.mxu0 %v1503
        %1521 = vmatprep.subr.bf16.mxu0 0
        %1522 = vmatpush2.bf16.msra.mxu0 0
        %1523 = vmatprep.subr.bf16.mxu0 0
        %1524 = vmatpush2.bf16.msra.mxu0 0
        %1525 = vmatprep.subr.bf16.mxu0 0
        %1526 = vmatpush2.bf16.msra.mxu0 0
        %1527 = vmatprep.subr.bf16.mxu0 0
        %1528 = vmatpush2.bf16.msra.mxu0 0
        %1529 = vmatprep.subr.bf16.mxu0 0
        %1530 = vmatpush2.bf16.msra.mxu0 0
        %1531 = vmatprep.subr.bf16.mxu0 0
        %1532 = vmatpush2.bf16.msra.mxu0 0
        %1533 = vmatprep.subr.bf16.mxu0 0
        %1534 = vmatpush2.bf16.msra.mxu0 0
        %1535 = vmatprep.subr.bf16.mxu0 0
        %1536 = vmatpush2.bf16.msra.mxu0 0
        %1537 = vmatprep.mubr.bf16.mxu0 0
        %1538 = vmatmul.mubr.bf16.gmra.mxu0 %v1500
        %v1539 = vpop.f32.mrf.mxu0
        %v1540 = vadd.f32 0.0, %v1539
        %v1541 = vpop.f32.mrf.mxu0
        %v1542 = vpop.f32.mrf.mxu0
        %v1543 = vpop.f32.mrf.mxu0
        %1544 = vdwg.mxu0
        %v1546 = vsel %vm1083, %v1191, 0
        %v1549 = vsel %vm1147, %v1192, 0
        %1551 = vmatprep.subr.bf16.mxu0 0
        %1552 = vmatpush1.bf16.msra.mxu0 0
        %1553 = vmatprep.subr.bf16.mxu0 0
        %1554 = vmatpush1.bf16.msra.mxu0 0
        %1555 = vmatprep.subr.bf16.mxu0 0
        %1556 = vmatpush1.bf16.msra.mxu0 0
        %1557 = vmatprep.subr.bf16.mxu0 0
        %1558 = vmatpush1.bf16.msra.mxu0 0
        %1559 = vmatprep.subr.bf16.mxu0 0
        %1560 = vmatpush1.bf16.msra.mxu0 0
        %1561 = vmatprep.subr.bf16.mxu0 0
        %1562 = vmatpush1.bf16.msra.mxu0 0
        %1563 = vmatprep.subr.bf16.mxu0 0
        %1564 = vmatpush1.bf16.msra.mxu0 0
        %1565 = vmatprep.subr.bf16.mxu0 0
        %1566 = vmatpush1.bf16.msra.mxu0 %v1549
        %1567 = vmatprep.subr.bf16.mxu0 0
        %1568 = vmatpush2.bf16.msra.mxu0 0
        %1569 = vmatprep.subr.bf16.mxu0 0
        %1570 = vmatpush2.bf16.msra.mxu0 0
        %1571 = vmatprep.subr.bf16.mxu0 0
        %1572 = vmatpush2.bf16.msra.mxu0 0
        %1573 = vmatprep.subr.bf16.mxu0 0
        %1574 = vmatpush2.bf16.msra.mxu0 0
        %1575 = vmatprep.subr.bf16.mxu0 0
        %1576 = vmatpush2.bf16.msra.mxu0 0
        %1577 = vmatprep.subr.bf16.mxu0 0
        %1578 = vmatpush2.bf16.msra.mxu0 0
        %1579 = vmatprep.subr.bf16.mxu0 0
        %1580 = vmatpush2.bf16.msra.mxu0 0
        %1581 = vmatprep.subr.bf16.mxu0 0
        %1582 = vmatpush2.bf16.msra.mxu0 0
        %1583 = vmatprep.mubr.bf16.mxu0 0
        %1584 = vmatmul.mubr.bf16.gmra.mxu0 %v1546
        %v1585 = vpop.f32.mrf.mxu0
        %v1586 = vadd.f32 %v1540, %v1585
        %v1587 = vpop.f32.mrf.mxu0
        %v1588 = vpop.f32.mrf.mxu0
        %v1589 = vpop.f32.mrf.mxu0
        %1590 = vdwg.mxu0
        %s1591 = scalar_lea.vmem %s819, 32
        %v1592 = vld [vmem:[%s1591] sm:$0xf]
        %v1593 = vld [vmem:[%s1591 + $0x4] sm:$0xf]
        %v1594 = vld [vmem:[%s1591 + $0x8] sm:$0xf]
        %v1595 = vld [vmem:[%s1591 + $0xc] sm:$0xf]
        %s1596 = scalar_lea.vmem %s833, 2
        %v1597 = vld [vmem:[%s1596] sm:$0x1]
        %v1599 = vlaneseq
        %v1600 = vshrl.u32 %v1599, 7
        %v1601 = vsub.s32 0, %v1600
        %v1602 = vrot.slane %v1597, %v1601
        %v1608 = vunpack.c.l.b16 %v1592
        %v1609 = vunpack.c.l.b16 %v1593
        %v1610 = vunpack.c.l.b16 %v1594
        %v1611 = vunpack.c.l.b16 %v1595
        %v1612 = vpack.c.b16 %v1609, %v1608
        %v1613 = vpack.c.b16 %v1611, %v1610
        %1616 = vmatprep.subr.bf16.mxu0 0
        %1617 = vmatpush1.bf16.msra.mxu0 0
        %1618 = vmatprep.subr.bf16.mxu0 0
        %1619 = vmatpush1.bf16.msra.mxu0 0
        %1620 = vmatprep.subr.bf16.mxu0 0
        %1621 = vmatpush1.bf16.msra.mxu0 0
        %1622 = vmatprep.subr.bf16.mxu0 0
        %1623 = vmatpush1.bf16.msra.mxu0 0
        %1624 = vmatprep.subr.bf16.mxu0 0
        %1625 = vmatpush1.bf16.msra.mxu0 0
        %1626 = vmatprep.subr.bf16.mxu0 0
        %1627 = vmatpush1.bf16.msra.mxu0 0
        %1628 = vmatprep.subr.bf16.mxu0 0
        %1629 = vmatpush1.bf16.msra.mxu0 %v1613
        %1630 = vmatprep.subr.bf16.mxu0 0
        %1631 = vmatpush1.bf16.msra.mxu0 %v1612
        %1632 = vmatprep.subr.bf16.mxu0 0
        %1633 = vmatpush2.bf16.msra.mxu0 0
        %1634 = vmatprep.subr.bf16.mxu0 0
        %1635 = vmatpush2.bf16.msra.mxu0 0
        %1636 = vmatprep.subr.bf16.mxu0 0
        %1637 = vmatpush2.bf16.msra.mxu0 0
        %1638 = vmatprep.subr.bf16.mxu0 0
        %1639 = vmatpush2.bf16.msra.mxu0 0
        %1640 = vmatprep.subr.bf16.mxu0 0
        %1641 = vmatpush2.bf16.msra.mxu0 0
        %1642 = vmatprep.subr.bf16.mxu0 0
        %1643 = vmatpush2.bf16.msra.mxu0 0
        %1644 = vmatprep.subr.bf16.mxu0 0
        %1645 = vmatpush2.bf16.msra.mxu0 0
        %1646 = vmatprep.subr.bf16.mxu0 0
        %1647 = vmatpush2.bf16.msra.mxu0 0
        %1648 = vmatprep.mubr.bf16.mxu0 0
        %1649 = vmatmul.mubr.bf16.gmra.mxu0 %v913
        %v1650 = vpop.f32.mrf.mxu0
        %v1651 = vadd.f32 %v1602, %v1650
        %v1652 = vpop.f32.mrf.mxu0
        %v1653 = vpop.f32.mrf.mxu0
        %v1654 = vpop.f32.mrf.mxu0
        %1655 = vdwg.mxu0
        %s1656 = scalar_lea.vmem %s824, 32
        %v1657 = vld [vmem:[%s1656] sm:$0xf]
        %v1658 = vld [vmem:[%s1656 + $0x4] sm:$0xf]
        %v1659 = vld [vmem:[%s1656 + $0x8] sm:$0xf]
        %v1660 = vld [vmem:[%s1656 + $0xc] sm:$0xf]
        %s1661 = scalar_lea.vmem %s837, 2
        %v1662 = vld [vmem:[%s1661] sm:$0x1]
        %v1664 = vlaneseq
        %v1665 = vshrl.u32 %v1664, 7
        %v1666 = vsub.s32 0, %v1665
        %v1667 = vrot.slane %v1662, %v1666
        %v1673 = vunpack.c.l.b16 %v1657
        %v1674 = vunpack.c.l.b16 %v1658
        %v1675 = vunpack.c.l.b16 %v1659
        %v1676 = vunpack.c.l.b16 %v1660
        %v1677 = vpack.c.b16 %v1674, %v1673
        %v1678 = vpack.c.b16 %v1676, %v1675
        %1681 = vmatprep.subr.bf16.mxu0 0
        %1682 = vmatpush1.bf16.msra.mxu0 0
        %1683 = vmatprep.subr.bf16.mxu0 0
        %1684 = vmatpush1.bf16.msra.mxu0 0
        %1685 = vmatprep.subr.bf16.mxu0 0
        %1686 = vmatpush1.bf16.msra.mxu0 0
        %1687 = vmatprep.subr.bf16.mxu0 0
        %1688 = vmatpush1.bf16.msra.mxu0 0
        %1689 = vmatprep.subr.bf16.mxu0 0
        %1690 = vmatpush1.bf16.msra.mxu0 0
        %1691 = vmatprep.subr.bf16.mxu0 0
        %1692 = vmatpush1.bf16.msra.mxu0 0
        %1693 = vmatprep.subr.bf16.mxu0 0
        %1694 = vmatpush1.bf16.msra.mxu0 %v1678
        %1695 = vmatprep.subr.bf16.mxu0 0
        %1696 = vmatpush1.bf16.msra.mxu0 %v1677
        %1697 = vmatprep.subr.bf16.mxu0 0
        %1698 = vmatpush2.bf16.msra.mxu0 0
        %1699 = vmatprep.subr.bf16.mxu0 0
        %1700 = vmatpush2.bf16.msra.mxu0 0
        %1701 = vmatprep.subr.bf16.mxu0 0
        %1702 = vmatpush2.bf16.msra.mxu0 0
        %1703 = vmatprep.subr.bf16.mxu0 0
        %1704 = vmatpush2.bf16.msra.mxu0 0
        %1705 = vmatprep.subr.bf16.mxu0 0
        %1706 = vmatpush2.bf16.msra.mxu0 0
        %1707 = vmatprep.subr.bf16.mxu0 0
        %1708 = vmatpush2.bf16.msra.mxu0 0
        %1709 = vmatprep.subr.bf16.mxu0 0
        %1710 = vmatpush2.bf16.msra.mxu0 0
        %1711 = vmatprep.subr.bf16.mxu0 0
        %1712 = vmatpush2.bf16.msra.mxu0 0
        %1713 = vmatprep.mubr.bf16.mxu0 0
        %1714 = vmatmul.mubr.bf16.gmra.mxu0 %v913
        %v1715 = vpop.f32.mrf.mxu0
        %v1716 = vadd.f32 %v1667, %v1715
        %v1717 = vpop.f32.mrf.mxu0
        %v1718 = vpop.f32.mrf.mxu0
        %v1719 = vpop.f32.mrf.mxu0
        %1720 = vdwg.mxu0
        %s1721 = scalar_lea.vmem %s829, 32
        %v1722 = vld [vmem:[%s1721] sm:$0xf]
        %v1723 = vld [vmem:[%s1721 + $0x4] sm:$0xf]
        %v1724 = vld [vmem:[%s1721 + $0x8] sm:$0xf]
        %v1725 = vld [vmem:[%s1721 + $0xc] sm:$0xf]
        %s1726 = scalar_lea.vmem %s841, 2
        %v1727 = vld [vmem:[%s1726] sm:$0x1]
        %v1729 = vlaneseq
        %v1730 = vshrl.u32 %v1729, 7
        %v1731 = vsub.s32 0, %v1730
        %v1732 = vrot.slane %v1727, %v1731
        %v1738 = vunpack.c.l.b16 %v1722
        %v1739 = vunpack.c.l.b16 %v1723
        %v1740 = vunpack.c.l.b16 %v1724
        %v1741 = vunpack.c.l.b16 %v1725
        %v1742 = vpack.c.b16 %v1739, %v1738
        %v1743 = vpack.c.b16 %v1741, %v1740
        %1746 = vmatprep.subr.bf16.mxu0 0
        %1747 = vmatpush1.bf16.msra.mxu0 0
        %1748 = vmatprep.subr.bf16.mxu0 0
        %1749 = vmatpush1.bf16.msra.mxu0 0
        %1750 = vmatprep.subr.bf16.mxu0 0
        %1751 = vmatpush1.bf16.msra.mxu0 0
        %1752 = vmatprep.subr.bf16.mxu0 0
        %1753 = vmatpush1.bf16.msra.mxu0 0
        %1754 = vmatprep.subr.bf16.mxu0 0
        %1755 = vmatpush1.bf16.msra.mxu0 0
        %1756 = vmatprep.subr.bf16.mxu0 0
        %1757 = vmatpush1.bf16.msra.mxu0 0
        %1758 = vmatprep.subr.bf16.mxu0 0
        %1759 = vmatpush1.bf16.msra.mxu0 %v1743
        %1760 = vmatprep.subr.bf16.mxu0 0
        %1761 = vmatpush1.bf16.msra.mxu0 %v1742
        %1762 = vmatprep.subr.bf16.mxu0 0
        %1763 = vmatpush2.bf16.msra.mxu0 0
        %1764 = vmatprep.subr.bf16.mxu0 0
        %1765 = vmatpush2.bf16.msra.mxu0 0
        %1766 = vmatprep.subr.bf16.mxu0 0
        %1767 = vmatpush2.bf16.msra.mxu0 0
        %1768 = vmatprep.subr.bf16.mxu0 0
        %1769 = vmatpush2.bf16.msra.mxu0 0
        %1770 = vmatprep.subr.bf16.mxu0 0
        %1771 = vmatpush2.bf16.msra.mxu0 0
        %1772 = vmatprep.subr.bf16.mxu0 0
        %1773 = vmatpush2.bf16.msra.mxu0 0
        %1774 = vmatprep.subr.bf16.mxu0 0
        %1775 = vmatpush2.bf16.msra.mxu0 0
        %1776 = vmatprep.subr.bf16.mxu0 0
        %1777 = vmatpush2.bf16.msra.mxu0 0
        %1778 = vmatprep.mubr.bf16.mxu0 0
        %1779 = vmatmul.mubr.bf16.gmra.mxu0 %v913
        %v1780 = vpop.f32.mrf.mxu0
        %v1781 = vadd.f32 %v1732, %v1780
        %v1782 = vpop.f32.mrf.mxu0
        %v1783 = vpop.f32.mrf.mxu0
        %v1784 = vpop.f32.mrf.mxu0
        %1785 = vdwg.mxu0
        %v1786 = vpack.c.bf16 %v1651, %v1651
        %v1787 = vpack.c.bf16 %v1716, %v1716
        %v1789 = vsel %vm1083, %v1786, 0
        %v1792 = vsel %vm1083, %v1787, 0
        %1794 = vmatprep.subr.bf16.mxu0 0
        %1795 = vmatpush1.bf16.xpose.msra.mxu0 0
        %1796 = vmatprep.subr.bf16.mxu0 0
        %1797 = vmatpush1.bf16.xpose.msra.mxu0 0
        %1798 = vmatprep.subr.bf16.mxu0 0
        %1799 = vmatpush1.bf16.xpose.msra.mxu0 0
        %1800 = vmatprep.subr.bf16.mxu0 0
        %1801 = vmatpush1.bf16.xpose.msra.mxu0 0
        %1802 = vmatprep.subr.bf16.mxu0 0
        %1803 = vmatpush1.bf16.xpose.msra.mxu0 0
        %1804 = vmatprep.subr.bf16.mxu0 0
        %1805 = vmatpush1.bf16.xpose.msra.mxu0 0
        %1806 = vmatprep.subr.bf16.mxu0 0
        %1807 = vmatpush1.bf16.xpose.msra.mxu0 0
        %1808 = vmatprep.subr.bf16.mxu0 0
        %1809 = vmatpush1.bf16.xpose.msra.mxu0 %v1792
        %1810 = vmatprep.subr.bf16.mxu0 0
        %1811 = vmatpush2.bf16.xpose.msra.mxu0 0
        %1812 = vmatprep.subr.bf16.mxu0 0
        %1813 = vmatpush2.bf16.xpose.msra.mxu0 0
        %1814 = vmatprep.subr.bf16.mxu0 0
        %1815 = vmatpush2.bf16.xpose.msra.mxu0 0
        %1816 = vmatprep.subr.bf16.mxu0 0
        %1817 = vmatpush2.bf16.xpose.msra.mxu0 0
        %1818 = vmatprep.subr.bf16.mxu0 0
        %1819 = vmatpush2.bf16.xpose.msra.mxu0 0
        %1820 = vmatprep.subr.bf16.mxu0 0
        %1821 = vmatpush2.bf16.xpose.msra.mxu0 0
        %1822 = vmatprep.subr.bf16.mxu0 0
        %1823 = vmatpush2.bf16.xpose.msra.mxu0 0
        %1824 = vmatprep.subr.bf16.mxu0 0
        %1825 = vmatpush2.bf16.xpose.msra.mxu0 0
        %1826 = vmatprep.mubr.bf16.mxu0 0
        %1827 = vmatmul.mubr.bf16.gmra.mxu0 %v1789
        %v1828 = vpop.f32.mrf.mxu0
        %v1829 = vadd.f32 0.0, %v1828
        %v1830 = vpop.f32.mrf.mxu0
        %v1831 = vpop.f32.mrf.mxu0
        %v1832 = vpop.f32.mrf.mxu0
        %1833 = vdwg.mxu0
        %v1834 = vmul.f32 %v1829, 0.35355338
        %v1835 = vsel %vm1083, %v1834, -inf
        %1836 = vmax.xlane.f32.xlu0 %v1835
        %v1837 = vpop.xlane.xlu0 %1836
        %v1838 = vsub.f32 %v1834, %v1837
        %v1839 = vmul.f32 %v1838, 1.442695
        %v1840 = vpow.pop %v1839
        %v1841 = vsel %vm1083, %v1840, 0.0
        %1842 = vadd.xlane.f32.xlu0 %v1841
        %v1843 = vpop.xlane.xlu0 %1842
        %v1844 = vrcp.pop %v1843
        %v1845 = vmul.f32 %v1840, %v1844
        %v1846 = vpack.c.bf16 %v1845, %v1845
        %v1847 = vpack.c.bf16 %v1781, %v1781
        %v1849 = vsel %vm1083, %v1846, 0
        %v1852 = vsel %vm1147, %v1847, 0
        %1854 = vmatprep.subr.bf16.mxu0 0
        %1855 = vmatpush1.bf16.msra.mxu0 0
        %1856 = vmatprep.subr.bf16.mxu0 0
        %1857 = vmatpush1.bf16.msra.mxu0 0
        %1858 = vmatprep.subr.bf16.mxu0 0
        %1859 = vmatpush1.bf16.msra.mxu0 0
        %1860 = vmatprep.subr.bf16.mxu0 0
        %1861 = vmatpush1.bf16.msra.mxu0 0
        %1862 = vmatprep.subr.bf16.mxu0 0
        %1863 = vmatpush1.bf16.msra.mxu0 0
        %1864 = vmatprep.subr.bf16.mxu0 0
        %1865 = vmatpush1.bf16.msra.mxu0 0
        %1866 = vmatprep.subr.bf16.mxu0 0
        %1867 = vmatpush1.bf16.msra.mxu0 0
        %1868 = vmatprep.subr.bf16.mxu0 0
        %1869 = vmatpush1.bf16.msra.mxu0 %v1852
        %1870 = vmatprep.subr.bf16.mxu0 0
        %1871 = vmatpush2.bf16.msra.mxu0 0
        %1872 = vmatprep.subr.bf16.mxu0 0
        %1873 = vmatpush2.bf16.msra.mxu0 0
        %1874 = vmatprep.subr.bf16.mxu0 0
        %1875 = vmatpush2.bf16.msra.mxu0 0
        %1876 = vmatprep.subr.bf16.mxu0 0
        %1877 = vmatpush2.bf16.msra.mxu0 0
        %1878 = vmatprep.subr.bf16.mxu0 0
        %1879 = vmatpush2.bf16.msra.mxu0 0
        %1880 = vmatprep.subr.bf16.mxu0 0
        %1881 = vmatpush2.bf16.msra.mxu0 0
        %1882 = vmatprep.subr.bf16.mxu0 0
        %1883 = vmatpush2.bf16.msra.mxu0 0
        %1884 = vmatprep.subr.bf16.mxu0 0
        %1885 = vmatpush2.bf16.msra.mxu0 0
        %1886 = vmatprep.mubr.bf16.mxu0 0
        %1887 = vmatmul.mubr.bf16.gmra.mxu0 %v1849
        %v1888 = vpop.f32.mrf.mxu0
        %v1889 = vadd.f32 0.0, %v1888
        %v1890 = vpop.f32.mrf.mxu0
        %v1891 = vpop.f32.mrf.mxu0
        %v1892 = vpop.f32.mrf.mxu0
        %1893 = vdwg.mxu0
        %v1894 = vpack.c.bf16 %v1889, %v1889
        %s1895 = scalar_lea.vmem %s846, 8
        %v1896 = vld [vmem:[%s1895] sm:$0xf]
        %v1898 = vsel %vm1083, %v1894, 0
        %v1901 = vsel %vm1147, %v1896, 0
        %1903 = vmatprep.subr.bf16.mxu0 0
        %1904 = vmatpush1.bf16.msra.mxu0 0
        %1905 = vmatprep.subr.bf16.mxu0 0
        %1906 = vmatpush1.bf16.msra.mxu0 0
        %1907 = vmatprep.subr.bf16.mxu0 0
        %1908 = vmatpush1.bf16.msra.mxu0 0
        %1909 = vmatprep.subr.bf16.mxu0 0
        %1910 = vmatpush1.bf16.msra.mxu0 0
        %1911 = vmatprep.subr.bf16.mxu0 0
        %1912 = vmatpush1.bf16.msra.mxu0 0
        %1913 = vmatprep.subr.bf16.mxu0 0
        %1914 = vmatpush1.bf16.msra.mxu0 0
        %1915 = vmatprep.subr.bf16.mxu0 0
        %1916 = vmatpush1.bf16.msra.mxu0 0
        %1917 = vmatprep.subr.bf16.mxu0 0
        %1918 = vmatpush1.bf16.msra.mxu0 %v1901
        %1919 = vmatprep.subr.bf16.mxu0 0
        %1920 = vmatpush2.bf16.msra.mxu0 0
        %1921 = vmatprep.subr.bf16.mxu0 0
        %1922 = vmatpush2.bf16.msra.mxu0 0
        %1923 = vmatprep.subr.bf16.mxu0 0
        %1924 = vmatpush2.bf16.msra.mxu0 0
        %1925 = vmatprep.subr.bf16.mxu0 0
        %1926 = vmatpush2.bf16.msra.mxu0 0
        %1927 = vmatprep.subr.bf16.mxu0 0
        %1928 = vmatpush2.bf16.msra.mxu0 0
        %1929 = vmatprep.subr.bf16.mxu0 0
        %1930 = vmatpush2.bf16.msra.mxu0 0
        %1931 = vmatprep.subr.bf16.mxu0 0
        %1932 = vmatpush2.bf16.msra.mxu0 0
        %1933 = vmatprep.subr.bf16.mxu0 0
        %1934 = vmatpush2.bf16.msra.mxu0 0
        %1935 = vmatprep.mubr.bf16.mxu0 0
        %1936 = vmatmul.mubr.bf16.gmra.mxu0 %v1898
        %v1937 = vpop.f32.mrf.mxu0
        %v1938 = vadd.f32 0.0, %v1937
        %v1939 = vpop.f32.mrf.mxu0
        %v1940 = vpop.f32.mrf.mxu0
        %v1941 = vpop.f32.mrf.mxu0
        %1942 = vdwg.mxu0
        %v1943 = vadd.f32 %v1586, %v1938
        %s1944 = scalar_lea.vmem %s819, 48
        %v1945 = vld [vmem:[%s1944] sm:$0xf]
        %v1946 = vld [vmem:[%s1944 + $0x4] sm:$0xf]
        %v1947 = vld [vmem:[%s1944 + $0x8] sm:$0xf]
        %v1948 = vld [vmem:[%s1944 + $0xc] sm:$0xf]
        %s1949 = scalar_lea.vmem %s833, 3
        %v1950 = vld [vmem:[%s1949] sm:$0x1]
        %v1952 = vlaneseq
        %v1953 = vshrl.u32 %v1952, 7
        %v1954 = vsub.s32 0, %v1953
        %v1955 = vrot.slane %v1950, %v1954
        %v1961 = vunpack.c.l.b16 %v1945
        %v1962 = vunpack.c.l.b16 %v1946
        %v1963 = vunpack.c.l.b16 %v1947
        %v1964 = vunpack.c.l.b16 %v1948
        %v1965 = vpack.c.b16 %v1962, %v1961
        %v1966 = vpack.c.b16 %v1964, %v1963
        %1969 = vmatprep.subr.bf16.mxu0 0
        %1970 = vmatpush1.bf16.msra.mxu0 0
        %1971 = vmatprep.subr.bf16.mxu0 0
        %1972 = vmatpush1.bf16.msra.mxu0 0
        %1973 = vmatprep.subr.bf16.mxu0 0
        %1974 = vmatpush1.bf16.msra.mxu0 0
        %1975 = vmatprep.subr.bf16.mxu0 0
        %1976 = vmatpush1.bf16.msra.mxu0 0
        %1977 = vmatprep.subr.bf16.mxu0 0
        %1978 = vmatpush1.bf16.msra.mxu0 0
        %1979 = vmatprep.subr.bf16.mxu0 0
        %1980 = vmatpush1.bf16.msra.mxu0 0
        %1981 = vmatprep.subr.bf16.mxu0 0
        %1982 = vmatpush1.bf16.msra.mxu0 %v1966
        %1983 = vmatprep.subr.bf16.mxu0 0
        %1984 = vmatpush1.bf16.msra.mxu0 %v1965
        %1985 = vmatprep.subr.bf16.mxu0 0
        %1986 = vmatpush2.bf16.msra.mxu0 0
        %1987 = vmatprep.subr.bf16.mxu0 0
        %1988 = vmatpush2.bf16.msra.mxu0 0
        %1989 = vmatprep.subr.bf16.mxu0 0
        %1990 = vmatpush2.bf16.msra.mxu0 0
        %1991 = vmatprep.subr.bf16.mxu0 0
        %1992 = vmatpush2.bf16.msra.mxu0 0
        %1993 = vmatprep.subr.bf16.mxu0 0
        %1994 = vmatpush2.bf16.msra.mxu0 0
        %1995 = vmatprep.subr.bf16.mxu0 0
        %1996 = vmatpush2.bf16.msra.mxu0 0
        %1997 = vmatprep.subr.bf16.mxu0 0
        %1998 = vmatpush2.bf16.msra.mxu0 0
        %1999 = vmatprep.subr.bf16.mxu0 0
        %2000 = vmatpush2.bf16.msra.mxu0 0
        %2001 = vmatprep.mubr.bf16.mxu0 0
        %2002 = vmatmul.mubr.bf16.gmra.mxu0 %v913
        %v2003 = vpop.f32.mrf.mxu0
        %v2004 = vadd.f32 %v1955, %v2003
        %v2005 = vpop.f32.mrf.mxu0
        %v2006 = vpop.f32.mrf.mxu0
        %v2007 = vpop.f32.mrf.mxu0
        %2008 = vdwg.mxu0
        %s2009 = scalar_lea.vmem %s824, 48
        %v2010 = vld [vmem:[%s2009] sm:$0xf]
        %v2011 = vld [vmem:[%s2009 + $0x4] sm:$0xf]
        %v2012 = vld [vmem:[%s2009 + $0x8] sm:$0xf]
        %v2013 = vld [vmem:[%s2009 + $0xc] sm:$0xf]
        %s2014 = scalar_lea.vmem %s837, 3
        %v2015 = vld [vmem:[%s2014] sm:$0x1]
        %v2017 = vlaneseq
        %v2018 = vshrl.u32 %v2017, 7
        %v2019 = vsub.s32 0, %v2018
        %v2020 = vrot.slane %v2015, %v2019
        %v2026 = vunpack.c.l.b16 %v2010
        %v2027 = vunpack.c.l.b16 %v2011
        %v2028 = vunpack.c.l.b16 %v2012
        %v2029 = vunpack.c.l.b16 %v2013
        %v2030 = vpack.c.b16 %v2027, %v2026
        %v2031 = vpack.c.b16 %v2029, %v2028
        %2034 = vmatprep.subr.bf16.mxu0 0
        %2035 = vmatpush1.bf16.msra.mxu0 0
        %2036 = vmatprep.subr.bf16.mxu0 0
        %2037 = vmatpush1.bf16.msra.mxu0 0
        %2038 = vmatprep.subr.bf16.mxu0 0
        %2039 = vmatpush1.bf16.msra.mxu0 0
        %2040 = vmatprep.subr.bf16.mxu0 0
        %2041 = vmatpush1.bf16.msra.mxu0 0
        %2042 = vmatprep.subr.bf16.mxu0 0
        %2043 = vmatpush1.bf16.msra.mxu0 0
        %2044 = vmatprep.subr.bf16.mxu0 0
        %2045 = vmatpush1.bf16.msra.mxu0 0
        %2046 = vmatprep.subr.bf16.mxu0 0
        %2047 = vmatpush1.bf16.msra.mxu0 %v2031
        %2048 = vmatprep.subr.bf16.mxu0 0
        %2049 = vmatpush1.bf16.msra.mxu0 %v2030
        %2050 = vmatprep.subr.bf16.mxu0 0
        %2051 = vmatpush2.bf16.msra.mxu0 0
        %2052 = vmatprep.subr.bf16.mxu0 0
        %2053 = vmatpush2.bf16.msra.mxu0 0
        %2054 = vmatprep.subr.bf16.mxu0 0
        %2055 = vmatpush2.bf16.msra.mxu0 0
        %2056 = vmatprep.subr.bf16.mxu0 0
        %2057 = vmatpush2.bf16.msra.mxu0 0
        %2058 = vmatprep.subr.bf16.mxu0 0
        %2059 = vmatpush2.bf16.msra.mxu0 0
        %2060 = vmatprep.subr.bf16.mxu0 0
        %2061 = vmatpush2.bf16.msra.mxu0 0
        %2062 = vmatprep.subr.bf16.mxu0 0
        %2063 = vmatpush2.bf16.msra.mxu0 0
        %2064 = vmatprep.subr.bf16.mxu0 0
        %2065 = vmatpush2.bf16.msra.mxu0 0
        %2066 = vmatprep.mubr.bf16.mxu0 0
        %2067 = vmatmul.mubr.bf16.gmra.mxu0 %v913
        %v2068 = vpop.f32.mrf.mxu0
        %v2069 = vadd.f32 %v2020, %v2068
        %v2070 = vpop.f32.mrf.mxu0
        %v2071 = vpop.f32.mrf.mxu0
        %v2072 = vpop.f32.mrf.mxu0
        %2073 = vdwg.mxu0
        %s2074 = scalar_lea.vmem %s829, 48
        %v2075 = vld [vmem:[%s2074] sm:$0xf]
        %v2076 = vld [vmem:[%s2074 + $0x4] sm:$0xf]
        %v2077 = vld [vmem:[%s2074 + $0x8] sm:$0xf]
        %v2078 = vld [vmem:[%s2074 + $0xc] sm:$0xf]
        %s2079 = scalar_lea.vmem %s841, 3
        %v2080 = vld [vmem:[%s2079] sm:$0x1]
        %v2082 = vlaneseq
        %v2083 = vshrl.u32 %v2082, 7
        %v2084 = vsub.s32 0, %v2083
        %v2085 = vrot.slane %v2080, %v2084
        %v2091 = vunpack.c.l.b16 %v2075
        %v2092 = vunpack.c.l.b16 %v2076
        %v2093 = vunpack.c.l.b16 %v2077
        %v2094 = vunpack.c.l.b16 %v2078
        %v2095 = vpack.c.b16 %v2092, %v2091
        %v2096 = vpack.c.b16 %v2094, %v2093
        %2099 = vmatprep.subr.bf16.mxu0 0
        %2100 = vmatpush1.bf16.msra.mxu0 0
        %2101 = vmatprep.subr.bf16.mxu0 0
        %2102 = vmatpush1.bf16.msra.mxu0 0
        %2103 = vmatprep.subr.bf16.mxu0 0
        %2104 = vmatpush1.bf16.msra.mxu0 0
        %2105 = vmatprep.subr.bf16.mxu0 0
        %2106 = vmatpush1.bf16.msra.mxu0 0
        %2107 = vmatprep.subr.bf16.mxu0 0
        %2108 = vmatpush1.bf16.msra.mxu0 0
        %2109 = vmatprep.subr.bf16.mxu0 0
        %2110 = vmatpush1.bf16.msra.mxu0 0
        %2111 = vmatprep.subr.bf16.mxu0 0
        %2112 = vmatpush1.bf16.msra.mxu0 %v2096
        %2113 = vmatprep.subr.bf16.mxu0 0
        %2114 = vmatpush1.bf16.msra.mxu0 %v2095
        %2115 = vmatprep.subr.bf16.mxu0 0
        %2116 = vmatpush2.bf16.msra.mxu0 0
        %2117 = vmatprep.subr.bf16.mxu0 0
        %2118 = vmatpush2.bf16.msra.mxu0 0
        %2119 = vmatprep.subr.bf16.mxu0 0
        %2120 = vmatpush2.bf16.msra.mxu0 0
        %2121 = vmatprep.subr.bf16.mxu0 0
        %2122 = vmatpush2.bf16.msra.mxu0 0
        %2123 = vmatprep.subr.bf16.mxu0 0
        %2124 = vmatpush2.bf16.msra.mxu0 0
        %2125 = vmatprep.subr.bf16.mxu0 0
        %2126 = vmatpush2.bf16.msra.mxu0 0
        %2127 = vmatprep.subr.bf16.mxu0 0
        %2128 = vmatpush2.bf16.msra.mxu0 0
        %2129 = vmatprep.subr.bf16.mxu0 0
        %2130 = vmatpush2.bf16.msra.mxu0 0
        %2131 = vmatprep.mubr.bf16.mxu0 0
        %2132 = vmatmul.mubr.bf16.gmra.mxu0 %v913
        %v2133 = vpop.f32.mrf.mxu0
        %v2134 = vadd.f32 %v2085, %v2133
        %v2135 = vpop.f32.mrf.mxu0
        %v2136 = vpop.f32.mrf.mxu0
        %v2137 = vpop.f32.mrf.mxu0
        %2138 = vdwg.mxu0
        %v2139 = vpack.c.bf16 %v2004, %v2004
        %v2140 = vpack.c.bf16 %v2069, %v2069
        %v2142 = vsel %vm1083, %v2139, 0
        %v2145 = vsel %vm1083, %v2140, 0
        %2147 = vmatprep.subr.bf16.mxu0 0
        %2148 = vmatpush1.bf16.xpose.msra.mxu0 0
        %2149 = vmatprep.subr.bf16.mxu0 0
        %2150 = vmatpush1.bf16.xpose.msra.mxu0 0
        %2151 = vmatprep.subr.bf16.mxu0 0
        %2152 = vmatpush1.bf16.xpose.msra.mxu0 0
        %2153 = vmatprep.subr.bf16.mxu0 0
        %2154 = vmatpush1.bf16.xpose.msra.mxu0 0
        %2155 = vmatprep.subr.bf16.mxu0 0
        %2156 = vmatpush1.bf16.xpose.msra.mxu0 0
        %2157 = vmatprep.subr.bf16.mxu0 0
        %2158 = vmatpush1.bf16.xpose.msra.mxu0 0
        %2159 = vmatprep.subr.bf16.mxu0 0
        %2160 = vmatpush1.bf16.xpose.msra.mxu0 0
        %2161 = vmatprep.subr.bf16.mxu0 0
        %2162 = vmatpush1.bf16.xpose.msra.mxu0 %v2145
        %2163 = vmatprep.subr.bf16.mxu0 0
        %2164 = vmatpush2.bf16.xpose.msra.mxu0 0
        %2165 = vmatprep.subr.bf16.mxu0 0
        %2166 = vmatpush2.bf16.xpose.msra.mxu0 0
        %2167 = vmatprep.subr.bf16.mxu0 0
        %2168 = vmatpush2.bf16.xpose.msra.mxu0 0
        %2169 = vmatprep.subr.bf16.mxu0 0
        %2170 = vmatpush2.bf16.xpose.msra.mxu0 0
        %2171 = vmatprep.subr.bf16.mxu0 0
        %2172 = vmatpush2.bf16.xpose.msra.mxu0 0
        %2173 = vmatprep.subr.bf16.mxu0 0
        %2174 = vmatpush2.bf16.xpose.msra.mxu0 0
        %2175 = vmatprep.subr.bf16.mxu0 0
        %2176 = vmatpush2.bf16.xpose.msra.mxu0 0
        %2177 = vmatprep.subr.bf16.mxu0 0
        %2178 = vmatpush2.bf16.xpose.msra.mxu0 0
        %2179 = vmatprep.mubr.bf16.mxu0 0
        %2180 = vmatmul.mubr.bf16.gmra.mxu0 %v2142
        %v2181 = vpop.f32.mrf.mxu0
        %v2182 = vadd.f32 0.0, %v2181
        %v2183 = vpop.f32.mrf.mxu0
        %v2184 = vpop.f32.mrf.mxu0
        %v2185 = vpop.f32.mrf.mxu0
        %2186 = vdwg.mxu0
        %v2187 = vmul.f32 %v2182, 0.35355338
        %v2188 = vsel %vm1083, %v2187, -inf
        %2189 = vmax.xlane.f32.xlu0 %v2188
        %v2190 = vpop.xlane.xlu0 %2189
        %v2191 = vsub.f32 %v2187, %v2190
        %v2192 = vmul.f32 %v2191, 1.442695
        %v2193 = vpow.pop %v2192
        %v2194 = vsel %vm1083, %v2193, 0.0
        %2195 = vadd.xlane.f32.xlu0 %v2194
        %v2196 = vpop.xlane.xlu0 %2195
        %v2197 = vrcp.pop %v2196
        %v2198 = vmul.f32 %v2193, %v2197
        %v2199 = vpack.c.bf16 %v2198, %v2198
        %v2200 = vpack.c.bf16 %v2134, %v2134
        %v2202 = vsel %vm1083, %v2199, 0
        %v2205 = vsel %vm1147, %v2200, 0
        %2207 = vmatprep.subr.bf16.mxu0 0
        %2208 = vmatpush1.bf16.msra.mxu0 0
        %2209 = vmatprep.subr.bf16.mxu0 0
        %2210 = vmatpush1.bf16.msra.mxu0 0
        %2211 = vmatprep.subr.bf16.mxu0 0
        %2212 = vmatpush1.bf16.msra.mxu0 0
        %2213 = vmatprep.subr.bf16.mxu0 0
        %2214 = vmatpush1.bf16.msra.mxu0 0
        %2215 = vmatprep.subr.bf16.mxu0 0
        %2216 = vmatpush1.bf16.msra.mxu0 0
        %2217 = vmatprep.subr.bf16.mxu0 0
        %2218 = vmatpush1.bf16.msra.mxu0 0
        %2219 = vmatprep.subr.bf16.mxu0 0
        %2220 = vmatpush1.bf16.msra.mxu0 0
        %2221 = vmatprep.subr.bf16.mxu0 0
        %2222 = vmatpush1.bf16.msra.mxu0 %v2205
        %2223 = vmatprep.subr.bf16.mxu0 0
        %2224 = vmatpush2.bf16.msra.mxu0 0
        %2225 = vmatprep.subr.bf16.mxu0 0
        %2226 = vmatpush2.bf16.msra.mxu0 0
        %2227 = vmatprep.subr.bf16.mxu0 0
        %2228 = vmatpush2.bf16.msra.mxu0 0
        %2229 = vmatprep.subr.bf16.mxu0 0
        %2230 = vmatpush2.bf16.msra.mxu0 0
        %2231 = vmatprep.subr.bf16.mxu0 0
        %2232 = vmatpush2.bf16.msra.mxu0 0
        %2233 = vmatprep.subr.bf16.mxu0 0
        %2234 = vmatpush2.bf16.msra.mxu0 0
        %2235 = vmatprep.subr.bf16.mxu0 0
        %2236 = vmatpush2.bf16.msra.mxu0 0
        %2237 = vmatprep.subr.bf16.mxu0 0
        %2238 = vmatpush2.bf16.msra.mxu0 0
        %2239 = vmatprep.mubr.bf16.mxu0 0
        %2240 = vmatmul.mubr.bf16.gmra.mxu0 %v2202
        %v2241 = vpop.f32.mrf.mxu0
        %v2242 = vadd.f32 0.0, %v2241
        %v2243 = vpop.f32.mrf.mxu0
        %v2244 = vpop.f32.mrf.mxu0
        %v2245 = vpop.f32.mrf.mxu0
        %2246 = vdwg.mxu0
        %v2247 = vpack.c.bf16 %v2242, %v2242
        %s2248 = scalar_lea.vmem %s846, 12
        %v2249 = vld [vmem:[%s2248] sm:$0xf]
        %v2251 = vsel %vm1083, %v2247, 0
        %v2254 = vsel %vm1147, %v2249, 0
        %2256 = vmatprep.subr.bf16.mxu0 0
        %2257 = vmatpush1.bf16.msra.mxu0 0
        %2258 = vmatprep.subr.bf16.mxu0 0
        %2259 = vmatpush1.bf16.msra.mxu0 0
        %2260 = vmatprep.subr.bf16.mxu0 0
        %2261 = vmatpush1.bf16.msra.mxu0 0
        %2262 = vmatprep.subr.bf16.mxu0 0
        %2263 = vmatpush1.bf16.msra.mxu0 0
        %2264 = vmatprep.subr.bf16.mxu0 0
        %2265 = vmatpush1.bf16.msra.mxu0 0
        %2266 = vmatprep.subr.bf16.mxu0 0
        %2267 = vmatpush1.bf16.msra.mxu0 0
        %2268 = vmatprep.subr.bf16.mxu0 0
        %2269 = vmatpush1.bf16.msra.mxu0 0
        %2270 = vmatprep.subr.bf16.mxu0 0
        %2271 = vmatpush1.bf16.msra.mxu0 %v2254
        %2272 = vmatprep.subr.bf16.mxu0 0
        %2273 = vmatpush2.bf16.msra.mxu0 0
        %2274 = vmatprep.subr.bf16.mxu0 0
        %2275 = vmatpush2.bf16.msra.mxu0 0
        %2276 = vmatprep.subr.bf16.mxu0 0
        %2277 = vmatpush2.bf16.msra.mxu0 0
        %2278 = vmatprep.subr.bf16.mxu0 0
        %2279 = vmatpush2.bf16.msra.mxu0 0
        %2280 = vmatprep.subr.bf16.mxu0 0
        %2281 = vmatpush2.bf16.msra.mxu0 0
        %2282 = vmatprep.subr.bf16.mxu0 0
        %2283 = vmatpush2.bf16.msra.mxu0 0
        %2284 = vmatprep.subr.bf16.mxu0 0
        %2285 = vmatpush2.bf16.msra.mxu0 0
        %2286 = vmatprep.subr.bf16.mxu0 0
        %2287 = vmatpush2.bf16.msra.mxu0 0
        %2288 = vmatprep.mubr.bf16.mxu0 0
        %2289 = vmatmul.mubr.bf16.gmra.mxu0 %v2251
        %v2290 = vpop.f32.mrf.mxu0
        %v2291 = vadd.f32 0.0, %v2290
        %v2292 = vpop.f32.mrf.mxu0
        %v2293 = vpop.f32.mrf.mxu0
        %v2294 = vpop.f32.mrf.mxu0
        %2295 = vdwg.mxu0
        %v2296 = vadd.f32 %v1943, %v2291
        %v2297 = vld [vmem:[%s849] sm:$0x1]
        %v2299 = vlaneseq
        %v2300 = vshrl.u32 %v2299, 7
        %v2301 = vsub.s32 0, %v2300
        %v2302 = vrot.slane %v2297, %v2301
        %v2304 = vadd.f32 %v2296, %v2302
        %v2305 = vadd.f32 %v886, %v2304
        %v2306 = vld [vmem:[%s852] sm:$0x1]
        %v2307 = vld [vmem:[%s855] sm:$0x1]
        %v2308 = vsel %vm911, %v2305, 0.0
        %2309 = vadd.xlane.f32.xlu0 %v2308
        %v2310 = vpop.xlane.xlu0 %2309
        %v2311 = vrcp.pop 32.0
        %v2312 = vmul.f32 %v2310, %v2311
        %v2313 = vsub.f32 %v2305, %v2312
        %v2314 = vmul.f32 %v2313, %v2313
        %v2315 = vsel %vm911, %v2314, 0.0
        %2316 = vadd.xlane.f32.xlu0 %v2315
        %v2317 = vpop.xlane.xlu0 %2316
        %v2318 = vmul.f32 %v2317, %v2311
        %v2319 = vadd.f32 %v2318, 1e-05
        %v2320 = vrsqrt.pop %v2319
        %v2321 = vmul.f32 %v2313, %v2320
        %v2323 = vlaneseq
        %v2324 = vshrl.u32 %v2323, 7
        %v2325 = vsub.s32 0, %v2324
        %v2326 = vrot.slane %v2306, %v2325
        %v2328 = vmul.f32 %v2321, %v2326
        %v2330 = vlaneseq
        %v2331 = vshrl.u32 %v2330, 7
        %v2332 = vsub.s32 0, %v2331
        %v2333 = vrot.slane %v2307, %v2332
        %v2335 = vadd.f32 %v2328, %v2333
        %v2336 = vpack.c.bf16 %v2335, %v2335
        %v2337 = vld [vmem:[%s860] sm:$0xf]
        %v2338 = vld [vmem:[%s860 + $0x4] sm:$0xf]
        %v2339 = vld [vmem:[%s860 + $0x8] sm:$0xf]
        %v2340 = vld [vmem:[%s860 + $0xc] sm:$0xf]
        %v2341 = vld [vmem:[%s863] sm:$0x1]
        %v2343 = vlaneseq
        %v2344 = vshrl.u32 %v2343, 7
        %v2345 = vsub.s32 0, %v2344
        %v2346 = vrot.slane %v2341, %v2345
        %v2352 = vunpack.c.l.b16 %v2337
        %v2353 = vunpack.c.l.b16 %v2338
        %v2354 = vunpack.c.l.b16 %v2339
        %v2355 = vunpack.c.l.b16 %v2340
        %v2356 = vpack.c.b16 %v2353, %v2352
        %v2357 = vpack.c.b16 %v2355, %v2354
        %v2361 = vsel %vm911, %v2336, 0
        %2363 = vmatprep.subr.bf16.mxu0 0
        %2364 = vmatpush1.bf16.msra.mxu0 0
        %2365 = vmatprep.subr.bf16.mxu0 0
        %2366 = vmatpush1.bf16.msra.mxu0 0
        %2367 = vmatprep.subr.bf16.mxu0 0
        %2368 = vmatpush1.bf16.msra.mxu0 0
        %2369 = vmatprep.subr.bf16.mxu0 0
        %2370 = vmatpush1.bf16.msra.mxu0 0
        %2371 = vmatprep.subr.bf16.mxu0 0
        %2372 = vmatpush1.bf16.msra.mxu0 0
        %2373 = vmatprep.subr.bf16.mxu0 0
        %2374 = vmatpush1.bf16.msra.mxu0 0
        %2375 = vmatprep.subr.bf16.mxu0 0
        %2376 = vmatpush1.bf16.msra.mxu0 %v2357
        %2377 = vmatprep.subr.bf16.mxu0 0
        %2378 = vmatpush1.bf16.msra.mxu0 %v2356
        %2379 = vmatprep.subr.bf16.mxu0 0
        %2380 = vmatpush2.bf16.msra.mxu0 0
        %2381 = vmatprep.subr.bf16.mxu0 0
        %2382 = vmatpush2.bf16.msra.mxu0 0
        %2383 = vmatprep.subr.bf16.mxu0 0
        %2384 = vmatpush2.bf16.msra.mxu0 0
        %2385 = vmatprep.subr.bf16.mxu0 0
        %2386 = vmatpush2.bf16.msra.mxu0 0
        %2387 = vmatprep.subr.bf16.mxu0 0
        %2388 = vmatpush2.bf16.msra.mxu0 0
        %2389 = vmatprep.subr.bf16.mxu0 0
        %2390 = vmatpush2.bf16.msra.mxu0 0
        %2391 = vmatprep.subr.bf16.mxu0 0
        %2392 = vmatpush2.bf16.msra.mxu0 0
        %2393 = vmatprep.subr.bf16.mxu0 0
        %2394 = vmatpush2.bf16.msra.mxu0 0
        %2395 = vmatprep.mubr.bf16.mxu0 0
        %2396 = vmatmul.mubr.bf16.gmra.mxu0 %v2361
        %v2397 = vpop.f32.mrf.mxu0
        %v2398 = vadd.f32 %v2346, %v2397
        %v2399 = vpop.f32.mrf.mxu0
        %v2400 = vpop.f32.mrf.mxu0
        %v2401 = vpop.f32.mrf.mxu0
        %2402 = vdwg.mxu0
        %v2403 = vmax.f32 %v2398, 0.0
        %v2404 = vpack.c.bf16 %v2403, %v2403
        %v2405 = vld [vmem:[%s868] sm:$0xf]
        %v2406 = vld [vmem:[%s868 + $0x4] sm:$0xf]
        %v2407 = vld [vmem:[%s868 + $0x8] sm:$0xf]
        %v2408 = vld [vmem:[%s868 + $0xc] sm:$0xf]
        %v2409 = vld [vmem:[%s868 + $0x10] sm:$0xf]
        %v2410 = vld [vmem:[%s868 + $0x14] sm:$0xf]
        %v2411 = vld [vmem:[%s868 + $0x18] sm:$0xf]
        %v2412 = vld [vmem:[%s868 + $0x1c] sm:$0xf]
        %v2413 = vld [vmem:[%s871] sm:$0x1]
        %v2415 = vlaneseq
        %v2416 = vshrl.u32 %v2415, 7
        %v2417 = vsub.s32 0, %v2416
        %v2418 = vrot.slane %v2413, %v2417
        %v2428 = vunpack.c.l.b16 %v2405
        %v2429 = vunpack.c.l.b16 %v2406
        %v2430 = vunpack.c.l.b16 %v2407
        %v2431 = vunpack.c.l.b16 %v2408
        %v2432 = vunpack.c.l.b16 %v2409
        %v2433 = vunpack.c.l.b16 %v2410
        %v2434 = vunpack.c.l.b16 %v2411
        %v2435 = vunpack.c.l.b16 %v2412
        %v2436 = vpack.c.b16 %v2429, %v2428
        %v2437 = vpack.c.b16 %v2431, %v2430
        %v2438 = vpack.c.b16 %v2433, %v2432
        %v2439 = vpack.c.b16 %v2435, %v2434
        %vm2444 = vcmask 523264
        %v2446 = vsel %vm2444, %v2404, 0
        %2448 = vmatprep.subr.bf16.mxu0 0
        %2449 = vmatpush1.bf16.msra.mxu0 0
        %2450 = vmatprep.subr.bf16.mxu0 0
        %2451 = vmatpush1.bf16.msra.mxu0 0
        %2452 = vmatprep.subr.bf16.mxu0 0
        %2453 = vmatpush1.bf16.msra.mxu0 0
        %2454 = vmatprep.subr.bf16.mxu0 0
        %2455 = vmatpush1.bf16.msra.mxu0 0
        %2456 = vmatprep.subr.bf16.mxu0 0
        %2457 = vmatpush1.bf16.msra.mxu0 %v2439
        %2458 = vmatprep.subr.bf16.mxu0 0
        %2459 = vmatpush1.bf16.msra.mxu0 %v2438
        %2460 = vmatprep.subr.bf16.mxu0 0
        %2461 = vmatpush1.bf16.msra.mxu0 %v2437
        %2462 = vmatprep.subr.bf16.mxu0 0
        %2463 = vmatpush1.bf16.msra.mxu0 %v2436
        %2464 = vmatprep.subr.bf16.mxu0 0
        %2465 = vmatpush2.bf16.msra.mxu0 0
        %2466 = vmatprep.subr.bf16.mxu0 0
        %2467 = vmatpush2.bf16.msra.mxu0 0
        %2468 = vmatprep.subr.bf16.mxu0 0
        %2469 = vmatpush2.bf16.msra.mxu0 0
        %2470 = vmatprep.subr.bf16.mxu0 0
        %2471 = vmatpush2.bf16.msra.mxu0 0
        %2472 = vmatprep.subr.bf16.mxu0 0
        %2473 = vmatpush2.bf16.msra.mxu0 0
        %2474 = vmatprep.subr.bf16.mxu0 0
        %2475 = vmatpush2.bf16.msra.mxu0 0
        %2476 = vmatprep.subr.bf16.mxu0 0
        %2477 = vmatpush2.bf16.msra.mxu0 0
        %2478 = vmatprep.subr.bf16.mxu0 0
        %2479 = vmatpush2.bf16.msra.mxu0 0
        %2480 = vmatprep.mubr.bf16.mxu0 0
        %2481 = vmatmul.mubr.bf16.gmra.mxu0 %v2446
        %v2482 = vpop.f32.mrf.mxu0
        %v2483 = vadd.f32 %v2418, %v2482
        %v2484 = vpop.f32.mrf.mxu0
        %v2485 = vpop.f32.mrf.mxu0
        %v2486 = vpop.f32.mrf.mxu0
        %2487 = vdwg.mxu0
        %v2488 = vadd.f32 %v2335, %v2483
        %v2489 = vld [vmem:[%s874] sm:$0x1]
        %v2490 = vld [vmem:[%s877] sm:$0x1]
        %v2491 = vsel %vm911, %v2488, 0.0
        %2492 = vadd.xlane.f32.xlu0 %v2491
        %v2493 = vpop.xlane.xlu0 %2492
        %v2494 = vmul.f32 %v2493, %v2311
        %v2495 = vsub.f32 %v2488, %v2494
        %v2496 = vmul.f32 %v2495, %v2495
        %v2497 = vsel %vm911, %v2496, 0.0
        %2498 = vadd.xlane.f32.xlu0 %v2497
        %v2499 = vpop.xlane.xlu0 %2498
        %v2500 = vmul.f32 %v2499, %v2311
        %v2501 = vadd.f32 %v2500, 1e-05
        %v2502 = vrsqrt.pop %v2501
        %v2503 = vmul.f32 %v2495, %v2502
        %v2505 = vlaneseq
        %v2506 = vshrl.u32 %v2505, 7
        %v2507 = vsub.s32 0, %v2506
        %v2508 = vrot.slane %v2489, %v2507
        %v2510 = vmul.f32 %v2503, %v2508
        %v2512 = vlaneseq
        %v2513 = vshrl.u32 %v2512, 7
        %v2514 = vsub.s32 0, %v2513
        %v2515 = vrot.slane %v2490, %v2514
        %v2517 = vadd.f32 %v2510, %v2515
        %2518 = vst.msk [vmem:[#allocation2] sm:$0xff] %vm911, %v2517
        %p2519 = scmp.eq.s32.totalorder %s38, 1
        // Predicated region
        $region101: #{model_forward.1} parent=95 // pred_check
          %p2520 = pneg %p2519
        $region102: #{model_forward.1} parent=95 // pred_check_branch
          %2522 = sbr.rel (%p2520) target = $region104
        $region103: #{model_forward.1} parent=95 // pred_region
          %v2523 = vld [vmem:[#allocation2 + $0x7] sm:$0x1]
          %v2524 = vpack.c.bf16 %v2523, %v2523
          %v2525 = vld [vmem:[%s17] sm:$0xf]
          %v2526 = vld [vmem:[%s17 + $0x4] sm:$0xf]
          %v2527 = vld [vmem:[%s17 + $0x8] sm:$0xf]
          %v2528 = vld [vmem:[%s17 + $0xc] sm:$0xf]
          %v2529 = vld [vmem:[%s18] sm:$0x1]
          %v2534 = vunpack.c.l.b16 %v2525
          %v2535 = vunpack.c.l.b16 %v2526
          %v2536 = vunpack.c.l.b16 %v2527
          %v2537 = vunpack.c.l.b16 %v2528
          %v2538 = vpack.c.b16 %v2535, %v2534
          %v2539 = vpack.c.b16 %v2537, %v2536
          %v2543 = vsel %vm911, %v2524, 0
          %2545 = vmatprep.subr.bf16.mxu0 0
          %2546 = vmatpush1.bf16.msra.mxu0 0
          %2547 = vmatprep.subr.bf16.mxu0 0
          %2548 = vmatpush1.bf16.msra.mxu0 0
          %2549 = vmatprep.subr.bf16.mxu0 0
          %2550 = vmatpush1.bf16.msra.mxu0 0
          %2551 = vmatprep.subr.bf16.mxu0 0
          %2552 = vmatpush1.bf16.msra.mxu0 0
          %2553 = vmatprep.subr.bf16.mxu0 0
          %2554 = vmatpush1.bf16.msra.mxu0 0
          %2555 = vmatprep.subr.bf16.mxu0 0
          %2556 = vmatpush1.bf16.msra.mxu0 0
          %2557 = vmatprep.subr.bf16.mxu0 0
          %2558 = vmatpush1.bf16.msra.mxu0 %v2539
          %2559 = vmatprep.subr.bf16.mxu0 0
          %2560 = vmatpush1.bf16.msra.mxu0 %v2538
          %2561 = vmatprep.subr.bf16.mxu0 0
          %2562 = vmatpush2.bf16.msra.mxu0 0
          %2563 = vmatprep.subr.bf16.mxu0 0
          %2564 = vmatpush2.bf16.msra.mxu0 0
          %2565 = vmatprep.subr.bf16.mxu0 0
          %2566 = vmatpush2.bf16.msra.mxu0 0
          %2567 = vmatprep.subr.bf16.mxu0 0
          %2568 = vmatpush2.bf16.msra.mxu0 0
          %2569 = vmatprep.subr.bf16.mxu0 0
          %2570 = vmatpush2.bf16.msra.mxu0 0
          %2571 = vmatprep.subr.bf16.mxu0 0
          %2572 = vmatpush2.bf16.msra.mxu0 0
          %2573 = vmatprep.subr.bf16.mxu0 0
          %2574 = vmatpush2.bf16.msra.mxu0 0
          %2575 = vmatprep.subr.bf16.mxu0 0
          %2576 = vmatpush2.bf16.msra.mxu0 0
          %2577 = vmatprep.mubr.bf16.mxu0 0
          %2578 = vmatmul.mubr.bf16.gmra.mxu0 %v2543
          %v2579 = vpop.f32.mrf.mxu0
          %v2580 = vadd.f32 %v2529, %v2579
          %v2581 = vpop.f32.mrf.mxu0
          %v2582 = vpop.f32.mrf.mxu0
          %v2583 = vpop.f32.mrf.mxu0
          %2584 = vdwg.mxu0
          %2585 = vst [vmem:[%s810] sm:$0x1] %v2580
        $region104: #{model_forward.1} parent=95 // pred_fallthru
          _
        %s2586 = sand.u32 %s537, 1
        %s2587 = scalar_lea.sflag [#allocation4], %s2586
        %s2588 = sand.u32 %s537, 1
        %s2589 = scalar_lea.vmem [#allocation3], %s2588
        // Predicated region
        $region105: #{model_forward.1} parent=95 // pred_check
          %p2590 = pneg %p547
        $region106: #{model_forward.1} parent=95 // pred_check_branch
          %2592 = sbr.rel (%p2590) target = $region108
        $region107: #{model_forward.1} parent=95 // pred_region
          %s2594 = ssub.s32 16, 16
          %2595 = vsyncadd %s2587, %s2594
          %s2596 = smul.addr %s37, 16
          %s2597 = scalar_lea.hbm %s19, %s2596
          %s2599 = sshll.u32 %s2589, 4
          %s2600 = int_to_ptr.vmem [resolvable:$true] %s2599
          %2602 = dma.vmem_to_hbm [thread:$0]  %s2600, 16, %s2597, %s2587
        $region108: #{model_forward.1} parent=95 // pred_fallthru
          _
      $region96: #{model_forward.1} parent=5 // pred_fallthru
        _
      %p2603 = scmp.le.s32.totalorder 2, %s28
      // Predicated region
      $region109: #{model_forward.1} parent=5 // pred_check
        %p2604 = pneg %p2603
      $region110: #{model_forward.1} parent=5 // pred_check_branch
        %2606 = sbr.rel (%p2604) target = $region112
      $region111: #{model_forward.1} parent=5 // pred_region
        %s2607 = ssub.s32 %s28, 2
        // Predicated region
        $region113: #{model_forward.1} parent=111 // pred_check
          %p2608 = pneg %p553
        $region114: #{model_forward.1} parent=111 // pred_check_branch
          %2610 = sbr.rel (%p2608) target = $region116
        $region115: #{model_forward.1} parent=111 // pred_region
          %s2611 = sand.u32 %s538, 1
          %s2612 = scalar_lea.sflag [#allocation4], %s2611
          %s2613 = sand.u32 %s538, 1
          %s2614 = scalar_lea.vmem [#allocation3], %s2613
          %2615 = dma.done %s2612, 16
        $region116: #{model_forward.1} parent=111 // pred_fallthru
          _
      $region112: #{model_forward.1} parent=5 // pred_fallthru
        _
    $region6: #{model_forward.1} parent=1 // loop_footer
      %s32 = sadd.s32 1, %s28
    $region7: #{model_forward.1} parent=1 // loop_footer_branch
      %27 = sbr.rel target = $region3
    $region8: #{model_forward.1} parent=1 // loop_exit
      _
    %2616 = vsyncpa [#allocation4], 1
    %s2617 = scalar_lea.sflag [#allocation4], 1
    %2618 = vsyncpa %s2617, 1

</llo_original>
